<compile_context>
chip_gen: v7x
topology: tpu7x:2x2x1
jax: 0.10.0
libtpu: 0.0.40
codegen_flags: <defaults>
</compile_context>

<pallas_src>
import functools

import jax
import jax.numpy as jnp
import numpy as np
from jax import lax
from jax.experimental import pallas as pl
from jax.experimental.pallas import tpu as pltpu


def _round_up(x, m):
    return ((x + m - 1) // m) * m


# ---------------------------------------------------------------------------
# Fused Block kernel
# ---------------------------------------------------------------------------
def _block_kernel(*refs, steps, has_skip, H, W, dmax, col0, cpad):
    """Whole Xception Block: [ReLU -> dw3x3 -> pw1x1 -> BN] * n + skip + add.

    refs = [x] + [dw, pw, scale, shift] * n_steps
           + ([skip_w, skip_scale, skip_shift] if has_skip)
           + [out] + [pad_scratch]
    All channel dims are pre-padded to `cpad` (multiple of 128).
    Every step runs at stride 1; a stride-2 trailing step is handled by the
    wrapper subsampling the full-res block output (exactly equivalent).
    """
    n_steps = len(steps)
    x_ref = refs[0]
    w_refs = refs[1:1 + 4 * n_steps]
    idx = 1 + 4 * n_steps
    if has_skip:
        skip_w_ref, skip_scale_ref, skip_shift_ref = refs[idx:idx + 3]
        idx += 3
    out_ref = refs[idx]
    pad_ref = refs[idx + 1]

    # Zero the padded scratch once; only the interior is rewritten below, so
    # the zero border supplies `fixed_padding` for every step for free.
    pad_ref[...] = jnp.zeros(pad_ref.shape, jnp.float32)

    x0 = x_ref[0].astype(jnp.float32)                  # (H, W, Cpad), pre-ReLU
    cur = x0
    for i, (apply_relu, d) in enumerate(steps):
        dw_ref, pw_ref, sc_ref, sh_ref = w_refs[4 * i:4 * i + 4]
        t = jnp.maximum(cur, 0.0) if apply_relu else cur
        # interior at (dmax, col0); col0 is 8-aligned -> unmasked stores
        pad_ref[dmax:dmax + H, col0:col0 + W, :] = t

        # depthwise 3x3, dilation d, stride 1 — 9 unrolled VPU MAC taps
        w_dw = dw_ref[...].astype(jnp.float32)          # (3, 3, Cpad)
        acc = None
        for ky in range(3):
            r0 = dmax - d + ky * d
            for kx in range(3):
                c0 = col0 - d + kx * d
                term = pad_ref[r0:r0 + H, c0:c0 + W, :] * w_dw[ky, kx]
                acc = term if acc is None else acc + term

        # pointwise 1x1 conv: one MXU matmul over all H*W pixels, + folded BN
        y = jnp.dot(acc.reshape(H * W, cpad), pw_ref[...].astype(jnp.float32),
                    preferred_element_type=jnp.float32)
        y = y * sc_ref[0] + sh_ref[0]
        cur = y.reshape(H, W, cpad)

    if has_skip:
        sk = jnp.dot(x0.reshape(H * W, cpad),
                     skip_w_ref[...].astype(jnp.float32),
                     preferred_element_type=jnp.float32)
        sk = sk * skip_scale_ref[0] + skip_shift_ref[0]
        sk = sk.reshape(H, W, cpad)
    else:
        sk = x0

    out_ref[0] = (cur + sk).astype(out_ref.dtype)


# ---------------------------------------------------------------------------
# Wrapper: one fused pallas_call per Block forward
# ---------------------------------------------------------------------------
def _pad_last(a, target):
    if a.shape[-1] == target:
        return a
    pads = [(0, 0)] * (a.ndim - 1) + [(0, target - a.shape[-1])]
    return jnp.pad(a, pads)


def _pad_2d(a, rows, cols):
    if a.shape == (rows, cols):
        return a
    return jnp.pad(a, ((0, rows - a.shape[0]), (0, cols - a.shape[1])))


def block_forward(x_nchw, params):
    """Forward pass of the Xception Block.  x_nchw: (N, C, H, W) float32."""
    steps = params["rep"]
    stride = params["stride"]
    planes = steps[-1]["pw"].shape[1]

    x = jnp.transpose(x_nchw, (0, 2, 3, 1))            # NCHW -> NHWC
    N, H, W, cin = x.shape

    # Lane-dense channel padding (multiple of 128).
    cmax = max([cin, planes] + [st["pw"].shape[0] for st in steps]
               + [st["pw"].shape[1] for st in steps])
    cpad = _round_up(cmax, 128)

    dmax = max(st["dilation"] for st in steps)
    col0 = _round_up(dmax, 8)                          # 8-aligned interior col
    hp = H + 2 * dmax
    wp = col0 + W + dmax

    inputs = [_pad_last(x, cpad)]
    in_specs = [pl.BlockSpec((1, H, W, cpad), lambda n: (n, 0, 0, 0))]
    steps_meta = []
    for st in steps:
        inputs += [_pad_last(st["dw"], cpad),          # (3, 3, Cpad)
                   _pad_2d(st["pw"], cpad, cpad),      # (Cpad, Cpad)
                   _pad_last(st["scale"], cpad),       # (1, Cpad)
                   _pad_last(st["shift"], cpad)]       # (1, Cpad)
        in_specs += [
            pl.BlockSpec((3, 3, cpad), lambda n: (0, 0, 0)),
            pl.BlockSpec((cpad, cpad), lambda n: (0, 0)),
            pl.BlockSpec((1, cpad), lambda n: (0, 0)),
            pl.BlockSpec((1, cpad), lambda n: (0, 0)),
        ]
        steps_meta.append((bool(st["relu"]), int(st["dilation"])))

    has_skip = params["skip"] is not None
    if has_skip:
        inputs += [_pad_2d(params["skip"]["w"], cpad, cpad),
                   _pad_last(params["skip"]["scale"], cpad),
                   _pad_last(params["skip"]["shift"], cpad)]
        in_specs += [
            pl.BlockSpec((cpad, cpad), lambda n: (0, 0)),
            pl.BlockSpec((1, cpad), lambda n: (0, 0)),
            pl.BlockSpec((1, cpad), lambda n: (0, 0)),
        ]

    kernel = functools.partial(_block_kernel, steps=tuple(steps_meta),
                               has_skip=has_skip, H=H, W=W,
                               dmax=dmax, col0=col0, cpad=cpad)

    out = pl.pallas_call(
        kernel,
        out_shape=jax.ShapeDtypeStruct((N, H, W, cpad), x.dtype),
        grid=(N,),
        in_specs=in_specs,
        out_specs=pl.BlockSpec((1, H, W, cpad), lambda n: (n, 0, 0, 0)),
        scratch_shapes=[pltpu.VMEM((hp, wp, cpad), jnp.float32)],
        compiler_params=pltpu.CompilerParams(
            dimension_semantics=("parallel",)),
    )(*inputs)

    # Stride-2: full-res compute then a single subsample (equivalent for this
    # padding: strided conv output(i,j) == stride-1 output(2i,2j)).
    if stride != 1:
        out = out[:, ::stride, ::stride, :]
    out = out[..., :planes]
    return jnp.transpose(out, (0, 3, 1, 2))            # NHWC -> NCHW


# ---------------------------------------------------------------------------
# Parameter construction (deterministic, synthetic) mirroring Block.__init__
# ---------------------------------------------------------------------------
def _make_bn(key, c, eps=1e-5):
    k1, k2, k3, k4 = jax.random.split(key, 4)
    gamma = 1.0 + 0.1 * jax.random.normal(k1, (c,), jnp.float32)
    beta = 0.1 * jax.random.normal(k2, (c,), jnp.float32)
    mean = 0.1 * jax.random.normal(k3, (c,), jnp.float32)
    var = 1.0 + 0.1 * jax.random.uniform(k4, (c,), jnp.float32)
    scale = gamma / jnp.sqrt(var + eps)
    shift = beta - mean * scale
    return scale.reshape(1, c), shift.reshape(1, c)


def init_block_params(key, inplanes, planes, reps, stride=1, dilation=1,
                      start_with_relu=True, grow_first=True, is_last=False):
    keys = iter(jax.random.split(key, 128))

    def sepconv(cin, cout, dil, relu, strd):
        dw = 0.1 * jax.random.normal(next(keys), (3, 3, cin), jnp.float32)
        pw = 0.1 * jax.random.normal(next(keys), (cin, cout), jnp.float32)
        return {"dw": dw, "pw": pw, "dilation": dil, "relu": relu, "stride": strd}

    rep = []
    filters = inplanes
    if grow_first:
        st = sepconv(inplanes, planes, dilation, True, 1)
        st["scale"], st["shift"] = _make_bn(next(keys), planes)
        rep.append(st)
        filters = planes
    for _ in range(reps - 1):
        st = sepconv(filters, filters, dilation, True, 1)
        st["scale"], st["shift"] = _make_bn(next(keys), filters)
        rep.append(st)
    if not grow_first:
        st = sepconv(inplanes, planes, dilation, True, 1)
        st["scale"], st["shift"] = _make_bn(next(keys), planes)
        rep.append(st)
    if not start_with_relu:
        rep[0]["relu"] = False                    # PyTorch drops leading ReLU
    if stride != 1:                               # trailing stride-2 SepConv, no ReLU/BN (per spec)
        st = sepconv(planes, planes, 1, False, 2)
        st["scale"] = jnp.ones((1, planes), jnp.float32)
        st["shift"] = jnp.zeros((1, planes), jnp.float32)
        rep.append(st)
    if stride == 1 and is_last:                   # trailing stride-1 SepConv, no ReLU/BN
        st = sepconv(planes, planes, 1, False, 1)
        st["scale"] = jnp.ones((1, planes), jnp.float32)
        st["shift"] = jnp.zeros((1, planes), jnp.float32)
        rep.append(st)

    if planes != inplanes or stride != 1:
        skip_w = 0.1 * jax.random.normal(next(keys), (inplanes, planes), jnp.float32)
        sscale, sshift = _make_bn(next(keys), planes)
        skip = {"w": skip_w, "scale": sscale, "shift": sshift}
    else:
        skip = None
    return {"rep": rep, "skip": skip, "stride": stride}


# ---------------------------------------------------------------------------
# Pure-JAX (XLA) reference for correctness checking
# ---------------------------------------------------------------------------
def block_reference(x_nchw, params):
    x = jnp.transpose(x_nchw, (0, 2, 3, 1)).astype(jnp.float32)
    inp = x
    cur = x
    for st in params["rep"]:
        if st["relu"]:
            cur = jnp.maximum(cur, 0.0)
        d, s = st["dilation"], st["stride"]
        cin = st["dw"].shape[-1]
        padded = jnp.pad(cur, ((0, 0), (d, d), (d, d), (0, 0)))
        dw_out = lax.conv_general_dilated(
            padded, st["dw"].reshape(3, 3, 1, cin),
            window_strides=(s, s), padding="VALID", rhs_dilation=(d, d),
            dimension_numbers=("NHWC", "HWIO", "NHWC"),
            feature_group_count=cin, precision=lax.Precision.HIGHEST)
        y = jnp.einsum("nhwc,co->nhwo", dw_out, st["pw"],
                       precision=lax.Precision.HIGHEST)
        cur = y * st["scale"][0] + st["shift"][0]
    if params["skip"] is not None:
        s = params["stride"]
        si = inp[:, ::s, ::s, :]
        sk = jnp.einsum("nhwc,co->nhwo", si, params["skip"]["w"],
                        precision=lax.Precision.HIGHEST)
        sk = sk * params["skip"]["scale"][0] + params["skip"]["shift"][0]
    else:
        sk = inp
    return jnp.transpose(cur + sk, (0, 3, 1, 2))


# ---------------------------------------------------------------------------
if __name__ == "__main__":
    key = jax.random.PRNGKey(0)
    kx1, kp1, kx2, kp2 = jax.random.split(key, 4)

    # 1) Entry-flow style block: Block(4, 8, reps=2, stride=2).
    x1 = jax.random.normal(kx1, (2, 4, 16, 16), jnp.float32)
    p1 = init_block_params(kp1, inplanes=4, planes=8, reps=2, stride=2,
                           dilation=1, start_with_relu=True, grow_first=True,
                           is_last=False)
    out1 = jax.block_until_ready(block_forward(x1, p1))
    assert out1.shape == (2, 8, 8, 8), out1.shape
    ref1 = jax.block_until_ready(block_reference(x1, p1))
    np.testing.assert_allclose(np.asarray(out1), np.asarray(ref1),
                               rtol=1e-2, atol=1e-2)

    # 2) Middle-flow style block (identity skip, dilation 2):
    #    Block(8, 8, reps=2, stride=1, dilation=2).
    x2 = jax.random.normal(kx2, (2, 8, 16, 16), jnp.float32)
    p2 = init_block_params(kp2, inplanes=8, planes=8, reps=2, stride=1,
                           dilation=2, start_with_relu=True, grow_first=True,
                           is_last=False)
    out2 = jax.block_until_ready(block_forward(x2, p2))
    assert out2.shape == (2, 8, 16, 16), out2.shape
    ref2 = jax.block_until_ready(block_reference(x2, p2))
    np.testing.assert_allclose(np.asarray(out2), np.asarray(ref2),
                               rtol=1e-2, atol=1e-2)

    print("KERNEL_OK")
</pallas_src>

<mosaic_0001>
module attributes {stable_mosaic.version = 11 : i64} {
  func.func @_block_kernel(%arg0: i32, %arg1: memref<1x16x16x128xf32, #tpu.memory_space<vmem>>, %arg2: memref<3x3x128xf32, #tpu.memory_space<vmem>>, %arg3: memref<128x128xf32, #tpu.memory_space<vmem>>, %arg4: memref<1x128xf32, #tpu.memory_space<vmem>>, %arg5: memref<1x128xf32, #tpu.memory_space<vmem>>, %arg6: memref<3x3x128xf32, #tpu.memory_space<vmem>>, %arg7: memref<128x128xf32, #tpu.memory_space<vmem>>, %arg8: memref<1x128xf32, #tpu.memory_space<vmem>>, %arg9: memref<1x128xf32, #tpu.memory_space<vmem>>, %arg10: memref<3x3x128xf32, #tpu.memory_space<vmem>>, %arg11: memref<128x128xf32, #tpu.memory_space<vmem>>, %arg12: memref<1x128xf32, #tpu.memory_space<vmem>>, %arg13: memref<1x128xf32, #tpu.memory_space<vmem>>, %arg14: memref<128x128xf32, #tpu.memory_space<vmem>>, %arg15: memref<1x128xf32, #tpu.memory_space<vmem>>, %arg16: memref<1x128xf32, #tpu.memory_space<vmem>>, %arg17: memref<1x16x16x128xf32, #tpu.memory_space<vmem>>, %arg18: memref<18x25x128xf32, #tpu.memory_space<vmem>>) attributes {dimension_semantics = [#tpu.dimension_semantics<parallel>], iteration_bounds = array<i64: 2>, scalar_prefetch = 0 : i64, scratch_operands = 1 : i64, tpu.core_type = #tpu.core_type<tc>, window_params = [{transform_indices = @transform_0, window_bounds = array<i64: 1, 16, 16, 128>}, {pipeline_mode = #tpu.pipeline_mode<synchronous>, transform_indices = @transform_1, window_bounds = array<i64: 3, 3, 128>}, {pipeline_mode = #tpu.pipeline_mode<synchronous>, transform_indices = @transform_2, window_bounds = array<i64: 128, 128>}, {pipeline_mode = #tpu.pipeline_mode<synchronous>, transform_indices = @transform_3, window_bounds = array<i64: 1, 128>}, {pipeline_mode = #tpu.pipeline_mode<synchronous>, transform_indices = @transform_4, window_bounds = array<i64: 1, 128>}, {pipeline_mode = #tpu.pipeline_mode<synchronous>, transform_indices = @transform_5, window_bounds = array<i64: 3, 3, 128>}, {pipeline_mode = #tpu.pipeline_mode<synchronous>, transform_indices = @transform_6, window_bounds = array<i64: 128, 128>}, {pipeline_mode = #tpu.pipeline_mode<synchronous>, transform_indices = @transform_7, window_bounds = array<i64: 1, 128>}, {pipeline_mode = #tpu.pipeline_mode<synchronous>, transform_indices = @transform_8, window_bounds = array<i64: 1, 128>}, {pipeline_mode = #tpu.pipeline_mode<synchronous>, transform_indices = @transform_9, window_bounds = array<i64: 3, 3, 128>}, {pipeline_mode = #tpu.pipeline_mode<synchronous>, transform_indices = @transform_10, window_bounds = array<i64: 128, 128>}, {pipeline_mode = #tpu.pipeline_mode<synchronous>, transform_indices = @transform_11, window_bounds = array<i64: 1, 128>}, {pipeline_mode = #tpu.pipeline_mode<synchronous>, transform_indices = @transform_12, window_bounds = array<i64: 1, 128>}, {pipeline_mode = #tpu.pipeline_mode<synchronous>, transform_indices = @transform_13, window_bounds = array<i64: 128, 128>}, {pipeline_mode = #tpu.pipeline_mode<synchronous>, transform_indices = @transform_14, window_bounds = array<i64: 1, 128>}, {pipeline_mode = #tpu.pipeline_mode<synchronous>, transform_indices = @transform_15, window_bounds = array<i64: 1, 128>}, {transform_indices = @transform_16, window_bounds = array<i64: 1, 16, 16, 128>}]} {
    %cst = arith.constant 0.000000e+00 : f32
    %0 = vector.broadcast %cst : f32 to vector<18x25x128xf32>
    %c0 = arith.constant 0 : index
    %c0_0 = arith.constant 0 : index
    %c0_1 = arith.constant 0 : index
    %1 = vector.load %arg18[%c0, %c0_0, %c0_1] : memref<18x25x128xf32, #tpu.memory_space<vmem>>, vector<18x25x128xf32>
    tpu.vector_store %arg18[%c0, %c0_0, %c0_1], %0 {strides = array<i32>} : memref<18x25x128xf32, #tpu.memory_space<vmem>>, vector<18x25x128xf32>,
    %c0_2 = arith.constant 0 : index
    %c0_3 = arith.constant 0 : index
    %c0_4 = arith.constant 0 : index
    %c0_5 = arith.constant 0 : index
    %2 = vector.load %arg1[%c0_2, %c0_3, %c0_4, %c0_5] : memref<1x16x16x128xf32, #tpu.memory_space<vmem>>, vector<1x16x16x128xf32>
    %3 = vector.shape_cast %2 : vector<1x16x16x128xf32> to vector<16x16x128xf32>
    %cst_6 = arith.constant 0.000000e+00 : f32
    %4 = vector.broadcast %cst_6 : f32 to vector<16x16x128xf32>
    %5 = arith.maximumf %3, %4 : vector<16x16x128xf32>
    %c1 = arith.constant 1 : index
    %c8 = arith.constant 8 : index
    %c0_7 = arith.constant 0 : index
    %6 = vector.load %arg18[%c1, %c8, %c0_7] : memref<18x25x128xf32, #tpu.memory_space<vmem>>, vector<16x16x128xf32>
    tpu.vector_store %arg18[%c1, %c8, %c0_7], %5 {strides = array<i32>} : memref<18x25x128xf32, #tpu.memory_space<vmem>>, vector<16x16x128xf32>,
    %c0_8 = arith.constant 0 : index
    %c0_9 = arith.constant 0 : index
    %c0_10 = arith.constant 0 : index
    %7 = vector.load %arg2[%c0_8, %c0_9, %c0_10] : memref<3x3x128xf32, #tpu.memory_space<vmem>>, vector<3x3x128xf32>
    %c0_11 = arith.constant 0 : index
    %c7 = arith.constant 7 : index
    %c0_12 = arith.constant 0 : index
    %8 = vector.load %arg18[%c0_11, %c7, %c0_12] : memref<18x25x128xf32, #tpu.memory_space<vmem>>, vector<16x16x128xf32>
    %9 = vector.extract_strided_slice %7 {offsets = [0, 0, 0], sizes = [1, 1, 128], strides = [1, 1, 1]} : vector<3x3x128xf32> to vector<1x1x128xf32>
    %10 = vector.shape_cast %9 : vector<1x1x128xf32> to vector<128xf32>
    %11 = vector.shape_cast %10 : vector<128xf32> to vector<1x1x128xf32>
    %12 = vector.broadcast %11 : vector<1x1x128xf32> to vector<16x16x128xf32>
    %13 = arith.mulf %8, %12 : vector<16x16x128xf32>
    %c0_13 = arith.constant 0 : index
    %c8_14 = arith.constant 8 : index
    %c0_15 = arith.constant 0 : index
    %14 = vector.load %arg18[%c0_13, %c8_14, %c0_15] : memref<18x25x128xf32, #tpu.memory_space<vmem>>, vector<16x16x128xf32>
    %15 = vector.extract_strided_slice %7 {offsets = [0, 1, 0], sizes = [1, 1, 128], strides = [1, 1, 1]} : vector<3x3x128xf32> to vector<1x1x128xf32>
    %16 = vector.shape_cast %15 : vector<1x1x128xf32> to vector<128xf32>
    %17 = vector.shape_cast %16 : vector<128xf32> to vector<1x1x128xf32>
    %18 = vector.broadcast %17 : vector<1x1x128xf32> to vector<16x16x128xf32>
    %19 = arith.mulf %14, %18 : vector<16x16x128xf32>
    %20 = arith.addf %13, %19 : vector<16x16x128xf32>
    %c0_16 = arith.constant 0 : index
    %c9 = arith.constant 9 : index
    %c0_17 = arith.constant 0 : index
    %21 = vector.load %arg18[%c0_16, %c9, %c0_17] : memref<18x25x128xf32, #tpu.memory_space<vmem>>, vector<16x16x128xf32>
    %22 = vector.extract_strided_slice %7 {offsets = [0, 2, 0], sizes = [1, 1, 128], strides = [1, 1, 1]} : vector<3x3x128xf32> to vector<1x1x128xf32>
    %23 = vector.shape_cast %22 : vector<1x1x128xf32> to vector<128xf32>
    %24 = vector.shape_cast %23 : vector<128xf32> to vector<1x1x128xf32>
    %25 = vector.broadcast %24 : vector<1x1x128xf32> to vector<16x16x128xf32>
    %26 = arith.mulf %21, %25 : vector<16x16x128xf32>
    %27 = arith.addf %20, %26 : vector<16x16x128xf32>
    %c1_18 = arith.constant 1 : index
    %c7_19 = arith.constant 7 : index
    %c0_20 = arith.constant 0 : index
    %28 = vector.load %arg18[%c1_18, %c7_19, %c0_20] : memref<18x25x128xf32, #tpu.memory_space<vmem>>, vector<16x16x128xf32>
    %29 = vector.extract_strided_slice %7 {offsets = [1, 0, 0], sizes = [1, 1, 128], strides = [1, 1, 1]} : vector<3x3x128xf32> to vector<1x1x128xf32>
    %30 = vector.shape_cast %29 : vector<1x1x128xf32> to vector<128xf32>
    %31 = vector.shape_cast %30 : vector<128xf32> to vector<1x1x128xf32>
    %32 = vector.broadcast %31 : vector<1x1x128xf32> to vector<16x16x128xf32>
    %33 = arith.mulf %28, %32 : vector<16x16x128xf32>
    %34 = arith.addf %27, %33 : vector<16x16x128xf32>
    %c1_21 = arith.constant 1 : index
    %c8_22 = arith.constant 8 : index
    %c0_23 = arith.constant 0 : index
    %35 = vector.load %arg18[%c1_21, %c8_22, %c0_23] : memref<18x25x128xf32, #tpu.memory_space<vmem>>, vector<16x16x128xf32>
    %36 = vector.extract_strided_slice %7 {offsets = [1, 1, 0], sizes = [1, 1, 128], strides = [1, 1, 1]} : vector<3x3x128xf32> to vector<1x1x128xf32>
    %37 = vector.shape_cast %36 : vector<1x1x128xf32> to vector<128xf32>
    %38 = vector.shape_cast %37 : vector<128xf32> to vector<1x1x128xf32>
    %39 = vector.broadcast %38 : vector<1x1x128xf32> to vector<16x16x128xf32>
    %40 = arith.mulf %35, %39 : vector<16x16x128xf32>
    %41 = arith.addf %34, %40 : vector<16x16x128xf32>
    %c1_24 = arith.constant 1 : index
    %c9_25 = arith.constant 9 : index
    %c0_26 = arith.constant 0 : index
    %42 = vector.load %arg18[%c1_24, %c9_25, %c0_26] : memref<18x25x128xf32, #tpu.memory_space<vmem>>, vector<16x16x128xf32>
    %43 = vector.extract_strided_slice %7 {offsets = [1, 2, 0], sizes = [1, 1, 128], strides = [1, 1, 1]} : vector<3x3x128xf32> to vector<1x1x128xf32>
    %44 = vector.shape_cast %43 : vector<1x1x128xf32> to vector<128xf32>
    %45 = vector.shape_cast %44 : vector<128xf32> to vector<1x1x128xf32>
    %46 = vector.broadcast %45 : vector<1x1x128xf32> to vector<16x16x128xf32>
    %47 = arith.mulf %42, %46 : vector<16x16x128xf32>
    %48 = arith.addf %41, %47 : vector<16x16x128xf32>
    %c2 = arith.constant 2 : index
    %c7_27 = arith.constant 7 : index
    %c0_28 = arith.constant 0 : index
    %49 = vector.load %arg18[%c2, %c7_27, %c0_28] : memref<18x25x128xf32, #tpu.memory_space<vmem>>, vector<16x16x128xf32>
    %50 = vector.extract_strided_slice %7 {offsets = [2, 0, 0], sizes = [1, 1, 128], strides = [1, 1, 1]} : vector<3x3x128xf32> to vector<1x1x128xf32>
    %51 = vector.shape_cast %50 : vector<1x1x128xf32> to vector<128xf32>
    %52 = vector.shape_cast %51 : vector<128xf32> to vector<1x1x128xf32>
    %53 = vector.broadcast %52 : vector<1x1x128xf32> to vector<16x16x128xf32>
    %54 = arith.mulf %49, %53 : vector<16x16x128xf32>
    %55 = arith.addf %48, %54 : vector<16x16x128xf32>
    %c2_29 = arith.constant 2 : index
    %c8_30 = arith.constant 8 : index
    %c0_31 = arith.constant 0 : index
    %56 = vector.load %arg18[%c2_29, %c8_30, %c0_31] : memref<18x25x128xf32, #tpu.memory_space<vmem>>, vector<16x16x128xf32>
    %57 = vector.extract_strided_slice %7 {offsets = [2, 1, 0], sizes = [1, 1, 128], strides = [1, 1, 1]} : vector<3x3x128xf32> to vector<1x1x128xf32>
    %58 = vector.shape_cast %57 : vector<1x1x128xf32> to vector<128xf32>
    %59 = vector.shape_cast %58 : vector<128xf32> to vector<1x1x128xf32>
    %60 = vector.broadcast %59 : vector<1x1x128xf32> to vector<16x16x128xf32>
    %61 = arith.mulf %56, %60 : vector<16x16x128xf32>
    %62 = arith.addf %55, %61 : vector<16x16x128xf32>
    %c2_32 = arith.constant 2 : index
    %c9_33 = arith.constant 9 : index
    %c0_34 = arith.constant 0 : index
    %63 = vector.load %arg18[%c2_32, %c9_33, %c0_34] : memref<18x25x128xf32, #tpu.memory_space<vmem>>, vector<16x16x128xf32>
    %64 = vector.extract_strided_slice %7 {offsets = [2, 2, 0], sizes = [1, 1, 128], strides = [1, 1, 1]} : vector<3x3x128xf32> to vector<1x1x128xf32>
    %65 = vector.shape_cast %64 : vector<1x1x128xf32> to vector<128xf32>
    %66 = vector.shape_cast %65 : vector<128xf32> to vector<1x1x128xf32>
    %67 = vector.broadcast %66 : vector<1x1x128xf32> to vector<16x16x128xf32>
    %68 = arith.mulf %63, %67 : vector<16x16x128xf32>
    %69 = arith.addf %62, %68 : vector<16x16x128xf32>
    %70 = vector.shape_cast %69 : vector<16x16x128xf32> to vector<256x128xf32>
    %c0_35 = arith.constant 0 : index
    %c0_36 = arith.constant 0 : index
    %71 = vector.load %arg3[%c0_35, %c0_36] : memref<128x128xf32, #tpu.memory_space<vmem>>, vector<128x128xf32>
    %cst_37 = arith.constant dense<0.000000e+00> : vector<256x128xf32>
    %72 = tpu.matmul %70, %71, %cst_37 {dimension_numbers = #tpu.dot_dimension_numbers<[1], [0], [0], [1], [0, 0, 1, 1], [], []>} : vector<256x128xf32>, vector<128x128xf32>, vector<256x128xf32> -> vector<256x128xf32>
    %c0_38 = arith.constant 0 : index
    %c0_39 = arith.constant 0 : index
    %73 = vector.load %arg4[%c0_38, %c0_39] : memref<1x128xf32, #tpu.memory_space<vmem>>, vector<1x128xf32>
    %74 = vector.shape_cast %73 : vector<1x128xf32> to vector<128xf32>
    %75 = vector.shape_cast %74 : vector<128xf32> to vector<1x128xf32>
    %76 = vector.broadcast %75 : vector<1x128xf32> to vector<256x128xf32>
    %77 = arith.mulf %72, %76 : vector<256x128xf32>
    %c0_40 = arith.constant 0 : index
    %c0_41 = arith.constant 0 : index
    %78 = vector.load %arg5[%c0_40, %c0_41] : memref<1x128xf32, #tpu.memory_space<vmem>>, vector<1x128xf32>
    %79 = vector.shape_cast %78 : vector<1x128xf32> to vector<128xf32>
    %80 = vector.shape_cast %79 : vector<128xf32> to vector<1x128xf32>
    %81 = vector.broadcast %80 : vector<1x128xf32> to vector<256x128xf32>
    %82 = arith.addf %77, %81 : vector<256x128xf32>
    %83 = vector.shape_cast %82 : vector<256x128xf32> to vector<16x16x128xf32>
    %cst_42 = arith.constant 0.000000e+00 : f32
    %84 = vector.broadcast %cst_42 : f32 to vector<16x16x128xf32>
    %85 = arith.maximumf %83, %84 : vector<16x16x128xf32>
    %c1_43 = arith.constant 1 : index
    %c8_44 = arith.constant 8 : index
    %c0_45 = arith.constant 0 : index
    %86 = vector.load %arg18[%c1_43, %c8_44, %c0_45] : memref<18x25x128xf32, #tpu.memory_space<vmem>>, vector<16x16x128xf32>
    tpu.vector_store %arg18[%c1_43, %c8_44, %c0_45], %85 {strides = array<i32>} : memref<18x25x128xf32, #tpu.memory_space<vmem>>, vector<16x16x128xf32>,
    %c0_46 = arith.constant 0 : index
    %c0_47 = arith.constant 0 : index
    %c0_48 = arith.constant 0 : index
    %87 = vector.load %arg6[%c0_46, %c0_47, %c0_48] : memref<3x3x128xf32, #tpu.memory_space<vmem>>, vector<3x3x128xf32>
    %c0_49 = arith.constant 0 : index
    %c7_50 = arith.constant 7 : index
    %c0_51 = arith.constant 0 : index
    %88 = vector.load %arg18[%c0_49, %c7_50, %c0_51] : memref<18x25x128xf32, #tpu.memory_space<vmem>>, vector<16x16x128xf32>
    %89 = vector.extract_strided_slice %87 {offsets = [0, 0, 0], sizes = [1, 1, 128], strides = [1, 1, 1]} : vector<3x3x128xf32> to vector<1x1x128xf32>
    %90 = vector.shape_cast %89 : vector<1x1x128xf32> to vector<128xf32>
    %91 = vector.shape_cast %90 : vector<128xf32> to vector<1x1x128xf32>
    %92 = vector.broadcast %91 : vector<1x1x128xf32> to vector<16x16x128xf32>
    %93 = arith.mulf %88, %92 : vector<16x16x128xf32>
    %c0_52 = arith.constant 0 : index
    %c8_53 = arith.constant 8 : index
    %c0_54 = arith.constant 0 : index
    %94 = vector.load %arg18[%c0_52, %c8_53, %c0_54] : memref<18x25x128xf32, #tpu.memory_space<vmem>>, vector<16x16x128xf32>
    %95 = vector.extract_strided_slice %87 {offsets = [0, 1, 0], sizes = [1, 1, 128], strides = [1, 1, 1]} : vector<3x3x128xf32> to vector<1x1x128xf32>
    %96 = vector.shape_cast %95 : vector<1x1x128xf32> to vector<128xf32>
    %97 = vector.shape_cast %96 : vector<128xf32> to vector<1x1x128xf32>
    %98 = vector.broadcast %97 : vector<1x1x128xf32> to vector<16x16x128xf32>
    %99 = arith.mulf %94, %98 : vector<16x16x128xf32>
    %100 = arith.addf %93, %99 : vector<16x16x128xf32>
    %c0_55 = arith.constant 0 : index
    %c9_56 = arith.constant 9 : index
    %c0_57 = arith.constant 0 : index
    %101 = vector.load %arg18[%c0_55, %c9_56, %c0_57] : memref<18x25x128xf32, #tpu.memory_space<vmem>>, vector<16x16x128xf32>
    %102 = vector.extract_strided_slice %87 {offsets = [0, 2, 0], sizes = [1, 1, 128], strides = [1, 1, 1]} : vector<3x3x128xf32> to vector<1x1x128xf32>
    %103 = vector.shape_cast %102 : vector<1x1x128xf32> to vector<128xf32>
    %104 = vector.shape_cast %103 : vector<128xf32> to vector<1x1x128xf32>
    %105 = vector.broadcast %104 : vector<1x1x128xf32> to vector<16x16x128xf32>
    %106 = arith.mulf %101, %105 : vector<16x16x128xf32>
    %107 = arith.addf %100, %106 : vector<16x16x128xf32>
    %c1_58 = arith.constant 1 : index
    %c7_59 = arith.constant 7 : index
    %c0_60 = arith.constant 0 : index
    %108 = vector.load %arg18[%c1_58, %c7_59, %c0_60] : memref<18x25x128xf32, #tpu.memory_space<vmem>>, vector<16x16x128xf32>
    %109 = vector.extract_strided_slice %87 {offsets = [1, 0, 0], sizes = [1, 1, 128], strides = [1, 1, 1]} : vector<3x3x128xf32> to vector<1x1x128xf32>
    %110 = vector.shape_cast %109 : vector<1x1x128xf32> to vector<128xf32>
    %111 = vector.shape_cast %110 : vector<128xf32> to vector<1x1x128xf32>
    %112 = vector.broadcast %111 : vector<1x1x128xf32> to vector<16x16x128xf32>
    %113 = arith.mulf %108, %112 : vector<16x16x128xf32>
    %114 = arith.addf %107, %113 : vector<16x16x128xf32>
    %c1_61 = arith.constant 1 : index
    %c8_62 = arith.constant 8 : index
    %c0_63 = arith.constant 0 : index
    %115 = vector.load %arg18[%c1_61, %c8_62, %c0_63] : memref<18x25x128xf32, #tpu.memory_space<vmem>>, vector<16x16x128xf32>
    %116 = vector.extract_strided_slice %87 {offsets = [1, 1, 0], sizes = [1, 1, 128], strides = [1, 1, 1]} : vector<3x3x128xf32> to vector<1x1x128xf32>
    %117 = vector.shape_cast %116 : vector<1x1x128xf32> to vector<128xf32>
    %118 = vector.shape_cast %117 : vector<128xf32> to vector<1x1x128xf32>
    %119 = vector.broadcast %118 : vector<1x1x128xf32> to vector<16x16x128xf32>
    %120 = arith.mulf %115, %119 : vector<16x16x128xf32>
    %121 = arith.addf %114, %120 : vector<16x16x128xf32>
    %c1_64 = arith.constant 1 : index
    %c9_65 = arith.constant 9 : index
    %c0_66 = arith.constant 0 : index
    %122 = vector.load %arg18[%c1_64, %c9_65, %c0_66] : memref<18x25x128xf32, #tpu.memory_space<vmem>>, vector<16x16x128xf32>
    %123 = vector.extract_strided_slice %87 {offsets = [1, 2, 0], sizes = [1, 1, 128], strides = [1, 1, 1]} : vector<3x3x128xf32> to vector<1x1x128xf32>
    %124 = vector.shape_cast %123 : vector<1x1x128xf32> to vector<128xf32>
    %125 = vector.shape_cast %124 : vector<128xf32> to vector<1x1x128xf32>
    %126 = vector.broadcast %125 : vector<1x1x128xf32> to vector<16x16x128xf32>
    %127 = arith.mulf %122, %126 : vector<16x16x128xf32>
    %128 = arith.addf %121, %127 : vector<16x16x128xf32>
    %c2_67 = arith.constant 2 : index
    %c7_68 = arith.constant 7 : index
    %c0_69 = arith.constant 0 : index
    %129 = vector.load %arg18[%c2_67, %c7_68, %c0_69] : memref<18x25x128xf32, #tpu.memory_space<vmem>>, vector<16x16x128xf32>
    %130 = vector.extract_strided_slice %87 {offsets = [2, 0, 0], sizes = [1, 1, 128], strides = [1, 1, 1]} : vector<3x3x128xf32> to vector<1x1x128xf32>
    %131 = vector.shape_cast %130 : vector<1x1x128xf32> to vector<128xf32>
    %132 = vector.shape_cast %131 : vector<128xf32> to vector<1x1x128xf32>
    %133 = vector.broadcast %132 : vector<1x1x128xf32> to vector<16x16x128xf32>
    %134 = arith.mulf %129, %133 : vector<16x16x128xf32>
    %135 = arith.addf %128, %134 : vector<16x16x128xf32>
    %c2_70 = arith.constant 2 : index
    %c8_71 = arith.constant 8 : index
    %c0_72 = arith.constant 0 : index
    %136 = vector.load %arg18[%c2_70, %c8_71, %c0_72] : memref<18x25x128xf32, #tpu.memory_space<vmem>>, vector<16x16x128xf32>
    %137 = vector.extract_strided_slice %87 {offsets = [2, 1, 0], sizes = [1, 1, 128], strides = [1, 1, 1]} : vector<3x3x128xf32> to vector<1x1x128xf32>
    %138 = vector.shape_cast %137 : vector<1x1x128xf32> to vector<128xf32>
    %139 = vector.shape_cast %138 : vector<128xf32> to vector<1x1x128xf32>
    %140 = vector.broadcast %139 : vector<1x1x128xf32> to vector<16x16x128xf32>
    %141 = arith.mulf %136, %140 : vector<16x16x128xf32>
    %142 = arith.addf %135, %141 : vector<16x16x128xf32>
    %c2_73 = arith.constant 2 : index
    %c9_74 = arith.constant 9 : index
    %c0_75 = arith.constant 0 : index
    %143 = vector.load %arg18[%c2_73, %c9_74, %c0_75] : memref<18x25x128xf32, #tpu.memory_space<vmem>>, vector<16x16x128xf32>
    %144 = vector.extract_strided_slice %87 {offsets = [2, 2, 0], sizes = [1, 1, 128], strides = [1, 1, 1]} : vector<3x3x128xf32> to vector<1x1x128xf32>
    %145 = vector.shape_cast %144 : vector<1x1x128xf32> to vector<128xf32>
    %146 = vector.shape_cast %145 : vector<128xf32> to vector<1x1x128xf32>
    %147 = vector.broadcast %146 : vector<1x1x128xf32> to vector<16x16x128xf32>
    %148 = arith.mulf %143, %147 : vector<16x16x128xf32>
    %149 = arith.addf %142, %148 : vector<16x16x128xf32>
    %150 = vector.shape_cast %149 : vector<16x16x128xf32> to vector<256x128xf32>
    %c0_76 = arith.constant 0 : index
    %c0_77 = arith.constant 0 : index
    %151 = vector.load %arg7[%c0_76, %c0_77] : memref<128x128xf32, #tpu.memory_space<vmem>>, vector<128x128xf32>
    %cst_78 = arith.constant dense<0.000000e+00> : vector<256x128xf32>
    %152 = tpu.matmul %150, %151, %cst_78 {dimension_numbers = #tpu.dot_dimension_numbers<[1], [0], [0], [1], [0, 0, 1, 1], [], []>} : vector<256x128xf32>, vector<128x128xf32>, vector<256x128xf32> -> vector<256x128xf32>
    %c0_79 = arith.constant 0 : index
    %c0_80 = arith.constant 0 : index
    %153 = vector.load %arg8[%c0_79, %c0_80] : memref<1x128xf32, #tpu.memory_space<vmem>>, vector<1x128xf32>
    %154 = vector.shape_cast %153 : vector<1x128xf32> to vector<128xf32>
    %155 = vector.shape_cast %154 : vector<128xf32> to vector<1x128xf32>
    %156 = vector.broadcast %155 : vector<1x128xf32> to vector<256x128xf32>
    %157 = arith.mulf %152, %156 : vector<256x128xf32>
    %c0_81 = arith.constant 0 : index
    %c0_82 = arith.constant 0 : index
    %158 = vector.load %arg9[%c0_81, %c0_82] : memref<1x128xf32, #tpu.memory_space<vmem>>, vector<1x128xf32>
    %159 = vector.shape_cast %158 : vector<1x128xf32> to vector<128xf32>
    %160 = vector.shape_cast %159 : vector<128xf32> to vector<1x128xf32>
    %161 = vector.broadcast %160 : vector<1x128xf32> to vector<256x128xf32>
    %162 = arith.addf %157, %161 : vector<256x128xf32>
    %163 = vector.shape_cast %162 : vector<256x128xf32> to vector<16x16x128xf32>
    %c1_83 = arith.constant 1 : index
    %c8_84 = arith.constant 8 : index
    %c0_85 = arith.constant 0 : index
    %164 = vector.load %arg18[%c1_83, %c8_84, %c0_85] : memref<18x25x128xf32, #tpu.memory_space<vmem>>, vector<16x16x128xf32>
    tpu.vector_store %arg18[%c1_83, %c8_84, %c0_85], %163 {strides = array<i32>} : memref<18x25x128xf32, #tpu.memory_space<vmem>>, vector<16x16x128xf32>,
    %c0_86 = arith.constant 0 : index
    %c0_87 = arith.constant 0 : index
    %c0_88 = arith.constant 0 : index
    %165 = vector.load %arg10[%c0_86, %c0_87, %c0_88] : memref<3x3x128xf32, #tpu.memory_space<vmem>>, vector<3x3x128xf32>
    %c0_89 = arith.constant 0 : index
    %c7_90 = arith.constant 7 : index
    %c0_91 = arith.constant 0 : index
    %166 = vector.load %arg18[%c0_89, %c7_90, %c0_91] : memref<18x25x128xf32, #tpu.memory_space<vmem>>, vector<16x16x128xf32>
    %167 = vector.extract_strided_slice %165 {offsets = [0, 0, 0], sizes = [1, 1, 128], strides = [1, 1, 1]} : vector<3x3x128xf32> to vector<1x1x128xf32>
    %168 = vector.shape_cast %167 : vector<1x1x128xf32> to vector<128xf32>
    %169 = vector.shape_cast %168 : vector<128xf32> to vector<1x1x128xf32>
    %170 = vector.broadcast %169 : vector<1x1x128xf32> to vector<16x16x128xf32>
    %171 = arith.mulf %166, %170 : vector<16x16x128xf32>
    %c0_92 = arith.constant 0 : index
    %c8_93 = arith.constant 8 : index
    %c0_94 = arith.constant 0 : index
    %172 = vector.load %arg18[%c0_92, %c8_93, %c0_94] : memref<18x25x128xf32, #tpu.memory_space<vmem>>, vector<16x16x128xf32>
    %173 = vector.extract_strided_slice %165 {offsets = [0, 1, 0], sizes = [1, 1, 128], strides = [1, 1, 1]} : vector<3x3x128xf32> to vector<1x1x128xf32>
    %174 = vector.shape_cast %173 : vector<1x1x128xf32> to vector<128xf32>
    %175 = vector.shape_cast %174 : vector<128xf32> to vector<1x1x128xf32>
    %176 = vector.broadcast %175 : vector<1x1x128xf32> to vector<16x16x128xf32>
    %177 = arith.mulf %172, %176 : vector<16x16x128xf32>
    %178 = arith.addf %171, %177 : vector<16x16x128xf32>
    %c0_95 = arith.constant 0 : index
    %c9_96 = arith.constant 9 : index
    %c0_97 = arith.constant 0 : index
    %179 = vector.load %arg18[%c0_95, %c9_96, %c0_97] : memref<18x25x128xf32, #tpu.memory_space<vmem>>, vector<16x16x128xf32>
    %180 = vector.extract_strided_slice %165 {offsets = [0, 2, 0], sizes = [1, 1, 128], strides = [1, 1, 1]} : vector<3x3x128xf32> to vector<1x1x128xf32>
    %181 = vector.shape_cast %180 : vector<1x1x128xf32> to vector<128xf32>
    %182 = vector.shape_cast %181 : vector<128xf32> to vector<1x1x128xf32>
    %183 = vector.broadcast %182 : vector<1x1x128xf32> to vector<16x16x128xf32>
    %184 = arith.mulf %179, %183 : vector<16x16x128xf32>
    %185 = arith.addf %178, %184 : vector<16x16x128xf32>
    %c1_98 = arith.constant 1 : index
    %c7_99 = arith.constant 7 : index
    %c0_100 = arith.constant 0 : index
    %186 = vector.load %arg18[%c1_98, %c7_99, %c0_100] : memref<18x25x128xf32, #tpu.memory_space<vmem>>, vector<16x16x128xf32>
    %187 = vector.extract_strided_slice %165 {offsets = [1, 0, 0], sizes = [1, 1, 128], strides = [1, 1, 1]} : vector<3x3x128xf32> to vector<1x1x128xf32>
    %188 = vector.shape_cast %187 : vector<1x1x128xf32> to vector<128xf32>
    %189 = vector.shape_cast %188 : vector<128xf32> to vector<1x1x128xf32>
    %190 = vector.broadcast %189 : vector<1x1x128xf32> to vector<16x16x128xf32>
    %191 = arith.mulf %186, %190 : vector<16x16x128xf32>
    %192 = arith.addf %185, %191 : vector<16x16x128xf32>
    %c1_101 = arith.constant 1 : index
    %c8_102 = arith.constant 8 : index
    %c0_103 = arith.constant 0 : index
    %193 = vector.load %arg18[%c1_101, %c8_102, %c0_103] : memref<18x25x128xf32, #tpu.memory_space<vmem>>, vector<16x16x128xf32>
    %194 = vector.extract_strided_slice %165 {offsets = [1, 1, 0], sizes = [1, 1, 128], strides = [1, 1, 1]} : vector<3x3x128xf32> to vector<1x1x128xf32>
    %195 = vector.shape_cast %194 : vector<1x1x128xf32> to vector<128xf32>
    %196 = vector.shape_cast %195 : vector<128xf32> to vector<1x1x128xf32>
    %197 = vector.broadcast %196 : vector<1x1x128xf32> to vector<16x16x128xf32>
    %198 = arith.mulf %193, %197 : vector<16x16x128xf32>
    %199 = arith.addf %192, %198 : vector<16x16x128xf32>
    %c1_104 = arith.constant 1 : index
    %c9_105 = arith.constant 9 : index
    %c0_106 = arith.constant 0 : index
    %200 = vector.load %arg18[%c1_104, %c9_105, %c0_106] : memref<18x25x128xf32, #tpu.memory_space<vmem>>, vector<16x16x128xf32>
    %201 = vector.extract_strided_slice %165 {offsets = [1, 2, 0], sizes = [1, 1, 128], strides = [1, 1, 1]} : vector<3x3x128xf32> to vector<1x1x128xf32>
    %202 = vector.shape_cast %201 : vector<1x1x128xf32> to vector<128xf32>
    %203 = vector.shape_cast %202 : vector<128xf32> to vector<1x1x128xf32>
    %204 = vector.broadcast %203 : vector<1x1x128xf32> to vector<16x16x128xf32>
    %205 = arith.mulf %200, %204 : vector<16x16x128xf32>
    %206 = arith.addf %199, %205 : vector<16x16x128xf32>
    %c2_107 = arith.constant 2 : index
    %c7_108 = arith.constant 7 : index
    %c0_109 = arith.constant 0 : index
    %207 = vector.load %arg18[%c2_107, %c7_108, %c0_109] : memref<18x25x128xf32, #tpu.memory_space<vmem>>, vector<16x16x128xf32>
    %208 = vector.extract_strided_slice %165 {offsets = [2, 0, 0], sizes = [1, 1, 128], strides = [1, 1, 1]} : vector<3x3x128xf32> to vector<1x1x128xf32>
    %209 = vector.shape_cast %208 : vector<1x1x128xf32> to vector<128xf32>
    %210 = vector.shape_cast %209 : vector<128xf32> to vector<1x1x128xf32>
    %211 = vector.broadcast %210 : vector<1x1x128xf32> to vector<16x16x128xf32>
    %212 = arith.mulf %207, %211 : vector<16x16x128xf32>
    %213 = arith.addf %206, %212 : vector<16x16x128xf32>
    %c2_110 = arith.constant 2 : index
    %c8_111 = arith.constant 8 : index
    %c0_112 = arith.constant 0 : index
    %214 = vector.load %arg18[%c2_110, %c8_111, %c0_112] : memref<18x25x128xf32, #tpu.memory_space<vmem>>, vector<16x16x128xf32>
    %215 = vector.extract_strided_slice %165 {offsets = [2, 1, 0], sizes = [1, 1, 128], strides = [1, 1, 1]} : vector<3x3x128xf32> to vector<1x1x128xf32>
    %216 = vector.shape_cast %215 : vector<1x1x128xf32> to vector<128xf32>
    %217 = vector.shape_cast %216 : vector<128xf32> to vector<1x1x128xf32>
    %218 = vector.broadcast %217 : vector<1x1x128xf32> to vector<16x16x128xf32>
    %219 = arith.mulf %214, %218 : vector<16x16x128xf32>
    %220 = arith.addf %213, %219 : vector<16x16x128xf32>
    %c2_113 = arith.constant 2 : index
    %c9_114 = arith.constant 9 : index
    %c0_115 = arith.constant 0 : index
    %221 = vector.load %arg18[%c2_113, %c9_114, %c0_115] : memref<18x25x128xf32, #tpu.memory_space<vmem>>, vector<16x16x128xf32>
    %222 = vector.extract_strided_slice %165 {offsets = [2, 2, 0], sizes = [1, 1, 128], strides = [1, 1, 1]} : vector<3x3x128xf32> to vector<1x1x128xf32>
    %223 = vector.shape_cast %222 : vector<1x1x128xf32> to vector<128xf32>
    %224 = vector.shape_cast %223 : vector<128xf32> to vector<1x1x128xf32>
    %225 = vector.broadcast %224 : vector<1x1x128xf32> to vector<16x16x128xf32>
    %226 = arith.mulf %221, %225 : vector<16x16x128xf32>
    %227 = arith.addf %220, %226 : vector<16x16x128xf32>
    %228 = vector.shape_cast %227 : vector<16x16x128xf32> to vector<256x128xf32>
    %c0_116 = arith.constant 0 : index
    %c0_117 = arith.constant 0 : index
    %229 = vector.load %arg11[%c0_116, %c0_117] : memref<128x128xf32, #tpu.memory_space<vmem>>, vector<128x128xf32>
    %cst_118 = arith.constant dense<0.000000e+00> : vector<256x128xf32>
    %230 = tpu.matmul %228, %229, %cst_118 {dimension_numbers = #tpu.dot_dimension_numbers<[1], [0], [0], [1], [0, 0, 1, 1], [], []>} : vector<256x128xf32>, vector<128x128xf32>, vector<256x128xf32> -> vector<256x128xf32>
    %c0_119 = arith.constant 0 : index
    %c0_120 = arith.constant 0 : index
    %231 = vector.load %arg12[%c0_119, %c0_120] : memref<1x128xf32, #tpu.memory_space<vmem>>, vector<1x128xf32>
    %232 = vector.shape_cast %231 : vector<1x128xf32> to vector<128xf32>
    %233 = vector.shape_cast %232 : vector<128xf32> to vector<1x128xf32>
    %234 = vector.broadcast %233 : vector<1x128xf32> to vector<256x128xf32>
    %235 = arith.mulf %230, %234 : vector<256x128xf32>
    %c0_121 = arith.constant 0 : index
    %c0_122 = arith.constant 0 : index
    %236 = vector.load %arg13[%c0_121, %c0_122] : memref<1x128xf32, #tpu.memory_space<vmem>>, vector<1x128xf32>
    %237 = vector.shape_cast %236 : vector<1x128xf32> to vector<128xf32>
    %238 = vector.shape_cast %237 : vector<128xf32> to vector<1x128xf32>
    %239 = vector.broadcast %238 : vector<1x128xf32> to vector<256x128xf32>
    %240 = arith.addf %235, %239 : vector<256x128xf32>
    %241 = vector.shape_cast %240 : vector<256x128xf32> to vector<16x16x128xf32>
    %242 = vector.shape_cast %3 : vector<16x16x128xf32> to vector<256x128xf32>
    %c0_123 = arith.constant 0 : index
    %c0_124 = arith.constant 0 : index
    %243 = vector.load %arg14[%c0_123, %c0_124] : memref<128x128xf32, #tpu.memory_space<vmem>>, vector<128x128xf32>
    %cst_125 = arith.constant dense<0.000000e+00> : vector<256x128xf32>
    %244 = tpu.matmul %242, %243, %cst_125 {dimension_numbers = #tpu.dot_dimension_numbers<[1], [0], [0], [1], [0, 0, 1, 1], [], []>} : vector<256x128xf32>, vector<128x128xf32>, vector<256x128xf32> -> vector<256x128xf32>
    %c0_126 = arith.constant 0 : index
    %c0_127 = arith.constant 0 : index
    %245 = vector.load %arg15[%c0_126, %c0_127] : memref<1x128xf32, #tpu.memory_space<vmem>>, vector<1x128xf32>
    %246 = vector.shape_cast %245 : vector<1x128xf32> to vector<128xf32>
    %247 = vector.shape_cast %246 : vector<128xf32> to vector<1x128xf32>
    %248 = vector.broadcast %247 : vector<1x128xf32> to vector<256x128xf32>
    %249 = arith.mulf %244, %248 : vector<256x128xf32>
    %c0_128 = arith.constant 0 : index
    %c0_129 = arith.constant 0 : index
    %250 = vector.load %arg16[%c0_128, %c0_129] : memref<1x128xf32, #tpu.memory_space<vmem>>, vector<1x128xf32>
    %251 = vector.shape_cast %250 : vector<1x128xf32> to vector<128xf32>
    %252 = vector.shape_cast %251 : vector<128xf32> to vector<1x128xf32>
    %253 = vector.broadcast %252 : vector<1x128xf32> to vector<256x128xf32>
    %254 = arith.addf %249, %253 : vector<256x128xf32>
    %255 = vector.shape_cast %254 : vector<256x128xf32> to vector<16x16x128xf32>
    %256 = arith.addf %241, %255 : vector<16x16x128xf32>
    %c0_130 = arith.constant 0 : index
    %c0_131 = arith.constant 0 : index
    %c0_132 = arith.constant 0 : index
    %c0_133 = arith.constant 0 : index
    %257 = vector.load %arg17[%c0_130, %c0_131, %c0_132, %c0_133] : memref<1x16x16x128xf32, #tpu.memory_space<vmem>>, vector<1x16x16x128xf32>
    %258 = vector.shape_cast %257 : vector<1x16x16x128xf32> to vector<16x16x128xf32>
    %259 = vector.shape_cast %256 : vector<16x16x128xf32> to vector<1x16x16x128xf32>
    tpu.vector_store %arg17[%c0_130, %c0_131, %c0_132, %c0_133], %259 {strides = array<i32>} : memref<1x16x16x128xf32, #tpu.memory_space<vmem>>, vector<1x16x16x128xf32>,
    return
  }
  func.func @transform_0(%arg0: i32) -> (i32, i32, i32, i32) {
    %c0_i32 = arith.constant 0 : i32
    %c0_i32_0 = arith.constant 0 : i32
    %c0_i32_1 = arith.constant 0 : i32
    %c0_i32_2 = arith.constant 0 : i32
    return %arg0, %c0_i32, %c0_i32_0, %c0_i32_1 : i32, i32, i32, i32
  }
  func.func @transform_1(%arg0: i32) -> (i32, i32, i32) {
    %c0_i32 = arith.constant 0 : i32
    %c0_i32_0 = arith.constant 0 : i32
    %c0_i32_1 = arith.constant 0 : i32
    %c0_i32_2 = arith.constant 0 : i32
    return %c0_i32, %c0_i32_0, %c0_i32_1 : i32, i32, i32
  }
  func.func @transform_2(%arg0: i32) -> (i32, i32) {
    %c0_i32 = arith.constant 0 : i32
    %c0_i32_0 = arith.constant 0 : i32
    %c0_i32_1 = arith.constant 0 : i32
    return %c0_i32, %c0_i32_0 : i32, i32
  }
  func.func @transform_3(%arg0: i32) -> (i32, i32) {
    %c0_i32 = arith.constant 0 : i32
    %c0_i32_0 = arith.constant 0 : i32
    %c0_i32_1 = arith.constant 0 : i32
    return %c0_i32, %c0_i32_0 : i32, i32
  }
  func.func @transform_4(%arg0: i32) -> (i32, i32) {
    %c0_i32 = arith.constant 0 : i32
    %c0_i32_0 = arith.constant 0 : i32
    %c0_i32_1 = arith.constant 0 : i32
    return %c0_i32, %c0_i32_0 : i32, i32
  }
  func.func @transform_5(%arg0: i32) -> (i32, i32, i32) {
    %c0_i32 = arith.constant 0 : i32
    %c0_i32_0 = arith.constant 0 : i32
    %c0_i32_1 = arith.constant 0 : i32
    %c0_i32_2 = arith.constant 0 : i32
    return %c0_i32, %c0_i32_0, %c0_i32_1 : i32, i32, i32
  }
  func.func @transform_6(%arg0: i32) -> (i32, i32) {
    %c0_i32 = arith.constant 0 : i32
    %c0_i32_0 = arith.constant 0 : i32
    %c0_i32_1 = arith.constant 0 : i32
    return %c0_i32, %c0_i32_0 : i32, i32
  }
  func.func @transform_7(%arg0: i32) -> (i32, i32) {
    %c0_i32 = arith.constant 0 : i32
    %c0_i32_0 = arith.constant 0 : i32
    %c0_i32_1 = arith.constant 0 : i32
    return %c0_i32, %c0_i32_0 : i32, i32
  }
  func.func @transform_8(%arg0: i32) -> (i32, i32) {
    %c0_i32 = arith.constant 0 : i32
    %c0_i32_0 = arith.constant 0 : i32
    %c0_i32_1 = arith.constant 0 : i32
    return %c0_i32, %c0_i32_0 : i32, i32
  }
  func.func @transform_9(%arg0: i32) -> (i32, i32, i32) {
    %c0_i32 = arith.constant 0 : i32
    %c0_i32_0 = arith.constant 0 : i32
    %c0_i32_1 = arith.constant 0 : i32
    %c0_i32_2 = arith.constant 0 : i32
    return %c0_i32, %c0_i32_0, %c0_i32_1 : i32, i32, i32
  }
  func.func @transform_10(%arg0: i32) -> (i32, i32) {
    %c0_i32 = arith.constant 0 : i32
    %c0_i32_0 = arith.constant 0 : i32
    %c0_i32_1 = arith.constant 0 : i32
    return %c0_i32, %c0_i32_0 : i32, i32
  }
  func.func @transform_11(%arg0: i32) -> (i32, i32) {
    %c0_i32 = arith.constant 0 : i32
    %c0_i32_0 = arith.constant 0 : i32
    %c0_i32_1 = arith.constant 0 : i32
    return %c0_i32, %c0_i32_0 : i32, i32
  }
  func.func @transform_12(%arg0: i32) -> (i32, i32) {
    %c0_i32 = arith.constant 0 : i32
    %c0_i32_0 = arith.constant 0 : i32
    %c0_i32_1 = arith.constant 0 : i32
    return %c0_i32, %c0_i32_0 : i32, i32
  }
  func.func @transform_13(%arg0: i32) -> (i32, i32) {
    %c0_i32 = arith.constant 0 : i32
    %c0_i32_0 = arith.constant 0 : i32
    %c0_i32_1 = arith.constant 0 : i32
    return %c0_i32, %c0_i32_0 : i32, i32
  }
  func.func @transform_14(%arg0: i32) -> (i32, i32) {
    %c0_i32 = arith.constant 0 : i32
    %c0_i32_0 = arith.constant 0 : i32
    %c0_i32_1 = arith.constant 0 : i32
    return %c0_i32, %c0_i32_0 : i32, i32
  }
  func.func @transform_15(%arg0: i32) -> (i32, i32) {
    %c0_i32 = arith.constant 0 : i32
    %c0_i32_0 = arith.constant 0 : i32
    %c0_i32_1 = arith.constant 0 : i32
    return %c0_i32, %c0_i32_0 : i32, i32
  }
  func.func @transform_16(%arg0: i32) -> (i32, i32, i32, i32) {
    %c0_i32 = arith.constant 0 : i32
    %c0_i32_0 = arith.constant 0 : i32
    %c0_i32_1 = arith.constant 0 : i32
    %c0_i32_2 = arith.constant 0 : i32
    return %arg0, %c0_i32, %c0_i32_0, %c0_i32_1 : i32, i32, i32, i32
  }
}

</mosaic_0001>

<llo_original>
// kernel: tpu_custom_call.1
$region0: #{tpu_custom_call.1}
  #allocation0 [shape = 'u32[]', space=smem, size = 0x4, offset = 0x4, fixed_abs, tag = 'smem constant byte address 0x4 - core index']
  #allocation1 [shape = 'u32[144,128]{1,0:T(1,128)}', space=vmem, size = 0x12000, scoped, tag = 'internal scratch']
  #allocation2 [shape = 'f32[18,25,128]{2,1,0:T(8,128)}', space=vmem, size = 0x48000, scoped, tag = 'scratch operand']
  %s0 = inlined_call_operand.hbm [shape: f32[2,16,16,128], index: 0, kind: input, shape index: {}]
  %s1 = inlined_call_operand.hbm [shape: f32[3,3,128], index: 1, kind: input, shape index: {}]
  %s2 = inlined_call_operand.hbm [shape: f32[128,128], index: 2, kind: input, shape index: {}]
  %s3 = inlined_call_operand.vmem [shape: f32[1,128], index: 3, kind: input, shape index: {}]
  %s4 = inlined_call_operand.vmem [shape: f32[1,128], index: 4, kind: input, shape index: {}]
  %s5 = inlined_call_operand.vmem [shape: f32[3,3,128], index: 5, kind: input, shape index: {}]
  %s6 = inlined_call_operand.hbm [shape: f32[128,128], index: 6, kind: input, shape index: {}]
  %s7 = inlined_call_operand.hbm [shape: f32[1,128], index: 7, kind: input, shape index: {}]
  %s8 = inlined_call_operand.vmem [shape: f32[1,128], index: 8, kind: input, shape index: {}]
  %s9 = inlined_call_operand.vmem [shape: f32[3,3,128], index: 9, kind: input, shape index: {}]
  %s10 = inlined_call_operand.hbm [shape: f32[128,128], index: 10, kind: input, shape index: {}]
  %s11 = inlined_call_operand.vmem [shape: f32[1,128], index: 11, kind: input, shape index: {}]
  %s12 = inlined_call_operand.vmem [shape: f32[1,128], index: 12, kind: input, shape index: {}]
  %s13 = inlined_call_operand.hbm [shape: f32[128,128], index: 13, kind: input, shape index: {}]
  %s14 = inlined_call_operand.vmem [shape: f32[1,128], index: 14, kind: input, shape index: {}]
  %s15 = inlined_call_operand.vmem [shape: f32[1,128], index: 15, kind: input, shape index: {}]
  %s16 = inlined_call_operand.hbm [shape: f32[2,16,16,128], index: 16, kind: output, shape index: {}]
  %s17 = sld [smem:[#allocation0]]
  $region125: #{tpu_custom_call.1} parent=0
    _
  %s19 = ssub.s32 1, %s17
  %s20 = scalar_select 0, %s19, %s17
  $region1: #{tpu_custom_call.1} parent=0
    #allocation3 [shape = 'u8[262144]{0}', space=vmem, size = 0x40000, scoped, tag = 'input window, operand 0']
    #allocation4 [shape = 's32[2]{0}', space=sflag, size = 0x8, scoped, tag = 'scoped memory for tpu_custom_call.1']
    #allocation5 [shape = 's32[2]{0}', space=sflag, size = 0x8, scoped, tag = 'scoped memory for tpu_custom_call.1']
    #allocation6 [shape = 'u8[6144]{0}', space=vmem, size = 0x1800, scoped, tag = 'input window, operand 1, single buffered']
    #allocation7 [shape = 's32[1]{0}', space=sflag, size = 0x4, scoped, tag = 'scoped memory for tpu_custom_call.1']
    #allocation8 [shape = 'u8[65536]{0}', space=vmem, size = 0x10000, scoped, tag = 'input window, operand 2, single buffered']
    #allocation9 [shape = 'u8[65536]{0}', space=vmem, size = 0x10000, scoped, tag = 'input window, operand 6, single buffered']
    #allocation10 [shape = 's32[1]{0}', space=sflag, size = 0x4, scoped, tag = 'scoped memory for tpu_custom_call.1']
    #allocation11 [shape = 'u8[512]{0}', space=vmem, size = 0x400, scoped, tag = 'input window, operand 7, single buffered']
    #allocation12 [shape = 'u8[65536]{0}', space=vmem, size = 0x10000, scoped, tag = 'input window, operand 10, single buffered']
    #allocation13 [shape = 's32[1]{0}', space=sflag, size = 0x4, scoped, tag = 'scoped memory for tpu_custom_call.1']
    #allocation14 [shape = 'u8[65536]{0}', space=vmem, size = 0x10000, scoped, tag = 'input window, operand 13, single buffered']
    #allocation15 [shape = 'u8[262144]{0}', space=vmem, size = 0x40000, scoped, tag = 'output window, operand 0']
    %21 = vsyncpa [#allocation4], 0
    %s22 = scalar_lea.sflag [#allocation4], 1
    %23 = vsyncpa %s22, 0
    %24 = vsyncpa [#allocation7], 0
    %25 = vsyncpa [#allocation10], 0
    %26 = vsyncpa [#allocation13], 0
    %27 = vsyncpa [#allocation5], 0
    %s28 = scalar_lea.sflag [#allocation5], 1
    %29 = vsyncpa %s28, 0
    loop: start=0, step=1, limit=4
    $region2: #{tpu_custom_call.1} parent=1 // loop_pre_header
      _
    $region3: #{tpu_custom_call.1} parent=1 // loop_header
      %s31 = sphi 0, %s35
      %p32 = scmp.ge.s32.totalorder %s31, 4
      %s41 = sphi 0, %s43
      %s44 = sphi 0, %s41
      %s45 = sphi 0, %s44
      %s61 = sphi 0, %s45
      %s65 = sphi 0, %s65
      %s67 = sphi 0, %s65
      %s68 = sphi 0, %s67
      %s82 = sphi 0, %s68
      %s86 = sphi 0, %s86
      %s88 = sphi 0, %s86
      %s89 = sphi 0, %s88
      %s103 = sphi 0, %s89
      %s107 = sphi 0, %s107
      %s109 = sphi 0, %s107
      %s110 = sphi 0, %s109
      %s124 = sphi 0, %s110
      %s128 = sphi 0, %s128
      %s130 = sphi 0, %s128
      %s131 = sphi 0, %s130
      %s145 = sphi 0, %s131
      %s149 = sphi 0, %s149
      %s151 = sphi 0, %s149
      %s152 = sphi 0, %s151
      %s166 = sphi 0, %s152
      %s170 = sphi 0, %s170
      %s172 = sphi 0, %s170
      %s173 = sphi 0, %s172
      %s187 = sphi 0, %s173
      %s191 = sphi 0, %s191
      %s193 = sphi 0, %s191
      %s194 = sphi 0, %s193
      %s208 = sphi 0, %s194
      %s212 = sphi 0, %s212
      %s214 = sphi 0, %s212
      %s215 = sphi 0, %s214
      %s229 = sphi 0, %s215
      %s233 = sphi 0, %s233
      %s235 = sphi 0, %s233
      %s236 = sphi 0, %s235
      %s250 = sphi 0, %s236
      %s254 = sphi 0, %s254
      %s256 = sphi 0, %s254
      %s257 = sphi 0, %s256
      %s271 = sphi 0, %s257
      %s275 = sphi 0, %s275
      %s277 = sphi 0, %s275
      %s278 = sphi 0, %s277
      %s292 = sphi 0, %s278
      %s296 = sphi 0, %s296
      %s298 = sphi 0, %s296
      %s299 = sphi 0, %s298
      %s313 = sphi 0, %s299
      %s317 = sphi 0, %s317
      %s319 = sphi 0, %s317
      %s320 = sphi 0, %s319
      %s334 = sphi 0, %s320
      %s338 = sphi 0, %s338
      %s340 = sphi 0, %s338
      %s341 = sphi 0, %s340
      %s355 = sphi 0, %s341
      %s359 = sphi 0, %s359
      %s361 = sphi 0, %s359
      %s362 = sphi 0, %s361
      %s376 = sphi 0, %s362
      %s382 = sphi 0, %s384
      %s385 = sphi 0, %s382
      %s386 = sphi 0, %s385
      %s402 = sphi 0, %s386
    $region4: #{tpu_custom_call.1} parent=1 // loop_header_branch
      %34 = sbr.rel (%p32) target = $region8
    $region5: #{tpu_custom_call.1} parent=1 // loop_body
      %s36 = ssub.s32 %s31, 1
      %s37 = ssub.s32 %s31, 2
      %s38 = sadd.s32 %s31, 1
      %s39 = ssub.s32 %s31, %s38
      %p40 = scmp.eq.s32.totalorder %s39, 0
      %s42 = sadd.s32 %s41, 1
      %s43 = scalar_select %p40, %s41, %s42
      %p46 = pneg %p40
      %p47 = scmp.eq.s32.totalorder %s31, 1
      %p48 = por %p46, %p47
      %p49 = scmp.ne.s32.totalorder %s41, %s44
      %p50 = scmp.eq.s32.totalorder %s31, 0
      %p51 = por %p49, %p50
      %p52 = scmp.ne.s32.totalorder %s41, %s44
      %p53 = scmp.eq.s32.totalorder %s36, 1
      %p54 = por %p52, %p53
      %p55 = scmp.ne.s32.totalorder %s44, %s45
      %p56 = scmp.eq.s32.totalorder %s36, 0
      %p57 = por %p55, %p56
      %p58 = scmp.ne.s32.totalorder %s44, %s45
      %p59 = scmp.eq.s32.totalorder %s37, 1
      %p60 = por %p58, %p59
      %p62 = scmp.ne.s32.totalorder %s45, %s61
      %p63 = scmp.eq.s32.totalorder %s37, 0
      %p64 = por %p62, %p63
      %s66 = sadd.s32 %s65, 1
      %p69 = scmp.eq.s32.totalorder %s31, 1
      %p70 = scmp.ne.s32.totalorder %s65, %s67
      %p71 = scmp.eq.s32.totalorder %s31, 0
      %p72 = por %p70, %p71
      %p73 = scmp.ne.s32.totalorder %s65, %s67
      %p74 = scmp.eq.s32.totalorder %s36, 1
      %p75 = por %p73, %p74
      %p76 = scmp.ne.s32.totalorder %s67, %s68
      %p77 = scmp.eq.s32.totalorder %s36, 0
      %p78 = por %p76, %p77
      %p79 = scmp.ne.s32.totalorder %s67, %s68
      %p80 = scmp.eq.s32.totalorder %s37, 1
      %p81 = por %p79, %p80
      %p83 = scmp.ne.s32.totalorder %s68, %s82
      %p84 = scmp.eq.s32.totalorder %s37, 0
      %p85 = por %p83, %p84
      %s87 = sadd.s32 %s86, 1
      %p90 = scmp.eq.s32.totalorder %s31, 1
      %p91 = scmp.ne.s32.totalorder %s86, %s88
      %p92 = scmp.eq.s32.totalorder %s31, 0
      %p93 = por %p91, %p92
      %p94 = scmp.ne.s32.totalorder %s86, %s88
      %p95 = scmp.eq.s32.totalorder %s36, 1
      %p96 = por %p94, %p95
      %p97 = scmp.ne.s32.totalorder %s88, %s89
      %p98 = scmp.eq.s32.totalorder %s36, 0
      %p99 = por %p97, %p98
      %p100 = scmp.ne.s32.totalorder %s88, %s89
      %p101 = scmp.eq.s32.totalorder %s37, 1
      %p102 = por %p100, %p101
      %p104 = scmp.ne.s32.totalorder %s89, %s103
      %p105 = scmp.eq.s32.totalorder %s37, 0
      %p106 = por %p104, %p105
      %s108 = sadd.s32 %s107, 1
      %p111 = scmp.eq.s32.totalorder %s31, 1
      %p112 = scmp.ne.s32.totalorder %s107, %s109
      %p113 = scmp.eq.s32.totalorder %s31, 0
      %p114 = por %p112, %p113
      %p115 = scmp.ne.s32.totalorder %s107, %s109
      %p116 = scmp.eq.s32.totalorder %s36, 1
      %p117 = por %p115, %p116
      %p118 = scmp.ne.s32.totalorder %s109, %s110
      %p119 = scmp.eq.s32.totalorder %s36, 0
      %p120 = por %p118, %p119
      %p121 = scmp.ne.s32.totalorder %s109, %s110
      %p122 = scmp.eq.s32.totalorder %s37, 1
      %p123 = por %p121, %p122
      %p125 = scmp.ne.s32.totalorder %s110, %s124
      %p126 = scmp.eq.s32.totalorder %s37, 0
      %p127 = por %p125, %p126
      %s129 = sadd.s32 %s128, 1
      %p132 = scmp.eq.s32.totalorder %s31, 1
      %p133 = scmp.ne.s32.totalorder %s128, %s130
      %p134 = scmp.eq.s32.totalorder %s31, 0
      %p135 = por %p133, %p134
      %p136 = scmp.ne.s32.totalorder %s128, %s130
      %p137 = scmp.eq.s32.totalorder %s36, 1
      %p138 = por %p136, %p137
      %p139 = scmp.ne.s32.totalorder %s130, %s131
      %p140 = scmp.eq.s32.totalorder %s36, 0
      %p141 = por %p139, %p140
      %p142 = scmp.ne.s32.totalorder %s130, %s131
      %p143 = scmp.eq.s32.totalorder %s37, 1
      %p144 = por %p142, %p143
      %p146 = scmp.ne.s32.totalorder %s131, %s145
      %p147 = scmp.eq.s32.totalorder %s37, 0
      %p148 = por %p146, %p147
      %s150 = sadd.s32 %s149, 1
      %p153 = scmp.eq.s32.totalorder %s31, 1
      %p154 = scmp.ne.s32.totalorder %s149, %s151
      %p155 = scmp.eq.s32.totalorder %s31, 0
      %p156 = por %p154, %p155
      %p157 = scmp.ne.s32.totalorder %s149, %s151
      %p158 = scmp.eq.s32.totalorder %s36, 1
      %p159 = por %p157, %p158
      %p160 = scmp.ne.s32.totalorder %s151, %s152
      %p161 = scmp.eq.s32.totalorder %s36, 0
      %p162 = por %p160, %p161
      %p163 = scmp.ne.s32.totalorder %s151, %s152
      %p164 = scmp.eq.s32.totalorder %s37, 1
      %p165 = por %p163, %p164
      %p167 = scmp.ne.s32.totalorder %s152, %s166
      %p168 = scmp.eq.s32.totalorder %s37, 0
      %p169 = por %p167, %p168
      %s171 = sadd.s32 %s170, 1
      %p174 = scmp.eq.s32.totalorder %s31, 1
      %p175 = scmp.ne.s32.totalorder %s170, %s172
      %p176 = scmp.eq.s32.totalorder %s31, 0
      %p177 = por %p175, %p176
      %p178 = scmp.ne.s32.totalorder %s170, %s172
      %p179 = scmp.eq.s32.totalorder %s36, 1
      %p180 = por %p178, %p179
      %p181 = scmp.ne.s32.totalorder %s172, %s173
      %p182 = scmp.eq.s32.totalorder %s36, 0
      %p183 = por %p181, %p182
      %p184 = scmp.ne.s32.totalorder %s172, %s173
      %p185 = scmp.eq.s32.totalorder %s37, 1
      %p186 = por %p184, %p185
      %p188 = scmp.ne.s32.totalorder %s173, %s187
      %p189 = scmp.eq.s32.totalorder %s37, 0
      %p190 = por %p188, %p189
      %s192 = sadd.s32 %s191, 1
      %p195 = scmp.eq.s32.totalorder %s31, 1
      %p196 = scmp.ne.s32.totalorder %s191, %s193
      %p197 = scmp.eq.s32.totalorder %s31, 0
      %p198 = por %p196, %p197
      %p199 = scmp.ne.s32.totalorder %s191, %s193
      %p200 = scmp.eq.s32.totalorder %s36, 1
      %p201 = por %p199, %p200
      %p202 = scmp.ne.s32.totalorder %s193, %s194
      %p203 = scmp.eq.s32.totalorder %s36, 0
      %p204 = por %p202, %p203
      %p205 = scmp.ne.s32.totalorder %s193, %s194
      %p206 = scmp.eq.s32.totalorder %s37, 1
      %p207 = por %p205, %p206
      %p209 = scmp.ne.s32.totalorder %s194, %s208
      %p210 = scmp.eq.s32.totalorder %s37, 0
      %p211 = por %p209, %p210
      %s213 = sadd.s32 %s212, 1
      %p216 = scmp.eq.s32.totalorder %s31, 1
      %p217 = scmp.ne.s32.totalorder %s212, %s214
      %p218 = scmp.eq.s32.totalorder %s31, 0
      %p219 = por %p217, %p218
      %p220 = scmp.ne.s32.totalorder %s212, %s214
      %p221 = scmp.eq.s32.totalorder %s36, 1
      %p222 = por %p220, %p221
      %p223 = scmp.ne.s32.totalorder %s214, %s215
      %p224 = scmp.eq.s32.totalorder %s36, 0
      %p225 = por %p223, %p224
      %p226 = scmp.ne.s32.totalorder %s214, %s215
      %p227 = scmp.eq.s32.totalorder %s37, 1
      %p228 = por %p226, %p227
      %p230 = scmp.ne.s32.totalorder %s215, %s229
      %p231 = scmp.eq.s32.totalorder %s37, 0
      %p232 = por %p230, %p231
      %s234 = sadd.s32 %s233, 1
      %p237 = scmp.eq.s32.totalorder %s31, 1
      %p238 = scmp.ne.s32.totalorder %s233, %s235
      %p239 = scmp.eq.s32.totalorder %s31, 0
      %p240 = por %p238, %p239
      %p241 = scmp.ne.s32.totalorder %s233, %s235
      %p242 = scmp.eq.s32.totalorder %s36, 1
      %p243 = por %p241, %p242
      %p244 = scmp.ne.s32.totalorder %s235, %s236
      %p245 = scmp.eq.s32.totalorder %s36, 0
      %p246 = por %p244, %p245
      %p247 = scmp.ne.s32.totalorder %s235, %s236
      %p248 = scmp.eq.s32.totalorder %s37, 1
      %p249 = por %p247, %p248
      %p251 = scmp.ne.s32.totalorder %s236, %s250
      %p252 = scmp.eq.s32.totalorder %s37, 0
      %p253 = por %p251, %p252
      %s255 = sadd.s32 %s254, 1
      %p258 = scmp.eq.s32.totalorder %s31, 1
      %p259 = scmp.ne.s32.totalorder %s254, %s256
      %p260 = scmp.eq.s32.totalorder %s31, 0
      %p261 = por %p259, %p260
      %p262 = scmp.ne.s32.totalorder %s254, %s256
      %p263 = scmp.eq.s32.totalorder %s36, 1
      %p264 = por %p262, %p263
      %p265 = scmp.ne.s32.totalorder %s256, %s257
      %p266 = scmp.eq.s32.totalorder %s36, 0
      %p267 = por %p265, %p266
      %p268 = scmp.ne.s32.totalorder %s256, %s257
      %p269 = scmp.eq.s32.totalorder %s37, 1
      %p270 = por %p268, %p269
      %p272 = scmp.ne.s32.totalorder %s257, %s271
      %p273 = scmp.eq.s32.totalorder %s37, 0
      %p274 = por %p272, %p273
      %s276 = sadd.s32 %s275, 1
      %p279 = scmp.eq.s32.totalorder %s31, 1
      %p280 = scmp.ne.s32.totalorder %s275, %s277
      %p281 = scmp.eq.s32.totalorder %s31, 0
      %p282 = por %p280, %p281
      %p283 = scmp.ne.s32.totalorder %s275, %s277
      %p284 = scmp.eq.s32.totalorder %s36, 1
      %p285 = por %p283, %p284
      %p286 = scmp.ne.s32.totalorder %s277, %s278
      %p287 = scmp.eq.s32.totalorder %s36, 0
      %p288 = por %p286, %p287
      %p289 = scmp.ne.s32.totalorder %s277, %s278
      %p290 = scmp.eq.s32.totalorder %s37, 1
      %p291 = por %p289, %p290
      %p293 = scmp.ne.s32.totalorder %s278, %s292
      %p294 = scmp.eq.s32.totalorder %s37, 0
      %p295 = por %p293, %p294
      %s297 = sadd.s32 %s296, 1
      %p300 = scmp.eq.s32.totalorder %s31, 1
      %p301 = scmp.ne.s32.totalorder %s296, %s298
      %p302 = scmp.eq.s32.totalorder %s31, 0
      %p303 = por %p301, %p302
      %p304 = scmp.ne.s32.totalorder %s296, %s298
      %p305 = scmp.eq.s32.totalorder %s36, 1
      %p306 = por %p304, %p305
      %p307 = scmp.ne.s32.totalorder %s298, %s299
      %p308 = scmp.eq.s32.totalorder %s36, 0
      %p309 = por %p307, %p308
      %p310 = scmp.ne.s32.totalorder %s298, %s299
      %p311 = scmp.eq.s32.totalorder %s37, 1
      %p312 = por %p310, %p311
      %p314 = scmp.ne.s32.totalorder %s299, %s313
      %p315 = scmp.eq.s32.totalorder %s37, 0
      %p316 = por %p314, %p315
      %s318 = sadd.s32 %s317, 1
      %p321 = scmp.eq.s32.totalorder %s31, 1
      %p322 = scmp.ne.s32.totalorder %s317, %s319
      %p323 = scmp.eq.s32.totalorder %s31, 0
      %p324 = por %p322, %p323
      %p325 = scmp.ne.s32.totalorder %s317, %s319
      %p326 = scmp.eq.s32.totalorder %s36, 1
      %p327 = por %p325, %p326
      %p328 = scmp.ne.s32.totalorder %s319, %s320
      %p329 = scmp.eq.s32.totalorder %s36, 0
      %p330 = por %p328, %p329
      %p331 = scmp.ne.s32.totalorder %s319, %s320
      %p332 = scmp.eq.s32.totalorder %s37, 1
      %p333 = por %p331, %p332
      %p335 = scmp.ne.s32.totalorder %s320, %s334
      %p336 = scmp.eq.s32.totalorder %s37, 0
      %p337 = por %p335, %p336
      %s339 = sadd.s32 %s338, 1
      %p342 = scmp.eq.s32.totalorder %s31, 1
      %p343 = scmp.ne.s32.totalorder %s338, %s340
      %p344 = scmp.eq.s32.totalorder %s31, 0
      %p345 = por %p343, %p344
      %p346 = scmp.ne.s32.totalorder %s338, %s340
      %p347 = scmp.eq.s32.totalorder %s36, 1
      %p348 = por %p346, %p347
      %p349 = scmp.ne.s32.totalorder %s340, %s341
      %p350 = scmp.eq.s32.totalorder %s36, 0
      %p351 = por %p349, %p350
      %p352 = scmp.ne.s32.totalorder %s340, %s341
      %p353 = scmp.eq.s32.totalorder %s37, 1
      %p354 = por %p352, %p353
      %p356 = scmp.ne.s32.totalorder %s341, %s355
      %p357 = scmp.eq.s32.totalorder %s37, 0
      %p358 = por %p356, %p357
      %s360 = sadd.s32 %s359, 1
      %p363 = scmp.eq.s32.totalorder %s31, 1
      %p364 = scmp.ne.s32.totalorder %s359, %s361
      %p365 = scmp.eq.s32.totalorder %s31, 0
      %p366 = por %p364, %p365
      %p367 = scmp.ne.s32.totalorder %s359, %s361
      %p368 = scmp.eq.s32.totalorder %s36, 1
      %p369 = por %p367, %p368
      %p370 = scmp.ne.s32.totalorder %s361, %s362
      %p371 = scmp.eq.s32.totalorder %s36, 0
      %p372 = por %p370, %p371
      %p373 = scmp.ne.s32.totalorder %s361, %s362
      %p374 = scmp.eq.s32.totalorder %s37, 1
      %p375 = por %p373, %p374
      %p377 = scmp.ne.s32.totalorder %s362, %s376
      %p378 = scmp.eq.s32.totalorder %s37, 0
      %p379 = por %p377, %p378
      %s380 = ssub.s32 %s31, %s38
      %p381 = scmp.eq.s32.totalorder %s380, 0
      %s383 = sadd.s32 %s382, 1
      %s384 = scalar_select %p381, %s382, %s383
      %p387 = pneg %p381
      %p388 = scmp.eq.s32.totalorder %s31, 1
      %p389 = por %p387, %p388
      %p390 = scmp.ne.s32.totalorder %s382, %s385
      %p391 = scmp.eq.s32.totalorder %s31, 0
      %p392 = por %p390, %p391
      %p393 = scmp.ne.s32.totalorder %s382, %s385
      %p394 = scmp.eq.s32.totalorder %s36, 1
      %p395 = por %p393, %p394
      %p396 = scmp.ne.s32.totalorder %s385, %s386
      %p397 = scmp.eq.s32.totalorder %s36, 0
      %p398 = por %p396, %p397
      %p399 = scmp.ne.s32.totalorder %s385, %s386
      %p400 = scmp.eq.s32.totalorder %s37, 1
      %p401 = por %p399, %p400
      %p403 = scmp.ne.s32.totalorder %s386, %s402
      %p404 = scmp.eq.s32.totalorder %s37, 0
      %p405 = por %p403, %p404
      %p406 = scmp.le.s32.totalorder 1, %s31
      %p407 = scmp.lt.s32.totalorder %s31, 3
      %p408 = pnand %p406, %p407
      %p409 = pneg %p408
      // Predicated region
      $region9: #{tpu_custom_call.1} parent=5 // pred_check
        _
      $region10: #{tpu_custom_call.1} parent=5 // pred_check_branch
        %411 = sbr.rel (%p408) target = $region12
      $region11: #{tpu_custom_call.1} parent=5 // pred_region
        %s412 = ssub.s32 %s31, 1
        // Predicated region
        $region13: #{tpu_custom_call.1} parent=11 // pred_check
          %p413 = pneg %p78
        $region14: #{tpu_custom_call.1} parent=11 // pred_check_branch
          %415 = sbr.rel (%p413) target = $region16
        $region15: #{tpu_custom_call.1} parent=11 // pred_region
          %s417 = ssub.s32 192, 192
          %418 = vsyncadd [#allocation7], %s417
          %s419 = sshll.u32 [#allocation6], 4
          %s420 = int_to_ptr.vmem [resolvable:$true] %s419
          %425 = dma.hbm_to_vmem [thread:$0]  %s1, 192, %s420, [#allocation7], 64, 64, 4
        $region16: #{tpu_custom_call.1} parent=11 // pred_fallthru
          _
        // Predicated region
        $region17: #{tpu_custom_call.1} parent=11 // pred_check
          %p426 = pneg %p99
        $region18: #{tpu_custom_call.1} parent=11 // pred_check_branch
          %428 = sbr.rel (%p426) target = $region20
        $region19: #{tpu_custom_call.1} parent=11 // pred_region
          %s430 = ssub.s32 2048, 2048
          %431 = vsyncadd [#allocation7], %s430
          %s432 = sshll.u32 [#allocation8], 4
          %s433 = int_to_ptr.vmem [resolvable:$true] %s432
          %438 = dma.hbm_to_vmem [thread:$0]  %s2, 2048, %s433, [#allocation7], 128, 128, 8
        $region20: #{tpu_custom_call.1} parent=11 // pred_fallthru
          _
        // Predicated region
        $region21: #{tpu_custom_call.1} parent=11 // pred_check
          %p439 = pneg %p120
        $region22: #{tpu_custom_call.1} parent=11 // pred_check_branch
          %441 = sbr.rel (%p439) target = $region24
        $region23: #{tpu_custom_call.1} parent=11 // pred_region
          _
        $region24: #{tpu_custom_call.1} parent=11 // pred_fallthru
          _
        // Predicated region
        $region25: #{tpu_custom_call.1} parent=11 // pred_check
          %p442 = pneg %p141
        $region26: #{tpu_custom_call.1} parent=11 // pred_check_branch
          %444 = sbr.rel (%p442) target = $region28
        $region27: #{tpu_custom_call.1} parent=11 // pred_region
          _
        $region28: #{tpu_custom_call.1} parent=11 // pred_fallthru
          _
        // Predicated region
        $region29: #{tpu_custom_call.1} parent=11 // pred_check
          %p445 = pneg %p162
        $region30: #{tpu_custom_call.1} parent=11 // pred_check_branch
          %447 = sbr.rel (%p445) target = $region32
        $region31: #{tpu_custom_call.1} parent=11 // pred_region
          _
        $region32: #{tpu_custom_call.1} parent=11 // pred_fallthru
          _
        // Predicated region
        $region33: #{tpu_custom_call.1} parent=11 // pred_check
          %p448 = pneg %p183
        $region34: #{tpu_custom_call.1} parent=11 // pred_check_branch
          %450 = sbr.rel (%p448) target = $region36
        $region35: #{tpu_custom_call.1} parent=11 // pred_region
          %s452 = ssub.s32 2048, 2048
          %453 = vsyncadd [#allocation10], %s452
          %s454 = sshll.u32 [#allocation9], 4
          %s455 = int_to_ptr.vmem [resolvable:$true] %s454
          %460 = dma.hbm_to_vmem [thread:$0]  %s6, 2048, %s455, [#allocation10], 128, 128, 8
        $region36: #{tpu_custom_call.1} parent=11 // pred_fallthru
          _
        // Predicated region
        $region37: #{tpu_custom_call.1} parent=11 // pred_check
          %p461 = pneg %p204
        $region38: #{tpu_custom_call.1} parent=11 // pred_check_branch
          %463 = sbr.rel (%p461) target = $region40
        $region39: #{tpu_custom_call.1} parent=11 // pred_region
          %s465 = ssub.s32 16, 16
          %466 = vsyncadd [#allocation10], %s465
          %s468 = sshll.u32 [#allocation11], 4
          %s469 = int_to_ptr.vmem [resolvable:$true] %s468
          %471 = dma.hbm_to_vmem [thread:$0]  %s7, 16, %s469, [#allocation10]
        $region40: #{tpu_custom_call.1} parent=11 // pred_fallthru
          _
        // Predicated region
        $region41: #{tpu_custom_call.1} parent=11 // pred_check
          %p472 = pneg %p225
        $region42: #{tpu_custom_call.1} parent=11 // pred_check_branch
          %474 = sbr.rel (%p472) target = $region44
        $region43: #{tpu_custom_call.1} parent=11 // pred_region
          _
        $region44: #{tpu_custom_call.1} parent=11 // pred_fallthru
          _
        // Predicated region
        $region45: #{tpu_custom_call.1} parent=11 // pred_check
          %p475 = pneg %p246
        $region46: #{tpu_custom_call.1} parent=11 // pred_check_branch
          %477 = sbr.rel (%p475) target = $region48
        $region47: #{tpu_custom_call.1} parent=11 // pred_region
          _
        $region48: #{tpu_custom_call.1} parent=11 // pred_fallthru
          _
        // Predicated region
        $region49: #{tpu_custom_call.1} parent=11 // pred_check
          %p478 = pneg %p267
        $region50: #{tpu_custom_call.1} parent=11 // pred_check_branch
          %480 = sbr.rel (%p478) target = $region52
        $region51: #{tpu_custom_call.1} parent=11 // pred_region
          %s482 = ssub.s32 2048, 2048
          %483 = vsyncadd [#allocation13], %s482
          %s484 = sshll.u32 [#allocation12], 4
          %s485 = int_to_ptr.vmem [resolvable:$true] %s484
          %490 = dma.hbm_to_vmem [thread:$0]  %s10, 2048, %s485, [#allocation13], 128, 128, 8
        $region52: #{tpu_custom_call.1} parent=11 // pred_fallthru
          _
        // Predicated region
        $region53: #{tpu_custom_call.1} parent=11 // pred_check
          %p491 = pneg %p288
        $region54: #{tpu_custom_call.1} parent=11 // pred_check_branch
          %493 = sbr.rel (%p491) target = $region56
        $region55: #{tpu_custom_call.1} parent=11 // pred_region
          _
        $region56: #{tpu_custom_call.1} parent=11 // pred_fallthru
          _
        // Predicated region
        $region57: #{tpu_custom_call.1} parent=11 // pred_check
          %p494 = pneg %p309
        $region58: #{tpu_custom_call.1} parent=11 // pred_check_branch
          %496 = sbr.rel (%p494) target = $region60
        $region59: #{tpu_custom_call.1} parent=11 // pred_region
          _
        $region60: #{tpu_custom_call.1} parent=11 // pred_fallthru
          _
        // Predicated region
        $region61: #{tpu_custom_call.1} parent=11 // pred_check
          %p497 = pneg %p330
        $region62: #{tpu_custom_call.1} parent=11 // pred_check_branch
          %499 = sbr.rel (%p497) target = $region64
        $region63: #{tpu_custom_call.1} parent=11 // pred_region
          %s501 = ssub.s32 2048, 2048
          %502 = vsyncadd [#allocation13], %s501
          %s503 = sshll.u32 [#allocation14], 4
          %s504 = int_to_ptr.vmem [resolvable:$true] %s503
          %509 = dma.hbm_to_vmem [thread:$0]  %s13, 2048, %s504, [#allocation13], 128, 128, 8
        $region64: #{tpu_custom_call.1} parent=11 // pred_fallthru
          _
        // Predicated region
        $region65: #{tpu_custom_call.1} parent=11 // pred_check
          %p510 = pneg %p351
        $region66: #{tpu_custom_call.1} parent=11 // pred_check_branch
          %512 = sbr.rel (%p510) target = $region68
        $region67: #{tpu_custom_call.1} parent=11 // pred_region
          _
        $region68: #{tpu_custom_call.1} parent=11 // pred_fallthru
          _
        // Predicated region
        $region69: #{tpu_custom_call.1} parent=11 // pred_check
          %p513 = pneg %p372
        $region70: #{tpu_custom_call.1} parent=11 // pred_check_branch
          %515 = sbr.rel (%p513) target = $region72
        $region71: #{tpu_custom_call.1} parent=11 // pred_region
          _
        $region72: #{tpu_custom_call.1} parent=11 // pred_fallthru
          _
      $region12: #{tpu_custom_call.1} parent=5 // pred_fallthru
        _
      %p516 = scmp.lt.s32.totalorder %s31, 2
      // Predicated region
      $region73: #{tpu_custom_call.1} parent=5 // pred_check
        %p517 = pneg %p516
      $region74: #{tpu_custom_call.1} parent=5 // pred_check_branch
        %519 = sbr.rel (%p517) target = $region76
      $region75: #{tpu_custom_call.1} parent=5 // pred_region
        // Predicated region
        $region77: #{tpu_custom_call.1} parent=75 // pred_check
          %p520 = pneg %p51
        $region78: #{tpu_custom_call.1} parent=75 // pred_check_branch
          %522 = sbr.rel (%p520) target = $region80
        $region79: #{tpu_custom_call.1} parent=75 // pred_region
          %s523 = sand.u32 %s41, 1
          %s524 = scalar_lea.sflag [#allocation4], %s523
          %s525 = sand.u32 %s41, 1
          %s526 = smul.addr %s525, 256
          %s527 = scalar_lea.vmem [#allocation3], %s526
          %s529 = ssub.s32 4096, 4096
          %530 = vsyncadd %s524, %s529
          %s531 = smul.addr %s31, 32
          %s532 = smul.addr %s531, 128
          %s533 = scalar_lea.hbm %s0, %s532
          %s534 = sshll.u32 %s527, 4
          %s535 = int_to_ptr.vmem [resolvable:$true] %s534
          %540 = dma.hbm_to_vmem [thread:$0]  %s533, 4096, %s535, %s524, 128, 128, 8
        $region80: #{tpu_custom_call.1} parent=75 // pred_fallthru
          _
      $region76: #{tpu_custom_call.1} parent=5 // pred_fallthru
        _
      %p541 = scmp.le.s32.totalorder 1, %s31
      %p542 = scmp.lt.s32.totalorder %s31, 3
      %p543 = pnand %p541, %p542
      %p544 = pneg %p543
      // Predicated region
      $region81: #{tpu_custom_call.1} parent=5 // pred_check
        _
      $region82: #{tpu_custom_call.1} parent=5 // pred_check_branch
        %546 = sbr.rel (%p543) target = $region84
      $region83: #{tpu_custom_call.1} parent=5 // pred_region
        %s547 = ssub.s32 %s31, 1
        %s548 = sand.u32 %s44, 1
        %s549 = scalar_lea.sflag [#allocation4], %s548
        %s550 = sand.u32 %s44, 1
        %s551 = smul.addr %s550, 256
        %s552 = scalar_lea.vmem [#allocation3], %s551
        // Predicated region
        $region85: #{tpu_custom_call.1} parent=83 // pred_check
          %p553 = pneg %p57
        $region86: #{tpu_custom_call.1} parent=83 // pred_check_branch
          %555 = sbr.rel (%p553) target = $region88
        $region87: #{tpu_custom_call.1} parent=83 // pred_region
          %556 = dma.done %s549, 4096
        $region88: #{tpu_custom_call.1} parent=83 // pred_fallthru
          _
        // Predicated region
        $region89: #{tpu_custom_call.1} parent=83 // pred_check
          %p557 = pneg %p78
        $region90: #{tpu_custom_call.1} parent=83 // pred_check_branch
          %559 = sbr.rel (%p557) target = $region92
        $region91: #{tpu_custom_call.1} parent=83 // pred_region
          %560 = dma.done [#allocation7], 192
        $region92: #{tpu_custom_call.1} parent=83 // pred_fallthru
          _
        // Predicated region
        $region93: #{tpu_custom_call.1} parent=83 // pred_check
          %p561 = pneg %p99
        $region94: #{tpu_custom_call.1} parent=83 // pred_check_branch
          %563 = sbr.rel (%p561) target = $region96
        $region95: #{tpu_custom_call.1} parent=83 // pred_region
          %564 = dma.done [#allocation7], 2048
        $region96: #{tpu_custom_call.1} parent=83 // pred_fallthru
          _
        // Predicated region
        $region97: #{tpu_custom_call.1} parent=83 // pred_check
          %p565 = pneg %p183
        $region98: #{tpu_custom_call.1} parent=83 // pred_check_branch
          %567 = sbr.rel (%p565) target = $region100
        $region99: #{tpu_custom_call.1} parent=83 // pred_region
          %568 = dma.done [#allocation10], 2048
        $region100: #{tpu_custom_call.1} parent=83 // pred_fallthru
          _
        // Predicated region
        $region101: #{tpu_custom_call.1} parent=83 // pred_check
          %p569 = pneg %p204
        $region102: #{tpu_custom_call.1} parent=83 // pred_check_branch
          %571 = sbr.rel (%p569) target = $region104
        $region103: #{tpu_custom_call.1} parent=83 // pred_region
          %572 = dma.done [#allocation10], 16
        $region104: #{tpu_custom_call.1} parent=83 // pred_fallthru
          _
        // Predicated region
        $region105: #{tpu_custom_call.1} parent=83 // pred_check
          %p573 = pneg %p267
        $region106: #{tpu_custom_call.1} parent=83 // pred_check_branch
          %575 = sbr.rel (%p573) target = $region108
        $region107: #{tpu_custom_call.1} parent=83 // pred_region
          %576 = dma.done [#allocation13], 2048
        $region108: #{tpu_custom_call.1} parent=83 // pred_fallthru
          _
        // Predicated region
        $region109: #{tpu_custom_call.1} parent=83 // pred_check
          %p577 = pneg %p330
        $region110: #{tpu_custom_call.1} parent=83 // pred_check_branch
          %579 = sbr.rel (%p577) target = $region112
        $region111: #{tpu_custom_call.1} parent=83 // pred_region
          %580 = dma.done [#allocation13], 2048
        $region112: #{tpu_custom_call.1} parent=83 // pred_fallthru
          _
        %s581 = sand.u32 %s44, 1
        %s582 = scalar_lea.sflag [#allocation4], %s581
        %s583 = sand.u32 %s44, 1
        %s584 = smul.addr %s583, 256
        %s585 = scalar_lea.vmem [#allocation3], %s584
        %p586 = pneg %p57
        %p587 = pneg %p54
        %p588 = pneg %p78
        %p589 = pneg %p75
        %p590 = pneg %p99
        %p591 = pneg %p96
        %p592 = pneg %p120
        %p593 = pneg %p117
        %p594 = pneg %p141
        %p595 = pneg %p138
        %p596 = pneg %p162
        %p597 = pneg %p159
        %p598 = pneg %p183
        %p599 = pneg %p180
        %p600 = pneg %p204
        %p601 = pneg %p201
        %p602 = pneg %p225
        %p603 = pneg %p222
        %p604 = pneg %p246
        %p605 = pneg %p243
        %p606 = pneg %p267
        %p607 = pneg %p264
        %p608 = pneg %p288
        %p609 = pneg %p285
        %p610 = pneg %p309
        %p611 = pneg %p306
        %p612 = pneg %p330
        %p613 = pneg %p327
        %p614 = pneg %p351
        %p615 = pneg %p348
        %p616 = pneg %p372
        %p617 = pneg %p369
        %p618 = pneg %p398
        %p619 = pneg %p395
        %s620 = sand.u32 %s385, 1
        %s621 = scalar_lea.sflag [#allocation5], %s620
        %s622 = sand.u32 %s385, 1
        %s623 = smul.addr %s622, 256
        %s624 = scalar_lea.vmem [#allocation15], %s623
        %625 = vst [vmem:[#allocation2] sm:$0xff] 0.0
        %626 = vst [vmem:[#allocation2 + $0x8] sm:$0xff] 0.0
        %627 = vst [vmem:[#allocation2 + $0x10] sm:$0xff] 0.0
        %628 = vst [vmem:[#allocation2 + $0x18] sm:$0x1] 0.0
        %629 = vst [vmem:[#allocation2 + $0x20] sm:$0xff] 0.0
        %630 = vst [vmem:[#allocation2 + $0x28] sm:$0xff] 0.0
        %631 = vst [vmem:[#allocation2 + $0x30] sm:$0xff] 0.0
        %632 = vst [vmem:[#allocation2 + $0x38] sm:$0x1] 0.0
        %633 = vst [vmem:[#allocation2 + $0x40] sm:$0xff] 0.0
        %634 = vst [vmem:[#allocation2 + $0x48] sm:$0xff] 0.0
        %635 = vst [vmem:[#allocation2 + $0x50] sm:$0xff] 0.0
        %636 = vst [vmem:[#allocation2 + $0x58] sm:$0x1] 0.0
        %637 = vst [vmem:[#allocation2 + $0x60] sm:$0xff] 0.0
        %638 = vst [vmem:[#allocation2 + $0x68] sm:$0xff] 0.0
        %639 = vst [vmem:[#allocation2 + $0x70] sm:$0xff] 0.0
        %640 = vst [vmem:[#allocation2 + $0x78] sm:$0x1] 0.0
        %641 = vst [vmem:[#allocation2 + $0x80] sm:$0xff] 0.0
        %642 = vst [vmem:[#allocation2 + $0x88] sm:$0xff] 0.0
        %643 = vst [vmem:[#allocation2 + $0x90] sm:$0xff] 0.0
        %644 = vst [vmem:[#allocation2 + $0x98] sm:$0x1] 0.0
        %645 = vst [vmem:[#allocation2 + $0xa0] sm:$0xff] 0.0
        %646 = vst [vmem:[#allocation2 + $0xa8] sm:$0xff] 0.0
        %647 = vst [vmem:[#allocation2 + $0xb0] sm:$0xff] 0.0
        %648 = vst [vmem:[#allocation2 + $0xb8] sm:$0x1] 0.0
        %649 = vst [vmem:[#allocation2 + $0xc0] sm:$0xff] 0.0
        %650 = vst [vmem:[#allocation2 + $0xc8] sm:$0xff] 0.0
        %651 = vst [vmem:[#allocation2 + $0xd0] sm:$0xff] 0.0
        %652 = vst [vmem:[#allocation2 + $0xd8] sm:$0x1] 0.0
        %653 = vst [vmem:[#allocation2 + $0xe0] sm:$0xff] 0.0
        %654 = vst [vmem:[#allocation2 + $0xe8] sm:$0xff] 0.0
        %655 = vst [vmem:[#allocation2 + $0xf0] sm:$0xff] 0.0
        %656 = vst [vmem:[#allocation2 + $0xf8] sm:$0x1] 0.0
        %657 = vst [vmem:[#allocation2 + $0x100] sm:$0xff] 0.0
        %658 = vst [vmem:[#allocation2 + $0x108] sm:$0xff] 0.0
        %659 = vst [vmem:[#allocation2 + $0x110] sm:$0xff] 0.0
        %660 = vst [vmem:[#allocation2 + $0x118] sm:$0x1] 0.0
        %661 = vst [vmem:[#allocation2 + $0x120] sm:$0xff] 0.0
        %662 = vst [vmem:[#allocation2 + $0x128] sm:$0xff] 0.0
        %663 = vst [vmem:[#allocation2 + $0x130] sm:$0xff] 0.0
        %664 = vst [vmem:[#allocation2 + $0x138] sm:$0x1] 0.0
        %665 = vst [vmem:[#allocation2 + $0x140] sm:$0xff] 0.0
        %666 = vst [vmem:[#allocation2 + $0x148] sm:$0xff] 0.0
        %667 = vst [vmem:[#allocation2 + $0x150] sm:$0xff] 0.0
        %668 = vst [vmem:[#allocation2 + $0x158] sm:$0x1] 0.0
        %669 = vst [vmem:[#allocation2 + $0x160] sm:$0xff] 0.0
        %670 = vst [vmem:[#allocation2 + $0x168] sm:$0xff] 0.0
        %671 = vst [vmem:[#allocation2 + $0x170] sm:$0xff] 0.0
        %672 = vst [vmem:[#allocation2 + $0x178] sm:$0x1] 0.0
        %673 = vst [vmem:[#allocation2 + $0x180] sm:$0xff] 0.0
        %674 = vst [vmem:[#allocation2 + $0x188] sm:$0xff] 0.0
        %675 = vst [vmem:[#allocation2 + $0x190] sm:$0xff] 0.0
        %676 = vst [vmem:[#allocation2 + $0x198] sm:$0x1] 0.0
        %677 = vst [vmem:[#allocation2 + $0x1a0] sm:$0xff] 0.0
        %678 = vst [vmem:[#allocation2 + $0x1a8] sm:$0xff] 0.0
        %679 = vst [vmem:[#allocation2 + $0x1b0] sm:$0xff] 0.0
        %680 = vst [vmem:[#allocation2 + $0x1b8] sm:$0x1] 0.0
        %681 = vst [vmem:[#allocation2 + $0x1c0] sm:$0xff] 0.0
        %682 = vst [vmem:[#allocation2 + $0x1c8] sm:$0xff] 0.0
        %683 = vst [vmem:[#allocation2 + $0x1d0] sm:$0xff] 0.0
        %684 = vst [vmem:[#allocation2 + $0x1d8] sm:$0x1] 0.0
        %685 = vst [vmem:[#allocation2 + $0x1e0] sm:$0xff] 0.0
        %686 = vst [vmem:[#allocation2 + $0x1e8] sm:$0xff] 0.0
        %687 = vst [vmem:[#allocation2 + $0x1f0] sm:$0xff] 0.0
        %688 = vst [vmem:[#allocation2 + $0x1f8] sm:$0x1] 0.0
        %689 = vst [vmem:[#allocation2 + $0x200] sm:$0xff] 0.0
        %690 = vst [vmem:[#allocation2 + $0x208] sm:$0xff] 0.0
        %691 = vst [vmem:[#allocation2 + $0x210] sm:$0xff] 0.0
        %692 = vst [vmem:[#allocation2 + $0x218] sm:$0x1] 0.0
        %693 = vst [vmem:[#allocation2 + $0x220] sm:$0xff] 0.0
        %694 = vst [vmem:[#allocation2 + $0x228] sm:$0xff] 0.0
        %695 = vst [vmem:[#allocation2 + $0x230] sm:$0xff] 0.0
        %696 = vst [vmem:[#allocation2 + $0x238] sm:$0x1] 0.0
        %v697 = vld [vmem:[%s552] sm:$0xff]
        %v698 = vld [vmem:[%s552 + $0x8] sm:$0xff]
        %v699 = vld [vmem:[%s552 + $0x10] sm:$0xff]
        %v700 = vld [vmem:[%s552 + $0x18] sm:$0xff]
        %v701 = vld [vmem:[%s552 + $0x20] sm:$0xff]
        %v702 = vld [vmem:[%s552 + $0x28] sm:$0xff]
        %v703 = vld [vmem:[%s552 + $0x30] sm:$0xff]
        %v704 = vld [vmem:[%s552 + $0x38] sm:$0xff]
        %v705 = vld [vmem:[%s552 + $0x40] sm:$0xff]
        %v706 = vld [vmem:[%s552 + $0x48] sm:$0xff]
        %v707 = vld [vmem:[%s552 + $0x50] sm:$0xff]
        %v708 = vld [vmem:[%s552 + $0x58] sm:$0xff]
        %v709 = vld [vmem:[%s552 + $0x60] sm:$0xff]
        %v710 = vld [vmem:[%s552 + $0x68] sm:$0xff]
        %v711 = vld [vmem:[%s552 + $0x70] sm:$0xff]
        %v712 = vld [vmem:[%s552 + $0x78] sm:$0xff]
        %v713 = vld [vmem:[%s552 + $0x80] sm:$0xff]
        %v714 = vld [vmem:[%s552 + $0x88] sm:$0xff]
        %v715 = vld [vmem:[%s552 + $0x90] sm:$0xff]
        %v716 = vld [vmem:[%s552 + $0x98] sm:$0xff]
        %v717 = vld [vmem:[%s552 + $0xa0] sm:$0xff]
        %v718 = vld [vmem:[%s552 + $0xa8] sm:$0xff]
        %v719 = vld [vmem:[%s552 + $0xb0] sm:$0xff]
        %v720 = vld [vmem:[%s552 + $0xb8] sm:$0xff]
        %v721 = vld [vmem:[%s552 + $0xc0] sm:$0xff]
        %v722 = vld [vmem:[%s552 + $0xc8] sm:$0xff]
        %v723 = vld [vmem:[%s552 + $0xd0] sm:$0xff]
        %v724 = vld [vmem:[%s552 + $0xd8] sm:$0xff]
        %v725 = vld [vmem:[%s552 + $0xe0] sm:$0xff]
        %v726 = vld [vmem:[%s552 + $0xe8] sm:$0xff]
        %v727 = vld [vmem:[%s552 + $0xf0] sm:$0xff]
        %v728 = vld [vmem:[%s552 + $0xf8] sm:$0xff]
        %v729 = vmax.f32 %v697, 0.0
        %v730 = vmax.f32 %v698, 0.0
        %v731 = vmax.f32 %v699, 0.0
        %v732 = vmax.f32 %v700, 0.0
        %v733 = vmax.f32 %v701, 0.0
        %v734 = vmax.f32 %v702, 0.0
        %v735 = vmax.f32 %v703, 0.0
        %v736 = vmax.f32 %v704, 0.0
        %v737 = vmax.f32 %v705, 0.0
        %v738 = vmax.f32 %v706, 0.0
        %v739 = vmax.f32 %v707, 0.0
        %v740 = vmax.f32 %v708, 0.0
        %v741 = vmax.f32 %v709, 0.0
        %v742 = vmax.f32 %v710, 0.0
        %v743 = vmax.f32 %v711, 0.0
        %v744 = vmax.f32 %v712, 0.0
        %v745 = vmax.f32 %v713, 0.0
        %v746 = vmax.f32 %v714, 0.0
        %v747 = vmax.f32 %v715, 0.0
        %v748 = vmax.f32 %v716, 0.0
        %v749 = vmax.f32 %v717, 0.0
        %v750 = vmax.f32 %v718, 0.0
        %v751 = vmax.f32 %v719, 0.0
        %v752 = vmax.f32 %v720, 0.0
        %v753 = vmax.f32 %v721, 0.0
        %v754 = vmax.f32 %v722, 0.0
        %v755 = vmax.f32 %v723, 0.0
        %v756 = vmax.f32 %v724, 0.0
        %v757 = vmax.f32 %v725, 0.0
        %v758 = vmax.f32 %v726, 0.0
        %v759 = vmax.f32 %v727, 0.0
        %v760 = vmax.f32 %v728, 0.0
        %s761 = scalar_lea.vmem [#allocation2], 32
        %762 = vst [vmem:[%s761 + $0x8] sm:$0xff] %v729
        %763 = vst [vmem:[%s761 + $0x10] sm:$0xff] %v730
        %764 = vst [vmem:[%s761 + $0x28] sm:$0xff] %v731
        %765 = vst [vmem:[%s761 + $0x30] sm:$0xff] %v732
        %766 = vst [vmem:[%s761 + $0x48] sm:$0xff] %v733
        %767 = vst [vmem:[%s761 + $0x50] sm:$0xff] %v734
        %768 = vst [vmem:[%s761 + $0x68] sm:$0xff] %v735
        %769 = vst [vmem:[%s761 + $0x70] sm:$0xff] %v736
        %770 = vst [vmem:[%s761 + $0x88] sm:$0xff] %v737
        %771 = vst [vmem:[%s761 + $0x90] sm:$0xff] %v738
        %772 = vst [vmem:[%s761 + $0xa8] sm:$0xff] %v739
        %773 = vst [vmem:[%s761 + $0xb0] sm:$0xff] %v740
        %774 = vst [vmem:[%s761 + $0xc8] sm:$0xff] %v741
        %775 = vst [vmem:[%s761 + $0xd0] sm:$0xff] %v742
        %776 = vst [vmem:[%s761 + $0xe8] sm:$0xff] %v743
        %777 = vst [vmem:[%s761 + $0xf0] sm:$0xff] %v744
        %778 = vst [vmem:[%s761 + $0x108] sm:$0xff] %v745
        %779 = vst [vmem:[%s761 + $0x110] sm:$0xff] %v746
        %780 = vst [vmem:[%s761 + $0x128] sm:$0xff] %v747
        %781 = vst [vmem:[%s761 + $0x130] sm:$0xff] %v748
        %782 = vst [vmem:[%s761 + $0x148] sm:$0xff] %v749
        %783 = vst [vmem:[%s761 + $0x150] sm:$0xff] %v750
        %784 = vst [vmem:[%s761 + $0x168] sm:$0xff] %v751
        %785 = vst [vmem:[%s761 + $0x170] sm:$0xff] %v752
        %786 = vst [vmem:[%s761 + $0x188] sm:$0xff] %v753
        %787 = vst [vmem:[%s761 + $0x190] sm:$0xff] %v754
        %788 = vst [vmem:[%s761 + $0x1a8] sm:$0xff] %v755
        %789 = vst [vmem:[%s761 + $0x1b0] sm:$0xff] %v756
        %790 = vst [vmem:[%s761 + $0x1c8] sm:$0xff] %v757
        %791 = vst [vmem:[%s761 + $0x1d0] sm:$0xff] %v758
        %792 = vst [vmem:[%s761 + $0x1e8] sm:$0xff] %v759
        %793 = vst [vmem:[%s761 + $0x1f0] sm:$0xff] %v760
        %v794 = vld [vmem:[#allocation6] sm:$0x7]
        %v795 = vld [vmem:[#allocation6 + $0x4] sm:$0x7]
        %v796 = vld [vmem:[#allocation6 + $0x8] sm:$0x7]
        %v797 = vld [vmem:[#allocation2 + $0x7] sm:$0xff]
        %v798 = vld [vmem:[#allocation2 + $0xf] sm:$0xff]
        %v799 = vld [vmem:[#allocation2 + $0x27] sm:$0xff]
        %v800 = vld [vmem:[#allocation2 + $0x2f] sm:$0xff]
        %v801 = vld [vmem:[#allocation2 + $0x47] sm:$0xff]
        %v802 = vld [vmem:[#allocation2 + $0x4f] sm:$0xff]
        %v803 = vld [vmem:[#allocation2 + $0x67] sm:$0xff]
        %v804 = vld [vmem:[#allocation2 + $0x6f] sm:$0xff]
        %v805 = vld [vmem:[#allocation2 + $0x87] sm:$0xff]
        %v806 = vld [vmem:[#allocation2 + $0x8f] sm:$0xff]
        %v807 = vld [vmem:[#allocation2 + $0xa7] sm:$0xff]
        %v808 = vld [vmem:[#allocation2 + $0xaf] sm:$0xff]
        %v809 = vld [vmem:[#allocation2 + $0xc7] sm:$0xff]
        %v810 = vld [vmem:[#allocation2 + $0xcf] sm:$0xff]
        %v811 = vld [vmem:[#allocation2 + $0xe7] sm:$0xff]
        %v812 = vld [vmem:[#allocation2 + $0xef] sm:$0xff]
        %v813 = vld [vmem:[#allocation2 + $0x107] sm:$0xff]
        %v814 = vld [vmem:[#allocation2 + $0x10f] sm:$0xff]
        %v815 = vld [vmem:[#allocation2 + $0x127] sm:$0xff]
        %v816 = vld [vmem:[#allocation2 + $0x12f] sm:$0xff]
        %v817 = vld [vmem:[#allocation2 + $0x147] sm:$0xff]
        %v818 = vld [vmem:[#allocation2 + $0x14f] sm:$0xff]
        %v819 = vld [vmem:[#allocation2 + $0x167] sm:$0xff]
        %v820 = vld [vmem:[#allocation2 + $0x16f] sm:$0xff]
        %v821 = vld [vmem:[#allocation2 + $0x187] sm:$0xff]
        %v822 = vld [vmem:[#allocation2 + $0x18f] sm:$0xff]
        %v823 = vld [vmem:[#allocation2 + $0x1a7] sm:$0xff]
        %v824 = vld [vmem:[#allocation2 + $0x1af] sm:$0xff]
        %v825 = vld [vmem:[#allocation2 + $0x1c7] sm:$0xff]
        %v826 = vld [vmem:[#allocation2 + $0x1cf] sm:$0xff]
        %v827 = vld [vmem:[#allocation2 + $0x1e7] sm:$0xff]
        %v828 = vld [vmem:[#allocation2 + $0x1ef] sm:$0xff]
        %v829 = vlaneseq
        %v830 = vshrl.u32 %v829, 7
        %v831 = vsub.s32 0, %v830
        %v832 = vrot.slane %v794, %v831
        %v833 = vmul.f32 %v797, %v832
        %v834 = vmul.f32 %v798, %v832
        %v835 = vmul.f32 %v799, %v832
        %v836 = vmul.f32 %v800, %v832
        %v837 = vmul.f32 %v801, %v832
        %v838 = vmul.f32 %v802, %v832
        %v839 = vmul.f32 %v803, %v832
        %v840 = vmul.f32 %v804, %v832
        %v841 = vmul.f32 %v805, %v832
        %v842 = vmul.f32 %v806, %v832
        %v843 = vmul.f32 %v807, %v832
        %v844 = vmul.f32 %v808, %v832
        %v845 = vmul.f32 %v809, %v832
        %v846 = vmul.f32 %v810, %v832
        %v847 = vmul.f32 %v811, %v832
        %v848 = vmul.f32 %v812, %v832
        %v849 = vmul.f32 %v813, %v832
        %v850 = vmul.f32 %v814, %v832
        %v851 = vmul.f32 %v815, %v832
        %v852 = vmul.f32 %v816, %v832
        %v853 = vmul.f32 %v817, %v832
        %v854 = vmul.f32 %v818, %v832
        %v855 = vmul.f32 %v819, %v832
        %v856 = vmul.f32 %v820, %v832
        %v857 = vmul.f32 %v821, %v832
        %v858 = vmul.f32 %v822, %v832
        %v859 = vmul.f32 %v823, %v832
        %v860 = vmul.f32 %v824, %v832
        %v861 = vmul.f32 %v825, %v832
        %v862 = vmul.f32 %v826, %v832
        %v863 = vmul.f32 %v827, %v832
        %v864 = vmul.f32 %v828, %v832
        %v865 = vld [vmem:[#allocation2 + $0x8] sm:$0xff]
        %v866 = vld [vmem:[#allocation2 + $0x10] sm:$0xff]
        %v867 = vld [vmem:[#allocation2 + $0x28] sm:$0xff]
        %v868 = vld [vmem:[#allocation2 + $0x30] sm:$0xff]
        %v869 = vld [vmem:[#allocation2 + $0x48] sm:$0xff]
        %v870 = vld [vmem:[#allocation2 + $0x50] sm:$0xff]
        %v871 = vld [vmem:[#allocation2 + $0x68] sm:$0xff]
        %v872 = vld [vmem:[#allocation2 + $0x70] sm:$0xff]
        %v873 = vld [vmem:[#allocation2 + $0x88] sm:$0xff]
        %v874 = vld [vmem:[#allocation2 + $0x90] sm:$0xff]
        %v875 = vld [vmem:[#allocation2 + $0xa8] sm:$0xff]
        %v876 = vld [vmem:[#allocation2 + $0xb0] sm:$0xff]
        %v877 = vld [vmem:[#allocation2 + $0xc8] sm:$0xff]
        %v878 = vld [vmem:[#allocation2 + $0xd0] sm:$0xff]
        %v879 = vld [vmem:[#allocation2 + $0xe8] sm:$0xff]
        %v880 = vld [vmem:[#allocation2 + $0xf0] sm:$0xff]
        %v881 = vld [vmem:[#allocation2 + $0x108] sm:$0xff]
        %v882 = vld [vmem:[#allocation2 + $0x110] sm:$0xff]
        %v883 = vld [vmem:[#allocation2 + $0x128] sm:$0xff]
        %v884 = vld [vmem:[#allocation2 + $0x130] sm:$0xff]
        %v885 = vld [vmem:[#allocation2 + $0x148] sm:$0xff]
        %v886 = vld [vmem:[#allocation2 + $0x150] sm:$0xff]
        %v887 = vld [vmem:[#allocation2 + $0x168] sm:$0xff]
        %v888 = vld [vmem:[#allocation2 + $0x170] sm:$0xff]
        %v889 = vld [vmem:[#allocation2 + $0x188] sm:$0xff]
        %v890 = vld [vmem:[#allocation2 + $0x190] sm:$0xff]
        %v891 = vld [vmem:[#allocation2 + $0x1a8] sm:$0xff]
        %v892 = vld [vmem:[#allocation2 + $0x1b0] sm:$0xff]
        %v893 = vld [vmem:[#allocation2 + $0x1c8] sm:$0xff]
        %v894 = vld [vmem:[#allocation2 + $0x1d0] sm:$0xff]
        %v895 = vld [vmem:[#allocation2 + $0x1e8] sm:$0xff]
        %v896 = vld [vmem:[#allocation2 + $0x1f0] sm:$0xff]
        %v897 = vlaneseq
        %v898 = vshrl.u32 %v897, 7
        %v899 = vsub.s32 1, %v898
        %v900 = vrot.slane %v794, %v899
        %v901 = vmul.f32 %v865, %v900
        %v902 = vmul.f32 %v866, %v900
        %v903 = vmul.f32 %v867, %v900
        %v904 = vmul.f32 %v868, %v900
        %v905 = vmul.f32 %v869, %v900
        %v906 = vmul.f32 %v870, %v900
        %v907 = vmul.f32 %v871, %v900
        %v908 = vmul.f32 %v872, %v900
        %v909 = vmul.f32 %v873, %v900
        %v910 = vmul.f32 %v874, %v900
        %v911 = vmul.f32 %v875, %v900
        %v912 = vmul.f32 %v876, %v900
        %v913 = vmul.f32 %v877, %v900
        %v914 = vmul.f32 %v878, %v900
        %v915 = vmul.f32 %v879, %v900
        %v916 = vmul.f32 %v880, %v900
        %v917 = vmul.f32 %v881, %v900
        %v918 = vmul.f32 %v882, %v900
        %v919 = vmul.f32 %v883, %v900
        %v920 = vmul.f32 %v884, %v900
        %v921 = vmul.f32 %v885, %v900
        %v922 = vmul.f32 %v886, %v900
        %v923 = vmul.f32 %v887, %v900
        %v924 = vmul.f32 %v888, %v900
        %v925 = vmul.f32 %v889, %v900
        %v926 = vmul.f32 %v890, %v900
        %v927 = vmul.f32 %v891, %v900
        %v928 = vmul.f32 %v892, %v900
        %v929 = vmul.f32 %v893, %v900
        %v930 = vmul.f32 %v894, %v900
        %v931 = vmul.f32 %v895, %v900
        %v932 = vmul.f32 %v896, %v900
        %v933 = vadd.f32 %v833, %v901
        %v934 = vadd.f32 %v834, %v902
        %v935 = vadd.f32 %v835, %v903
        %v936 = vadd.f32 %v836, %v904
        %v937 = vadd.f32 %v837, %v905
        %v938 = vadd.f32 %v838, %v906
        %v939 = vadd.f32 %v839, %v907
        %v940 = vadd.f32 %v840, %v908
        %v941 = vadd.f32 %v841, %v909
        %v942 = vadd.f32 %v842, %v910
        %v943 = vadd.f32 %v843, %v911
        %v944 = vadd.f32 %v844, %v912
        %v945 = vadd.f32 %v845, %v913
        %v946 = vadd.f32 %v846, %v914
        %v947 = vadd.f32 %v847, %v915
        %v948 = vadd.f32 %v848, %v916
        %v949 = vadd.f32 %v849, %v917
        %v950 = vadd.f32 %v850, %v918
        %v951 = vadd.f32 %v851, %v919
        %v952 = vadd.f32 %v852, %v920
        %v953 = vadd.f32 %v853, %v921
        %v954 = vadd.f32 %v854, %v922
        %v955 = vadd.f32 %v855, %v923
        %v956 = vadd.f32 %v856, %v924
        %v957 = vadd.f32 %v857, %v925
        %v958 = vadd.f32 %v858, %v926
        %v959 = vadd.f32 %v859, %v927
        %v960 = vadd.f32 %v860, %v928
        %v961 = vadd.f32 %v861, %v929
        %v962 = vadd.f32 %v862, %v930
        %v963 = vadd.f32 %v863, %v931
        %v964 = vadd.f32 %v864, %v932
        %v965 = vld [vmem:[#allocation2 + $0x9] sm:$0xff]
        %v966 = vld [vmem:[#allocation2 + $0x11] sm:$0xff]
        %v967 = vld [vmem:[#allocation2 + $0x29] sm:$0xff]
        %v968 = vld [vmem:[#allocation2 + $0x31] sm:$0xff]
        %v969 = vld [vmem:[#allocation2 + $0x49] sm:$0xff]
        %v970 = vld [vmem:[#allocation2 + $0x51] sm:$0xff]
        %v971 = vld [vmem:[#allocation2 + $0x69] sm:$0xff]
        %v972 = vld [vmem:[#allocation2 + $0x71] sm:$0xff]
        %v973 = vld [vmem:[#allocation2 + $0x89] sm:$0xff]
        %v974 = vld [vmem:[#allocation2 + $0x91] sm:$0xff]
        %v975 = vld [vmem:[#allocation2 + $0xa9] sm:$0xff]
        %v976 = vld [vmem:[#allocation2 + $0xb1] sm:$0xff]
        %v977 = vld [vmem:[#allocation2 + $0xc9] sm:$0xff]
        %v978 = vld [vmem:[#allocation2 + $0xd1] sm:$0xff]
        %v979 = vld [vmem:[#allocation2 + $0xe9] sm:$0xff]
        %v980 = vld [vmem:[#allocation2 + $0xf1] sm:$0xff]
        %v981 = vld [vmem:[#allocation2 + $0x109] sm:$0xff]
        %v982 = vld [vmem:[#allocation2 + $0x111] sm:$0xff]
        %v983 = vld [vmem:[#allocation2 + $0x129] sm:$0xff]
        %v984 = vld [vmem:[#allocation2 + $0x131] sm:$0xff]
        %v985 = vld [vmem:[#allocation2 + $0x149] sm:$0xff]
        %v986 = vld [vmem:[#allocation2 + $0x151] sm:$0xff]
        %v987 = vld [vmem:[#allocation2 + $0x169] sm:$0xff]
        %v988 = vld [vmem:[#allocation2 + $0x171] sm:$0xff]
        %v989 = vld [vmem:[#allocation2 + $0x189] sm:$0xff]
        %v990 = vld [vmem:[#allocation2 + $0x191] sm:$0xff]
        %v991 = vld [vmem:[#allocation2 + $0x1a9] sm:$0xff]
        %v992 = vld [vmem:[#allocation2 + $0x1b1] sm:$0xff]
        %v993 = vld [vmem:[#allocation2 + $0x1c9] sm:$0xff]
        %v994 = vld [vmem:[#allocation2 + $0x1d1] sm:$0xff]
        %v995 = vld [vmem:[#allocation2 + $0x1e9] sm:$0xff]
        %v996 = vld [vmem:[#allocation2 + $0x1f1] sm:$0xff]
        %v997 = vlaneseq
        %v998 = vshrl.u32 %v997, 7
        %v999 = vsub.s32 2, %v998
        %v1000 = vrot.slane %v794, %v999
        %v1001 = vmul.f32 %v965, %v1000
        %v1002 = vmul.f32 %v966, %v1000
        %v1003 = vmul.f32 %v967, %v1000
        %v1004 = vmul.f32 %v968, %v1000
        %v1005 = vmul.f32 %v969, %v1000
        %v1006 = vmul.f32 %v970, %v1000
        %v1007 = vmul.f32 %v971, %v1000
        %v1008 = vmul.f32 %v972, %v1000
        %v1009 = vmul.f32 %v973, %v1000
        %v1010 = vmul.f32 %v974, %v1000
        %v1011 = vmul.f32 %v975, %v1000
        %v1012 = vmul.f32 %v976, %v1000
        %v1013 = vmul.f32 %v977, %v1000
        %v1014 = vmul.f32 %v978, %v1000
        %v1015 = vmul.f32 %v979, %v1000
        %v1016 = vmul.f32 %v980, %v1000
        %v1017 = vmul.f32 %v981, %v1000
        %v1018 = vmul.f32 %v982, %v1000
        %v1019 = vmul.f32 %v983, %v1000
        %v1020 = vmul.f32 %v984, %v1000
        %v1021 = vmul.f32 %v985, %v1000
        %v1022 = vmul.f32 %v986, %v1000
        %v1023 = vmul.f32 %v987, %v1000
        %v1024 = vmul.f32 %v988, %v1000
        %v1025 = vmul.f32 %v989, %v1000
        %v1026 = vmul.f32 %v990, %v1000
        %v1027 = vmul.f32 %v991, %v1000
        %v1028 = vmul.f32 %v992, %v1000
        %v1029 = vmul.f32 %v993, %v1000
        %v1030 = vmul.f32 %v994, %v1000
        %v1031 = vmul.f32 %v995, %v1000
        %v1032 = vmul.f32 %v996, %v1000
        %v1033 = vadd.f32 %v933, %v1001
        %v1034 = vadd.f32 %v934, %v1002
        %v1035 = vadd.f32 %v935, %v1003
        %v1036 = vadd.f32 %v936, %v1004
        %v1037 = vadd.f32 %v937, %v1005
        %v1038 = vadd.f32 %v938, %v1006
        %v1039 = vadd.f32 %v939, %v1007
        %v1040 = vadd.f32 %v940, %v1008
        %v1041 = vadd.f32 %v941, %v1009
        %v1042 = vadd.f32 %v942, %v1010
        %v1043 = vadd.f32 %v943, %v1011
        %v1044 = vadd.f32 %v944, %v1012
        %v1045 = vadd.f32 %v945, %v1013
        %v1046 = vadd.f32 %v946, %v1014
        %v1047 = vadd.f32 %v947, %v1015
        %v1048 = vadd.f32 %v948, %v1016
        %v1049 = vadd.f32 %v949, %v1017
        %v1050 = vadd.f32 %v950, %v1018
        %v1051 = vadd.f32 %v951, %v1019
        %v1052 = vadd.f32 %v952, %v1020
        %v1053 = vadd.f32 %v953, %v1021
        %v1054 = vadd.f32 %v954, %v1022
        %v1055 = vadd.f32 %v955, %v1023
        %v1056 = vadd.f32 %v956, %v1024
        %v1057 = vadd.f32 %v957, %v1025
        %v1058 = vadd.f32 %v958, %v1026
        %v1059 = vadd.f32 %v959, %v1027
        %v1060 = vadd.f32 %v960, %v1028
        %v1061 = vadd.f32 %v961, %v1029
        %v1062 = vadd.f32 %v962, %v1030
        %v1063 = vadd.f32 %v963, %v1031
        %v1064 = vadd.f32 %v964, %v1032
        %v1065 = vld [vmem:[%s761 + $0x7] sm:$0xff]
        %v1066 = vld [vmem:[%s761 + $0xf] sm:$0xff]
        %v1067 = vld [vmem:[%s761 + $0x27] sm:$0xff]
        %v1068 = vld [vmem:[%s761 + $0x2f] sm:$0xff]
        %v1069 = vld [vmem:[%s761 + $0x47] sm:$0xff]
        %v1070 = vld [vmem:[%s761 + $0x4f] sm:$0xff]
        %v1071 = vld [vmem:[%s761 + $0x67] sm:$0xff]
        %v1072 = vld [vmem:[%s761 + $0x6f] sm:$0xff]
        %v1073 = vld [vmem:[%s761 + $0x87] sm:$0xff]
        %v1074 = vld [vmem:[%s761 + $0x8f] sm:$0xff]
        %v1075 = vld [vmem:[%s761 + $0xa7] sm:$0xff]
        %v1076 = vld [vmem:[%s761 + $0xaf] sm:$0xff]
        %v1077 = vld [vmem:[%s761 + $0xc7] sm:$0xff]
        %v1078 = vld [vmem:[%s761 + $0xcf] sm:$0xff]
        %v1079 = vld [vmem:[%s761 + $0xe7] sm:$0xff]
        %v1080 = vld [vmem:[%s761 + $0xef] sm:$0xff]
        %v1081 = vld [vmem:[%s761 + $0x107] sm:$0xff]
        %v1082 = vld [vmem:[%s761 + $0x10f] sm:$0xff]
        %v1083 = vld [vmem:[%s761 + $0x127] sm:$0xff]
        %v1084 = vld [vmem:[%s761 + $0x12f] sm:$0xff]
        %v1085 = vld [vmem:[%s761 + $0x147] sm:$0xff]
        %v1086 = vld [vmem:[%s761 + $0x14f] sm:$0xff]
        %v1087 = vld [vmem:[%s761 + $0x167] sm:$0xff]
        %v1088 = vld [vmem:[%s761 + $0x16f] sm:$0xff]
        %v1089 = vld [vmem:[%s761 + $0x187] sm:$0xff]
        %v1090 = vld [vmem:[%s761 + $0x18f] sm:$0xff]
        %v1091 = vld [vmem:[%s761 + $0x1a7] sm:$0xff]
        %v1092 = vld [vmem:[%s761 + $0x1af] sm:$0xff]
        %v1093 = vld [vmem:[%s761 + $0x1c7] sm:$0xff]
        %v1094 = vld [vmem:[%s761 + $0x1cf] sm:$0xff]
        %v1095 = vld [vmem:[%s761 + $0x1e7] sm:$0xff]
        %v1096 = vld [vmem:[%s761 + $0x1ef] sm:$0xff]
        %v1097 = vlaneseq
        %v1098 = vshrl.u32 %v1097, 7
        %v1099 = vsub.s32 0, %v1098
        %v1100 = vrot.slane %v795, %v1099
        %v1101 = vmul.f32 %v1065, %v1100
        %v1102 = vmul.f32 %v1066, %v1100
        %v1103 = vmul.f32 %v1067, %v1100
        %v1104 = vmul.f32 %v1068, %v1100
        %v1105 = vmul.f32 %v1069, %v1100
        %v1106 = vmul.f32 %v1070, %v1100
        %v1107 = vmul.f32 %v1071, %v1100
        %v1108 = vmul.f32 %v1072, %v1100
        %v1109 = vmul.f32 %v1073, %v1100
        %v1110 = vmul.f32 %v1074, %v1100
        %v1111 = vmul.f32 %v1075, %v1100
        %v1112 = vmul.f32 %v1076, %v1100
        %v1113 = vmul.f32 %v1077, %v1100
        %v1114 = vmul.f32 %v1078, %v1100
        %v1115 = vmul.f32 %v1079, %v1100
        %v1116 = vmul.f32 %v1080, %v1100
        %v1117 = vmul.f32 %v1081, %v1100
        %v1118 = vmul.f32 %v1082, %v1100
        %v1119 = vmul.f32 %v1083, %v1100
        %v1120 = vmul.f32 %v1084, %v1100
        %v1121 = vmul.f32 %v1085, %v1100
        %v1122 = vmul.f32 %v1086, %v1100
        %v1123 = vmul.f32 %v1087, %v1100
        %v1124 = vmul.f32 %v1088, %v1100
        %v1125 = vmul.f32 %v1089, %v1100
        %v1126 = vmul.f32 %v1090, %v1100
        %v1127 = vmul.f32 %v1091, %v1100
        %v1128 = vmul.f32 %v1092, %v1100
        %v1129 = vmul.f32 %v1093, %v1100
        %v1130 = vmul.f32 %v1094, %v1100
        %v1131 = vmul.f32 %v1095, %v1100
        %v1132 = vmul.f32 %v1096, %v1100
        %v1133 = vadd.f32 %v1033, %v1101
        %v1134 = vadd.f32 %v1034, %v1102
        %v1135 = vadd.f32 %v1035, %v1103
        %v1136 = vadd.f32 %v1036, %v1104
        %v1137 = vadd.f32 %v1037, %v1105
        %v1138 = vadd.f32 %v1038, %v1106
        %v1139 = vadd.f32 %v1039, %v1107
        %v1140 = vadd.f32 %v1040, %v1108
        %v1141 = vadd.f32 %v1041, %v1109
        %v1142 = vadd.f32 %v1042, %v1110
        %v1143 = vadd.f32 %v1043, %v1111
        %v1144 = vadd.f32 %v1044, %v1112
        %v1145 = vadd.f32 %v1045, %v1113
        %v1146 = vadd.f32 %v1046, %v1114
        %v1147 = vadd.f32 %v1047, %v1115
        %v1148 = vadd.f32 %v1048, %v1116
        %v1149 = vadd.f32 %v1049, %v1117
        %v1150 = vadd.f32 %v1050, %v1118
        %v1151 = vadd.f32 %v1051, %v1119
        %v1152 = vadd.f32 %v1052, %v1120
        %v1153 = vadd.f32 %v1053, %v1121
        %v1154 = vadd.f32 %v1054, %v1122
        %v1155 = vadd.f32 %v1055, %v1123
        %v1156 = vadd.f32 %v1056, %v1124
        %v1157 = vadd.f32 %v1057, %v1125
        %v1158 = vadd.f32 %v1058, %v1126
        %v1159 = vadd.f32 %v1059, %v1127
        %v1160 = vadd.f32 %v1060, %v1128
        %v1161 = vadd.f32 %v1061, %v1129
        %v1162 = vadd.f32 %v1062, %v1130
        %v1163 = vadd.f32 %v1063, %v1131
        %v1164 = vadd.f32 %v1064, %v1132
        %v1165 = vld [vmem:[%s761 + $0x8] sm:$0xff]
        %v1166 = vld [vmem:[%s761 + $0x10] sm:$0xff]
        %v1167 = vld [vmem:[%s761 + $0x28] sm:$0xff]
        %v1168 = vld [vmem:[%s761 + $0x30] sm:$0xff]
        %v1169 = vld [vmem:[%s761 + $0x48] sm:$0xff]
        %v1170 = vld [vmem:[%s761 + $0x50] sm:$0xff]
        %v1171 = vld [vmem:[%s761 + $0x68] sm:$0xff]
        %v1172 = vld [vmem:[%s761 + $0x70] sm:$0xff]
        %v1173 = vld [vmem:[%s761 + $0x88] sm:$0xff]
        %v1174 = vld [vmem:[%s761 + $0x90] sm:$0xff]
        %v1175 = vld [vmem:[%s761 + $0xa8] sm:$0xff]
        %v1176 = vld [vmem:[%s761 + $0xb0] sm:$0xff]
        %v1177 = vld [vmem:[%s761 + $0xc8] sm:$0xff]
        %v1178 = vld [vmem:[%s761 + $0xd0] sm:$0xff]
        %v1179 = vld [vmem:[%s761 + $0xe8] sm:$0xff]
        %v1180 = vld [vmem:[%s761 + $0xf0] sm:$0xff]
        %v1181 = vld [vmem:[%s761 + $0x108] sm:$0xff]
        %v1182 = vld [vmem:[%s761 + $0x110] sm:$0xff]
        %v1183 = vld [vmem:[%s761 + $0x128] sm:$0xff]
        %v1184 = vld [vmem:[%s761 + $0x130] sm:$0xff]
        %v1185 = vld [vmem:[%s761 + $0x148] sm:$0xff]
        %v1186 = vld [vmem:[%s761 + $0x150] sm:$0xff]
        %v1187 = vld [vmem:[%s761 + $0x168] sm:$0xff]
        %v1188 = vld [vmem:[%s761 + $0x170] sm:$0xff]
        %v1189 = vld [vmem:[%s761 + $0x188] sm:$0xff]
        %v1190 = vld [vmem:[%s761 + $0x190] sm:$0xff]
        %v1191 = vld [vmem:[%s761 + $0x1a8] sm:$0xff]
        %v1192 = vld [vmem:[%s761 + $0x1b0] sm:$0xff]
        %v1193 = vld [vmem:[%s761 + $0x1c8] sm:$0xff]
        %v1194 = vld [vmem:[%s761 + $0x1d0] sm:$0xff]
        %v1195 = vld [vmem:[%s761 + $0x1e8] sm:$0xff]
        %v1196 = vld [vmem:[%s761 + $0x1f0] sm:$0xff]
        %v1197 = vlaneseq
        %v1198 = vshrl.u32 %v1197, 7
        %v1199 = vsub.s32 1, %v1198
        %v1200 = vrot.slane %v795, %v1199
        %v1201 = vmul.f32 %v1165, %v1200
        %v1202 = vmul.f32 %v1166, %v1200
        %v1203 = vmul.f32 %v1167, %v1200
        %v1204 = vmul.f32 %v1168, %v1200
        %v1205 = vmul.f32 %v1169, %v1200
        %v1206 = vmul.f32 %v1170, %v1200
        %v1207 = vmul.f32 %v1171, %v1200
        %v1208 = vmul.f32 %v1172, %v1200
        %v1209 = vmul.f32 %v1173, %v1200
        %v1210 = vmul.f32 %v1174, %v1200
        %v1211 = vmul.f32 %v1175, %v1200
        %v1212 = vmul.f32 %v1176, %v1200
        %v1213 = vmul.f32 %v1177, %v1200
        %v1214 = vmul.f32 %v1178, %v1200
        %v1215 = vmul.f32 %v1179, %v1200
        %v1216 = vmul.f32 %v1180, %v1200
        %v1217 = vmul.f32 %v1181, %v1200
        %v1218 = vmul.f32 %v1182, %v1200
        %v1219 = vmul.f32 %v1183, %v1200
        %v1220 = vmul.f32 %v1184, %v1200
        %v1221 = vmul.f32 %v1185, %v1200
        %v1222 = vmul.f32 %v1186, %v1200
        %v1223 = vmul.f32 %v1187, %v1200
        %v1224 = vmul.f32 %v1188, %v1200
        %v1225 = vmul.f32 %v1189, %v1200
        %v1226 = vmul.f32 %v1190, %v1200
        %v1227 = vmul.f32 %v1191, %v1200
        %v1228 = vmul.f32 %v1192, %v1200
        %v1229 = vmul.f32 %v1193, %v1200
        %v1230 = vmul.f32 %v1194, %v1200
        %v1231 = vmul.f32 %v1195, %v1200
        %v1232 = vmul.f32 %v1196, %v1200
        %v1233 = vadd.f32 %v1133, %v1201
        %v1234 = vadd.f32 %v1134, %v1202
        %v1235 = vadd.f32 %v1135, %v1203
        %v1236 = vadd.f32 %v1136, %v1204
        %v1237 = vadd.f32 %v1137, %v1205
        %v1238 = vadd.f32 %v1138, %v1206
        %v1239 = vadd.f32 %v1139, %v1207
        %v1240 = vadd.f32 %v1140, %v1208
        %v1241 = vadd.f32 %v1141, %v1209
        %v1242 = vadd.f32 %v1142, %v1210
        %v1243 = vadd.f32 %v1143, %v1211
        %v1244 = vadd.f32 %v1144, %v1212
        %v1245 = vadd.f32 %v1145, %v1213
        %v1246 = vadd.f32 %v1146, %v1214
        %v1247 = vadd.f32 %v1147, %v1215
        %v1248 = vadd.f32 %v1148, %v1216
        %v1249 = vadd.f32 %v1149, %v1217
        %v1250 = vadd.f32 %v1150, %v1218
        %v1251 = vadd.f32 %v1151, %v1219
        %v1252 = vadd.f32 %v1152, %v1220
        %v1253 = vadd.f32 %v1153, %v1221
        %v1254 = vadd.f32 %v1154, %v1222
        %v1255 = vadd.f32 %v1155, %v1223
        %v1256 = vadd.f32 %v1156, %v1224
        %v1257 = vadd.f32 %v1157, %v1225
        %v1258 = vadd.f32 %v1158, %v1226
        %v1259 = vadd.f32 %v1159, %v1227
        %v1260 = vadd.f32 %v1160, %v1228
        %v1261 = vadd.f32 %v1161, %v1229
        %v1262 = vadd.f32 %v1162, %v1230
        %v1263 = vadd.f32 %v1163, %v1231
        %v1264 = vadd.f32 %v1164, %v1232
        %v1265 = vld [vmem:[%s761 + $0x9] sm:$0xff]
        %v1266 = vld [vmem:[%s761 + $0x11] sm:$0xff]
        %v1267 = vld [vmem:[%s761 + $0x29] sm:$0xff]
        %v1268 = vld [vmem:[%s761 + $0x31] sm:$0xff]
        %v1269 = vld [vmem:[%s761 + $0x49] sm:$0xff]
        %v1270 = vld [vmem:[%s761 + $0x51] sm:$0xff]
        %v1271 = vld [vmem:[%s761 + $0x69] sm:$0xff]
        %v1272 = vld [vmem:[%s761 + $0x71] sm:$0xff]
        %v1273 = vld [vmem:[%s761 + $0x89] sm:$0xff]
        %v1274 = vld [vmem:[%s761 + $0x91] sm:$0xff]
        %v1275 = vld [vmem:[%s761 + $0xa9] sm:$0xff]
        %v1276 = vld [vmem:[%s761 + $0xb1] sm:$0xff]
        %v1277 = vld [vmem:[%s761 + $0xc9] sm:$0xff]
        %v1278 = vld [vmem:[%s761 + $0xd1] sm:$0xff]
        %v1279 = vld [vmem:[%s761 + $0xe9] sm:$0xff]
        %v1280 = vld [vmem:[%s761 + $0xf1] sm:$0xff]
        %v1281 = vld [vmem:[%s761 + $0x109] sm:$0xff]
        %v1282 = vld [vmem:[%s761 + $0x111] sm:$0xff]
        %v1283 = vld [vmem:[%s761 + $0x129] sm:$0xff]
        %v1284 = vld [vmem:[%s761 + $0x131] sm:$0xff]
        %v1285 = vld [vmem:[%s761 + $0x149] sm:$0xff]
        %v1286 = vld [vmem:[%s761 + $0x151] sm:$0xff]
        %v1287 = vld [vmem:[%s761 + $0x169] sm:$0xff]
        %v1288 = vld [vmem:[%s761 + $0x171] sm:$0xff]
        %v1289 = vld [vmem:[%s761 + $0x189] sm:$0xff]
        %v1290 = vld [vmem:[%s761 + $0x191] sm:$0xff]
        %v1291 = vld [vmem:[%s761 + $0x1a9] sm:$0xff]
        %v1292 = vld [vmem:[%s761 + $0x1b1] sm:$0xff]
        %v1293 = vld [vmem:[%s761 + $0x1c9] sm:$0xff]
        %v1294 = vld [vmem:[%s761 + $0x1d1] sm:$0xff]
        %v1295 = vld [vmem:[%s761 + $0x1e9] sm:$0xff]
        %v1296 = vld [vmem:[%s761 + $0x1f1] sm:$0xff]
        %v1297 = vlaneseq
        %v1298 = vshrl.u32 %v1297, 7
        %v1299 = vsub.s32 2, %v1298
        %v1300 = vrot.slane %v795, %v1299
        %v1301 = vmul.f32 %v1265, %v1300
        %v1302 = vmul.f32 %v1266, %v1300
        %v1303 = vmul.f32 %v1267, %v1300
        %v1304 = vmul.f32 %v1268, %v1300
        %v1305 = vmul.f32 %v1269, %v1300
        %v1306 = vmul.f32 %v1270, %v1300
        %v1307 = vmul.f32 %v1271, %v1300
        %v1308 = vmul.f32 %v1272, %v1300
        %v1309 = vmul.f32 %v1273, %v1300
        %v1310 = vmul.f32 %v1274, %v1300
        %v1311 = vmul.f32 %v1275, %v1300
        %v1312 = vmul.f32 %v1276, %v1300
        %v1313 = vmul.f32 %v1277, %v1300
        %v1314 = vmul.f32 %v1278, %v1300
        %v1315 = vmul.f32 %v1279, %v1300
        %v1316 = vmul.f32 %v1280, %v1300
        %v1317 = vmul.f32 %v1281, %v1300
        %v1318 = vmul.f32 %v1282, %v1300
        %v1319 = vmul.f32 %v1283, %v1300
        %v1320 = vmul.f32 %v1284, %v1300
        %v1321 = vmul.f32 %v1285, %v1300
        %v1322 = vmul.f32 %v1286, %v1300
        %v1323 = vmul.f32 %v1287, %v1300
        %v1324 = vmul.f32 %v1288, %v1300
        %v1325 = vmul.f32 %v1289, %v1300
        %v1326 = vmul.f32 %v1290, %v1300
        %v1327 = vmul.f32 %v1291, %v1300
        %v1328 = vmul.f32 %v1292, %v1300
        %v1329 = vmul.f32 %v1293, %v1300
        %v1330 = vmul.f32 %v1294, %v1300
        %v1331 = vmul.f32 %v1295, %v1300
        %v1332 = vmul.f32 %v1296, %v1300
        %v1333 = vadd.f32 %v1233, %v1301
        %v1334 = vadd.f32 %v1234, %v1302
        %v1335 = vadd.f32 %v1235, %v1303
        %v1336 = vadd.f32 %v1236, %v1304
        %v1337 = vadd.f32 %v1237, %v1305
        %v1338 = vadd.f32 %v1238, %v1306
        %v1339 = vadd.f32 %v1239, %v1307
        %v1340 = vadd.f32 %v1240, %v1308
        %v1341 = vadd.f32 %v1241, %v1309
        %v1342 = vadd.f32 %v1242, %v1310
        %v1343 = vadd.f32 %v1243, %v1311
        %v1344 = vadd.f32 %v1244, %v1312
        %v1345 = vadd.f32 %v1245, %v1313
        %v1346 = vadd.f32 %v1246, %v1314
        %v1347 = vadd.f32 %v1247, %v1315
        %v1348 = vadd.f32 %v1248, %v1316
        %v1349 = vadd.f32 %v1249, %v1317
        %v1350 = vadd.f32 %v1250, %v1318
        %v1351 = vadd.f32 %v1251, %v1319
        %v1352 = vadd.f32 %v1252, %v1320
        %v1353 = vadd.f32 %v1253, %v1321
        %v1354 = vadd.f32 %v1254, %v1322
        %v1355 = vadd.f32 %v1255, %v1323
        %v1356 = vadd.f32 %v1256, %v1324
        %v1357 = vadd.f32 %v1257, %v1325
        %v1358 = vadd.f32 %v1258, %v1326
        %v1359 = vadd.f32 %v1259, %v1327
        %v1360 = vadd.f32 %v1260, %v1328
        %v1361 = vadd.f32 %v1261, %v1329
        %v1362 = vadd.f32 %v1262, %v1330
        %v1363 = vadd.f32 %v1263, %v1331
        %v1364 = vadd.f32 %v1264, %v1332
        %s1365 = scalar_lea.vmem [#allocation2], 64
        %v1366 = vld [vmem:[%s1365 + $0x7] sm:$0xff]
        %v1367 = vld [vmem:[%s1365 + $0xf] sm:$0xff]
        %v1368 = vld [vmem:[%s1365 + $0x27] sm:$0xff]
        %v1369 = vld [vmem:[%s1365 + $0x2f] sm:$0xff]
        %v1370 = vld [vmem:[%s1365 + $0x47] sm:$0xff]
        %v1371 = vld [vmem:[%s1365 + $0x4f] sm:$0xff]
        %v1372 = vld [vmem:[%s1365 + $0x67] sm:$0xff]
        %v1373 = vld [vmem:[%s1365 + $0x6f] sm:$0xff]
        %v1374 = vld [vmem:[%s1365 + $0x87] sm:$0xff]
        %v1375 = vld [vmem:[%s1365 + $0x8f] sm:$0xff]
        %v1376 = vld [vmem:[%s1365 + $0xa7] sm:$0xff]
        %v1377 = vld [vmem:[%s1365 + $0xaf] sm:$0xff]
        %v1378 = vld [vmem:[%s1365 + $0xc7] sm:$0xff]
        %v1379 = vld [vmem:[%s1365 + $0xcf] sm:$0xff]
        %v1380 = vld [vmem:[%s1365 + $0xe7] sm:$0xff]
        %v1381 = vld [vmem:[%s1365 + $0xef] sm:$0xff]
        %v1382 = vld [vmem:[%s1365 + $0x107] sm:$0xff]
        %v1383 = vld [vmem:[%s1365 + $0x10f] sm:$0xff]
        %v1384 = vld [vmem:[%s1365 + $0x127] sm:$0xff]
        %v1385 = vld [vmem:[%s1365 + $0x12f] sm:$0xff]
        %v1386 = vld [vmem:[%s1365 + $0x147] sm:$0xff]
        %v1387 = vld [vmem:[%s1365 + $0x14f] sm:$0xff]
        %v1388 = vld [vmem:[%s1365 + $0x167] sm:$0xff]
        %v1389 = vld [vmem:[%s1365 + $0x16f] sm:$0xff]
        %v1390 = vld [vmem:[%s1365 + $0x187] sm:$0xff]
        %v1391 = vld [vmem:[%s1365 + $0x18f] sm:$0xff]
        %v1392 = vld [vmem:[%s1365 + $0x1a7] sm:$0xff]
        %v1393 = vld [vmem:[%s1365 + $0x1af] sm:$0xff]
        %v1394 = vld [vmem:[%s1365 + $0x1c7] sm:$0xff]
        %v1395 = vld [vmem:[%s1365 + $0x1cf] sm:$0xff]
        %v1396 = vld [vmem:[%s1365 + $0x1e7] sm:$0xff]
        %v1397 = vld [vmem:[%s1365 + $0x1ef] sm:$0xff]
        %v1398 = vlaneseq
        %v1399 = vshrl.u32 %v1398, 7
        %v1400 = vsub.s32 0, %v1399
        %v1401 = vrot.slane %v796, %v1400
        %v1402 = vmul.f32 %v1366, %v1401
        %v1403 = vmul.f32 %v1367, %v1401
        %v1404 = vmul.f32 %v1368, %v1401
        %v1405 = vmul.f32 %v1369, %v1401
        %v1406 = vmul.f32 %v1370, %v1401
        %v1407 = vmul.f32 %v1371, %v1401
        %v1408 = vmul.f32 %v1372, %v1401
        %v1409 = vmul.f32 %v1373, %v1401
        %v1410 = vmul.f32 %v1374, %v1401
        %v1411 = vmul.f32 %v1375, %v1401
        %v1412 = vmul.f32 %v1376, %v1401
        %v1413 = vmul.f32 %v1377, %v1401
        %v1414 = vmul.f32 %v1378, %v1401
        %v1415 = vmul.f32 %v1379, %v1401
        %v1416 = vmul.f32 %v1380, %v1401
        %v1417 = vmul.f32 %v1381, %v1401
        %v1418 = vmul.f32 %v1382, %v1401
        %v1419 = vmul.f32 %v1383, %v1401
        %v1420 = vmul.f32 %v1384, %v1401
        %v1421 = vmul.f32 %v1385, %v1401
        %v1422 = vmul.f32 %v1386, %v1401
        %v1423 = vmul.f32 %v1387, %v1401
        %v1424 = vmul.f32 %v1388, %v1401
        %v1425 = vmul.f32 %v1389, %v1401
        %v1426 = vmul.f32 %v1390, %v1401
        %v1427 = vmul.f32 %v1391, %v1401
        %v1428 = vmul.f32 %v1392, %v1401
        %v1429 = vmul.f32 %v1393, %v1401
        %v1430 = vmul.f32 %v1394, %v1401
        %v1431 = vmul.f32 %v1395, %v1401
        %v1432 = vmul.f32 %v1396, %v1401
        %v1433 = vmul.f32 %v1397, %v1401
        %v1434 = vadd.f32 %v1333, %v1402
        %v1435 = vadd.f32 %v1334, %v1403
        %v1436 = vadd.f32 %v1335, %v1404
        %v1437 = vadd.f32 %v1336, %v1405
        %v1438 = vadd.f32 %v1337, %v1406
        %v1439 = vadd.f32 %v1338, %v1407
        %v1440 = vadd.f32 %v1339, %v1408
        %v1441 = vadd.f32 %v1340, %v1409
        %v1442 = vadd.f32 %v1341, %v1410
        %v1443 = vadd.f32 %v1342, %v1411
        %v1444 = vadd.f32 %v1343, %v1412
        %v1445 = vadd.f32 %v1344, %v1413
        %v1446 = vadd.f32 %v1345, %v1414
        %v1447 = vadd.f32 %v1346, %v1415
        %v1448 = vadd.f32 %v1347, %v1416
        %v1449 = vadd.f32 %v1348, %v1417
        %v1450 = vadd.f32 %v1349, %v1418
        %v1451 = vadd.f32 %v1350, %v1419
        %v1452 = vadd.f32 %v1351, %v1420
        %v1453 = vadd.f32 %v1352, %v1421
        %v1454 = vadd.f32 %v1353, %v1422
        %v1455 = vadd.f32 %v1354, %v1423
        %v1456 = vadd.f32 %v1355, %v1424
        %v1457 = vadd.f32 %v1356, %v1425
        %v1458 = vadd.f32 %v1357, %v1426
        %v1459 = vadd.f32 %v1358, %v1427
        %v1460 = vadd.f32 %v1359, %v1428
        %v1461 = vadd.f32 %v1360, %v1429
        %v1462 = vadd.f32 %v1361, %v1430
        %v1463 = vadd.f32 %v1362, %v1431
        %v1464 = vadd.f32 %v1363, %v1432
        %v1465 = vadd.f32 %v1364, %v1433
        %v1466 = vld [vmem:[%s1365 + $0x8] sm:$0xff]
        %v1467 = vld [vmem:[%s1365 + $0x10] sm:$0xff]
        %v1468 = vld [vmem:[%s1365 + $0x28] sm:$0xff]
        %v1469 = vld [vmem:[%s1365 + $0x30] sm:$0xff]
        %v1470 = vld [vmem:[%s1365 + $0x48] sm:$0xff]
        %v1471 = vld [vmem:[%s1365 + $0x50] sm:$0xff]
        %v1472 = vld [vmem:[%s1365 + $0x68] sm:$0xff]
        %v1473 = vld [vmem:[%s1365 + $0x70] sm:$0xff]
        %v1474 = vld [vmem:[%s1365 + $0x88] sm:$0xff]
        %v1475 = vld [vmem:[%s1365 + $0x90] sm:$0xff]
        %v1476 = vld [vmem:[%s1365 + $0xa8] sm:$0xff]
        %v1477 = vld [vmem:[%s1365 + $0xb0] sm:$0xff]
        %v1478 = vld [vmem:[%s1365 + $0xc8] sm:$0xff]
        %v1479 = vld [vmem:[%s1365 + $0xd0] sm:$0xff]
        %v1480 = vld [vmem:[%s1365 + $0xe8] sm:$0xff]
        %v1481 = vld [vmem:[%s1365 + $0xf0] sm:$0xff]
        %v1482 = vld [vmem:[%s1365 + $0x108] sm:$0xff]
        %v1483 = vld [vmem:[%s1365 + $0x110] sm:$0xff]
        %v1484 = vld [vmem:[%s1365 + $0x128] sm:$0xff]
        %v1485 = vld [vmem:[%s1365 + $0x130] sm:$0xff]
        %v1486 = vld [vmem:[%s1365 + $0x148] sm:$0xff]
        %v1487 = vld [vmem:[%s1365 + $0x150] sm:$0xff]
        %v1488 = vld [vmem:[%s1365 + $0x168] sm:$0xff]
        %v1489 = vld [vmem:[%s1365 + $0x170] sm:$0xff]
        %v1490 = vld [vmem:[%s1365 + $0x188] sm:$0xff]
        %v1491 = vld [vmem:[%s1365 + $0x190] sm:$0xff]
        %v1492 = vld [vmem:[%s1365 + $0x1a8] sm:$0xff]
        %v1493 = vld [vmem:[%s1365 + $0x1b0] sm:$0xff]
        %v1494 = vld [vmem:[%s1365 + $0x1c8] sm:$0xff]
        %v1495 = vld [vmem:[%s1365 + $0x1d0] sm:$0xff]
        %v1496 = vld [vmem:[%s1365 + $0x1e8] sm:$0xff]
        %v1497 = vld [vmem:[%s1365 + $0x1f0] sm:$0xff]
        %v1498 = vlaneseq
        %v1499 = vshrl.u32 %v1498, 7
        %v1500 = vsub.s32 1, %v1499
        %v1501 = vrot.slane %v796, %v1500
        %v1502 = vmul.f32 %v1466, %v1501
        %v1503 = vmul.f32 %v1467, %v1501
        %v1504 = vmul.f32 %v1468, %v1501
        %v1505 = vmul.f32 %v1469, %v1501
        %v1506 = vmul.f32 %v1470, %v1501
        %v1507 = vmul.f32 %v1471, %v1501
        %v1508 = vmul.f32 %v1472, %v1501
        %v1509 = vmul.f32 %v1473, %v1501
        %v1510 = vmul.f32 %v1474, %v1501
        %v1511 = vmul.f32 %v1475, %v1501
        %v1512 = vmul.f32 %v1476, %v1501
        %v1513 = vmul.f32 %v1477, %v1501
        %v1514 = vmul.f32 %v1478, %v1501
        %v1515 = vmul.f32 %v1479, %v1501
        %v1516 = vmul.f32 %v1480, %v1501
        %v1517 = vmul.f32 %v1481, %v1501
        %v1518 = vmul.f32 %v1482, %v1501
        %v1519 = vmul.f32 %v1483, %v1501
        %v1520 = vmul.f32 %v1484, %v1501
        %v1521 = vmul.f32 %v1485, %v1501
        %v1522 = vmul.f32 %v1486, %v1501
        %v1523 = vmul.f32 %v1487, %v1501
        %v1524 = vmul.f32 %v1488, %v1501
        %v1525 = vmul.f32 %v1489, %v1501
        %v1526 = vmul.f32 %v1490, %v1501
        %v1527 = vmul.f32 %v1491, %v1501
        %v1528 = vmul.f32 %v1492, %v1501
        %v1529 = vmul.f32 %v1493, %v1501
        %v1530 = vmul.f32 %v1494, %v1501
        %v1531 = vmul.f32 %v1495, %v1501
        %v1532 = vmul.f32 %v1496, %v1501
        %v1533 = vmul.f32 %v1497, %v1501
        %v1534 = vadd.f32 %v1434, %v1502
        %v1535 = vadd.f32 %v1435, %v1503
        %v1536 = vadd.f32 %v1436, %v1504
        %v1537 = vadd.f32 %v1437, %v1505
        %v1538 = vadd.f32 %v1438, %v1506
        %v1539 = vadd.f32 %v1439, %v1507
        %v1540 = vadd.f32 %v1440, %v1508
        %v1541 = vadd.f32 %v1441, %v1509
        %v1542 = vadd.f32 %v1442, %v1510
        %v1543 = vadd.f32 %v1443, %v1511
        %v1544 = vadd.f32 %v1444, %v1512
        %v1545 = vadd.f32 %v1445, %v1513
        %v1546 = vadd.f32 %v1446, %v1514
        %v1547 = vadd.f32 %v1447, %v1515
        %v1548 = vadd.f32 %v1448, %v1516
        %v1549 = vadd.f32 %v1449, %v1517
        %v1550 = vadd.f32 %v1450, %v1518
        %v1551 = vadd.f32 %v1451, %v1519
        %v1552 = vadd.f32 %v1452, %v1520
        %v1553 = vadd.f32 %v1453, %v1521
        %v1554 = vadd.f32 %v1454, %v1522
        %v1555 = vadd.f32 %v1455, %v1523
        %v1556 = vadd.f32 %v1456, %v1524
        %v1557 = vadd.f32 %v1457, %v1525
        %v1558 = vadd.f32 %v1458, %v1526
        %v1559 = vadd.f32 %v1459, %v1527
        %v1560 = vadd.f32 %v1460, %v1528
        %v1561 = vadd.f32 %v1461, %v1529
        %v1562 = vadd.f32 %v1462, %v1530
        %v1563 = vadd.f32 %v1463, %v1531
        %v1564 = vadd.f32 %v1464, %v1532
        %v1565 = vadd.f32 %v1465, %v1533
        %v1566 = vld [vmem:[%s1365 + $0x9] sm:$0xff]
        %v1567 = vld [vmem:[%s1365 + $0x11] sm:$0xff]
        %v1568 = vld [vmem:[%s1365 + $0x29] sm:$0xff]
        %v1569 = vld [vmem:[%s1365 + $0x31] sm:$0xff]
        %v1570 = vld [vmem:[%s1365 + $0x49] sm:$0xff]
        %v1571 = vld [vmem:[%s1365 + $0x51] sm:$0xff]
        %v1572 = vld [vmem:[%s1365 + $0x69] sm:$0xff]
        %v1573 = vld [vmem:[%s1365 + $0x71] sm:$0xff]
        %v1574 = vld [vmem:[%s1365 + $0x89] sm:$0xff]
        %v1575 = vld [vmem:[%s1365 + $0x91] sm:$0xff]
        %v1576 = vld [vmem:[%s1365 + $0xa9] sm:$0xff]
        %v1577 = vld [vmem:[%s1365 + $0xb1] sm:$0xff]
        %v1578 = vld [vmem:[%s1365 + $0xc9] sm:$0xff]
        %v1579 = vld [vmem:[%s1365 + $0xd1] sm:$0xff]
        %v1580 = vld [vmem:[%s1365 + $0xe9] sm:$0xff]
        %v1581 = vld [vmem:[%s1365 + $0xf1] sm:$0xff]
        %v1582 = vld [vmem:[%s1365 + $0x109] sm:$0xff]
        %v1583 = vld [vmem:[%s1365 + $0x111] sm:$0xff]
        %v1584 = vld [vmem:[%s1365 + $0x129] sm:$0xff]
        %v1585 = vld [vmem:[%s1365 + $0x131] sm:$0xff]
        %v1586 = vld [vmem:[%s1365 + $0x149] sm:$0xff]
        %v1587 = vld [vmem:[%s1365 + $0x151] sm:$0xff]
        %v1588 = vld [vmem:[%s1365 + $0x169] sm:$0xff]
        %v1589 = vld [vmem:[%s1365 + $0x171] sm:$0xff]
        %v1590 = vld [vmem:[%s1365 + $0x189] sm:$0xff]
        %v1591 = vld [vmem:[%s1365 + $0x191] sm:$0xff]
        %v1592 = vld [vmem:[%s1365 + $0x1a9] sm:$0xff]
        %v1593 = vld [vmem:[%s1365 + $0x1b1] sm:$0xff]
        %v1594 = vld [vmem:[%s1365 + $0x1c9] sm:$0xff]
        %v1595 = vld [vmem:[%s1365 + $0x1d1] sm:$0xff]
        %v1596 = vld [vmem:[%s1365 + $0x1e9] sm:$0xff]
        %v1597 = vld [vmem:[%s1365 + $0x1f1] sm:$0xff]
        %v1598 = vlaneseq
        %v1599 = vshrl.u32 %v1598, 7
        %v1600 = vsub.s32 2, %v1599
        %v1601 = vrot.slane %v796, %v1600
        %v1602 = vmul.f32 %v1566, %v1601
        %v1603 = vmul.f32 %v1567, %v1601
        %v1604 = vmul.f32 %v1568, %v1601
        %v1605 = vmul.f32 %v1569, %v1601
        %v1606 = vmul.f32 %v1570, %v1601
        %v1607 = vmul.f32 %v1571, %v1601
        %v1608 = vmul.f32 %v1572, %v1601
        %v1609 = vmul.f32 %v1573, %v1601
        %v1610 = vmul.f32 %v1574, %v1601
        %v1611 = vmul.f32 %v1575, %v1601
        %v1612 = vmul.f32 %v1576, %v1601
        %v1613 = vmul.f32 %v1577, %v1601
        %v1614 = vmul.f32 %v1578, %v1601
        %v1615 = vmul.f32 %v1579, %v1601
        %v1616 = vmul.f32 %v1580, %v1601
        %v1617 = vmul.f32 %v1581, %v1601
        %v1618 = vmul.f32 %v1582, %v1601
        %v1619 = vmul.f32 %v1583, %v1601
        %v1620 = vmul.f32 %v1584, %v1601
        %v1621 = vmul.f32 %v1585, %v1601
        %v1622 = vmul.f32 %v1586, %v1601
        %v1623 = vmul.f32 %v1587, %v1601
        %v1624 = vmul.f32 %v1588, %v1601
        %v1625 = vmul.f32 %v1589, %v1601
        %v1626 = vmul.f32 %v1590, %v1601
        %v1627 = vmul.f32 %v1591, %v1601
        %v1628 = vmul.f32 %v1592, %v1601
        %v1629 = vmul.f32 %v1593, %v1601
        %v1630 = vmul.f32 %v1594, %v1601
        %v1631 = vmul.f32 %v1595, %v1601
        %v1632 = vmul.f32 %v1596, %v1601
        %v1633 = vmul.f32 %v1597, %v1601
        %v1634 = vadd.f32 %v1534, %v1602
        %v1635 = vadd.f32 %v1535, %v1603
        %v1636 = vadd.f32 %v1536, %v1604
        %v1637 = vadd.f32 %v1537, %v1605
        %v1638 = vadd.f32 %v1538, %v1606
        %v1639 = vadd.f32 %v1539, %v1607
        %v1640 = vadd.f32 %v1540, %v1608
        %v1641 = vadd.f32 %v1541, %v1609
        %v1642 = vadd.f32 %v1542, %v1610
        %v1643 = vadd.f32 %v1543, %v1611
        %v1644 = vadd.f32 %v1544, %v1612
        %v1645 = vadd.f32 %v1545, %v1613
        %v1646 = vadd.f32 %v1546, %v1614
        %v1647 = vadd.f32 %v1547, %v1615
        %v1648 = vadd.f32 %v1548, %v1616
        %v1649 = vadd.f32 %v1549, %v1617
        %v1650 = vadd.f32 %v1550, %v1618
        %v1651 = vadd.f32 %v1551, %v1619
        %v1652 = vadd.f32 %v1552, %v1620
        %v1653 = vadd.f32 %v1553, %v1621
        %v1654 = vadd.f32 %v1554, %v1622
        %v1655 = vadd.f32 %v1555, %v1623
        %v1656 = vadd.f32 %v1556, %v1624
        %v1657 = vadd.f32 %v1557, %v1625
        %v1658 = vadd.f32 %v1558, %v1626
        %v1659 = vadd.f32 %v1559, %v1627
        %v1660 = vadd.f32 %v1560, %v1628
        %v1661 = vadd.f32 %v1561, %v1629
        %v1662 = vadd.f32 %v1562, %v1630
        %v1663 = vadd.f32 %v1563, %v1631
        %v1664 = vadd.f32 %v1564, %v1632
        %v1665 = vadd.f32 %v1565, %v1633
        %v1666 = vld [vmem:[#allocation8] sm:$0xff]
        %v1667 = vld [vmem:[#allocation8 + $0x8] sm:$0xff]
        %v1668 = vld [vmem:[#allocation8 + $0x10] sm:$0xff]
        %v1669 = vld [vmem:[#allocation8 + $0x18] sm:$0xff]
        %v1670 = vld [vmem:[#allocation8 + $0x20] sm:$0xff]
        %v1671 = vld [vmem:[#allocation8 + $0x28] sm:$0xff]
        %v1672 = vld [vmem:[#allocation8 + $0x30] sm:$0xff]
        %v1673 = vld [vmem:[#allocation8 + $0x38] sm:$0xff]
        %v1674 = vld [vmem:[#allocation8 + $0x40] sm:$0xff]
        %v1675 = vld [vmem:[#allocation8 + $0x48] sm:$0xff]
        %v1676 = vld [vmem:[#allocation8 + $0x50] sm:$0xff]
        %v1677 = vld [vmem:[#allocation8 + $0x58] sm:$0xff]
        %v1678 = vld [vmem:[#allocation8 + $0x60] sm:$0xff]
        %v1679 = vld [vmem:[#allocation8 + $0x68] sm:$0xff]
        %v1680 = vld [vmem:[#allocation8 + $0x70] sm:$0xff]
        %v1681 = vld [vmem:[#allocation8 + $0x78] sm:$0xff]
        %1682 = vmatprep.subr.mxu0 0.0
        %1683 = vmatpush1.msra.mxu0 %v1666
        %1684 = vmatprep.subr.mxu0 0.0
        %1685 = vmatpush1.msra.mxu0 %v1667
        %1686 = vmatprep.subr.mxu0 0.0
        %1687 = vmatpush1.msra.mxu0 %v1668
        %1688 = vmatprep.subr.mxu0 0.0
        %1689 = vmatpush1.msra.mxu0 %v1669
        %1690 = vmatprep.subr.mxu0 0.0
        %1691 = vmatpush1.msra.mxu0 %v1670
        %1692 = vmatprep.subr.mxu0 0.0
        %1693 = vmatpush1.msra.mxu0 %v1671
        %1694 = vmatprep.subr.mxu0 0.0
        %1695 = vmatpush1.msra.mxu0 %v1672
        %1696 = vmatprep.subr.mxu0 0.0
        %1697 = vmatpush1.msra.mxu0 %v1673
        %1698 = vmatprep.subr.mxu0 0.0
        %1699 = vmatpush1.msra.mxu0 %v1674
        %1700 = vmatprep.subr.mxu0 0.0
        %1701 = vmatpush1.msra.mxu0 %v1675
        %1702 = vmatprep.subr.mxu0 0.0
        %1703 = vmatpush1.msra.mxu0 %v1676
        %1704 = vmatprep.subr.mxu0 0.0
        %1705 = vmatpush1.msra.mxu0 %v1677
        %1706 = vmatprep.subr.mxu0 0.0
        %1707 = vmatpush1.msra.mxu0 %v1678
        %1708 = vmatprep.subr.mxu0 0.0
        %1709 = vmatpush1.msra.mxu0 %v1679
        %1710 = vmatprep.subr.mxu0 0.0
        %1711 = vmatpush1.msra.mxu0 %v1680
        %1712 = vmatprep.subr.mxu0 0.0
        %1713 = vmatpush1.msra.mxu0 %v1681
        %1714 = vmatprep.subr.mxu0 0.0
        %1715 = vmatpush1.msra.mxu0 0.0
        %1716 = vmatprep.subr.mxu0 0.0
        %1717 = vmatpush1.msra.mxu0 0.0
        %1718 = vmatprep.subr.mxu0 0.0
        %1719 = vmatpush1.msra.mxu0 0.0
        %1720 = vmatprep.subr.mxu0 0.0
        %1721 = vmatpush1.msra.mxu0 0.0
        %1722 = vmatprep.subr.mxu0 0.0
        %1723 = vmatpush1.msra.mxu0 0.0
        %1724 = vmatprep.subr.mxu0 0.0
        %1725 = vmatpush1.msra.mxu0 0.0
        %1726 = vmatprep.subr.mxu0 0.0
        %1727 = vmatpush1.msra.mxu0 0.0
        %1728 = vmatprep.subr.mxu0 0.0
        %1729 = vmatpush1.msra.mxu0 0.0
        %1730 = vmatprep.subr.mxu0 0.0
        %1731 = vmatpush1.msra.mxu0 0.0
        %1732 = vmatprep.subr.mxu0 0.0
        %1733 = vmatpush1.msra.mxu0 0.0
        %1734 = vmatprep.subr.mxu0 0.0
        %1735 = vmatpush1.msra.mxu0 0.0
        %1736 = vmatprep.subr.mxu0 0.0
        %1737 = vmatpush1.msra.mxu0 0.0
        %1738 = vmatprep.subr.mxu0 0.0
        %1739 = vmatpush1.msra.mxu0 0.0
        %1740 = vmatprep.subr.mxu0 0.0
        %1741 = vmatpush1.msra.mxu0 0.0
        %1742 = vmatprep.subr.mxu0 0.0
        %1743 = vmatpush1.msra.mxu0 0.0
        %1744 = vmatprep.subr.mxu0 0.0
        %1745 = vmatpush1.msra.mxu0 0.0
        %1746 = vmatprep.mubr.f32.mxu0 0.0
        %1747 = vmatmul.mubr.f32.gmra.mrb[0].mxu0 %v1634
        %v1748 = vpop.f32.mrb[0].mxu0
        %v1749 = vadd.f32 0.0, %v1748
        %v1750 = vpop.f32.mrb[0].mxu0
        %1751 = vmatprep.mubr.f32.mxu0 0.0
        %1752 = vmatmul.mubr.f32.gmra.mrb[0].mxu0 %v1635
        %v1753 = vpop.f32.mrb[0].mxu0
        %v1754 = vadd.f32 0.0, %v1753
        %v1755 = vpop.f32.mrb[0].mxu0
        %1756 = vmatprep.mubr.f32.mxu0 0.0
        %1757 = vmatmul.mubr.f32.gmra.mrb[0].mxu0 %v1636
        %v1758 = vpop.f32.mrb[0].mxu0
        %v1759 = vadd.f32 0.0, %v1758
        %v1760 = vpop.f32.mrb[0].mxu0
        %1761 = vmatprep.mubr.f32.mxu0 0.0
        %1762 = vmatmul.mubr.f32.gmra.mrb[0].mxu0 %v1637
        %v1763 = vpop.f32.mrb[0].mxu0
        %v1764 = vadd.f32 0.0, %v1763
        %v1765 = vpop.f32.mrb[0].mxu0
        %1766 = vmatprep.mubr.f32.mxu0 0.0
        %1767 = vmatmul.mubr.f32.gmra.mrb[0].mxu0 %v1638
        %v1768 = vpop.f32.mrb[0].mxu0
        %v1769 = vadd.f32 0.0, %v1768
        %v1770 = vpop.f32.mrb[0].mxu0
        %1771 = vmatprep.mubr.f32.mxu0 0.0
        %1772 = vmatmul.mubr.f32.gmra.mrb[0].mxu0 %v1639
        %v1773 = vpop.f32.mrb[0].mxu0
        %v1774 = vadd.f32 0.0, %v1773
        %v1775 = vpop.f32.mrb[0].mxu0
        %1776 = vmatprep.mubr.f32.mxu0 0.0
        %1777 = vmatmul.mubr.f32.gmra.mrb[0].mxu0 %v1640
        %v1778 = vpop.f32.mrb[0].mxu0
        %v1779 = vadd.f32 0.0, %v1778
        %v1780 = vpop.f32.mrb[0].mxu0
        %1781 = vmatprep.mubr.f32.mxu0 0.0
        %1782 = vmatmul.mubr.f32.gmra.mrb[0].mxu0 %v1641
        %v1783 = vpop.f32.mrb[0].mxu0
        %v1784 = vadd.f32 0.0, %v1783
        %v1785 = vpop.f32.mrb[0].mxu0
        %1786 = vmatprep.mubr.f32.mxu0 0.0
        %1787 = vmatmul.mubr.f32.gmra.mrb[0].mxu0 %v1642
        %v1788 = vpop.f32.mrb[0].mxu0
        %v1789 = vadd.f32 0.0, %v1788
        %v1790 = vpop.f32.mrb[0].mxu0
        %1791 = vmatprep.mubr.f32.mxu0 0.0
        %1792 = vmatmul.mubr.f32.gmra.mrb[0].mxu0 %v1643
        %v1793 = vpop.f32.mrb[0].mxu0
        %v1794 = vadd.f32 0.0, %v1793
        %v1795 = vpop.f32.mrb[0].mxu0
        %1796 = vmatprep.mubr.f32.mxu0 0.0
        %1797 = vmatmul.mubr.f32.gmra.mrb[0].mxu0 %v1644
        %v1798 = vpop.f32.mrb[0].mxu0
        %v1799 = vadd.f32 0.0, %v1798
        %v1800 = vpop.f32.mrb[0].mxu0
        %1801 = vmatprep.mubr.f32.mxu0 0.0
        %1802 = vmatmul.mubr.f32.gmra.mrb[0].mxu0 %v1645
        %v1803 = vpop.f32.mrb[0].mxu0
        %v1804 = vadd.f32 0.0, %v1803
        %v1805 = vpop.f32.mrb[0].mxu0
        %1806 = vmatprep.mubr.f32.mxu0 0.0
        %1807 = vmatmul.mubr.f32.gmra.mrb[0].mxu0 %v1646
        %v1808 = vpop.f32.mrb[0].mxu0
        %v1809 = vadd.f32 0.0, %v1808
        %v1810 = vpop.f32.mrb[0].mxu0
        %1811 = vmatprep.mubr.f32.mxu0 0.0
        %1812 = vmatmul.mubr.f32.gmra.mrb[0].mxu0 %v1647
        %v1813 = vpop.f32.mrb[0].mxu0
        %v1814 = vadd.f32 0.0, %v1813
        %v1815 = vpop.f32.mrb[0].mxu0
        %1816 = vmatprep.mubr.f32.mxu0 0.0
        %1817 = vmatmul.mubr.f32.gmra.mrb[0].mxu0 %v1648
        %v1818 = vpop.f32.mrb[0].mxu0
        %v1819 = vadd.f32 0.0, %v1818
        %v1820 = vpop.f32.mrb[0].mxu0
        %1821 = vmatprep.mubr.f32.mxu0 0.0
        %1822 = vmatmul.mubr.f32.gmra.mrb[0].mxu0 %v1649
        %v1823 = vpop.f32.mrb[0].mxu0
        %v1824 = vadd.f32 0.0, %v1823
        %v1825 = vpop.f32.mrb[0].mxu0
        %1826 = vmatprep.mubr.f32.mxu0 0.0
        %1827 = vmatmul.mubr.f32.gmra.mrb[0].mxu0 %v1650
        %v1828 = vpop.f32.mrb[0].mxu0
        %v1829 = vadd.f32 0.0, %v1828
        %v1830 = vpop.f32.mrb[0].mxu0
        %1831 = vmatprep.mubr.f32.mxu0 0.0
        %1832 = vmatmul.mubr.f32.gmra.mrb[0].mxu0 %v1651
        %v1833 = vpop.f32.mrb[0].mxu0
        %v1834 = vadd.f32 0.0, %v1833
        %v1835 = vpop.f32.mrb[0].mxu0
        %1836 = vmatprep.mubr.f32.mxu0 0.0
        %1837 = vmatmul.mubr.f32.gmra.mrb[0].mxu0 %v1652
        %v1838 = vpop.f32.mrb[0].mxu0
        %v1839 = vadd.f32 0.0, %v1838
        %v1840 = vpop.f32.mrb[0].mxu0
        %1841 = vmatprep.mubr.f32.mxu0 0.0
        %1842 = vmatmul.mubr.f32.gmra.mrb[0].mxu0 %v1653
        %v1843 = vpop.f32.mrb[0].mxu0
        %v1844 = vadd.f32 0.0, %v1843
        %v1845 = vpop.f32.mrb[0].mxu0
        %1846 = vmatprep.mubr.f32.mxu0 0.0
        %1847 = vmatmul.mubr.f32.gmra.mrb[0].mxu0 %v1654
        %v1848 = vpop.f32.mrb[0].mxu0
        %v1849 = vadd.f32 0.0, %v1848
        %v1850 = vpop.f32.mrb[0].mxu0
        %1851 = vmatprep.mubr.f32.mxu0 0.0
        %1852 = vmatmul.mubr.f32.gmra.mrb[0].mxu0 %v1655
        %v1853 = vpop.f32.mrb[0].mxu0
        %v1854 = vadd.f32 0.0, %v1853
        %v1855 = vpop.f32.mrb[0].mxu0
        %1856 = vmatprep.mubr.f32.mxu0 0.0
        %1857 = vmatmul.mubr.f32.gmra.mrb[0].mxu0 %v1656
        %v1858 = vpop.f32.mrb[0].mxu0
        %v1859 = vadd.f32 0.0, %v1858
        %v1860 = vpop.f32.mrb[0].mxu0
        %1861 = vmatprep.mubr.f32.mxu0 0.0
        %1862 = vmatmul.mubr.f32.gmra.mrb[0].mxu0 %v1657
        %v1863 = vpop.f32.mrb[0].mxu0
        %v1864 = vadd.f32 0.0, %v1863
        %v1865 = vpop.f32.mrb[0].mxu0
        %1866 = vmatprep.mubr.f32.mxu0 0.0
        %1867 = vmatmul.mubr.f32.gmra.mrb[0].mxu0 %v1658
        %v1868 = vpop.f32.mrb[0].mxu0
        %v1869 = vadd.f32 0.0, %v1868
        %v1870 = vpop.f32.mrb[0].mxu0
        %1871 = vmatprep.mubr.f32.mxu0 0.0
        %1872 = vmatmul.mubr.f32.gmra.mrb[0].mxu0 %v1659
        %v1873 = vpop.f32.mrb[0].mxu0
        %v1874 = vadd.f32 0.0, %v1873
        %v1875 = vpop.f32.mrb[0].mxu0
        %1876 = vmatprep.mubr.f32.mxu0 0.0
        %1877 = vmatmul.mubr.f32.gmra.mrb[0].mxu0 %v1660
        %v1878 = vpop.f32.mrb[0].mxu0
        %v1879 = vadd.f32 0.0, %v1878
        %v1880 = vpop.f32.mrb[0].mxu0
        %1881 = vmatprep.mubr.f32.mxu0 0.0
        %1882 = vmatmul.mubr.f32.gmra.mrb[0].mxu0 %v1661
        %v1883 = vpop.f32.mrb[0].mxu0
        %v1884 = vadd.f32 0.0, %v1883
        %v1885 = vpop.f32.mrb[0].mxu0
        %1886 = vmatprep.mubr.f32.mxu0 0.0
        %1887 = vmatmul.mubr.f32.gmra.mrb[0].mxu0 %v1662
        %v1888 = vpop.f32.mrb[0].mxu0
        %v1889 = vadd.f32 0.0, %v1888
        %v1890 = vpop.f32.mrb[0].mxu0
        %1891 = vmatprep.mubr.f32.mxu0 0.0
        %1892 = vmatmul.mubr.f32.gmra.mrb[0].mxu0 %v1663
        %v1893 = vpop.f32.mrb[0].mxu0
        %v1894 = vadd.f32 0.0, %v1893
        %v1895 = vpop.f32.mrb[0].mxu0
        %1896 = vmatprep.mubr.f32.mxu0 0.0
        %1897 = vmatmul.mubr.f32.gmra.mrb[0].mxu0 %v1664
        %v1898 = vpop.f32.mrb[0].mxu0
        %v1899 = vadd.f32 0.0, %v1898
        %v1900 = vpop.f32.mrb[0].mxu0
        %1901 = vmatprep.mubr.f32.mxu0 0.0
        %1902 = vmatmul.mubr.f32.gmra.mrb[0].mxu0 %v1665
        %v1903 = vpop.f32.mrb[0].mxu0
        %v1904 = vadd.f32 0.0, %v1903
        %v1905 = vpop.f32.mrb[0].mxu0
        %1906 = vdwg.mxu0
        %v1907 = vld [vmem:[%s3] sm:$0x1]
        %v1909 = vlaneseq
        %v1910 = vshrl.u32 %v1909, 7
        %v1911 = vsub.s32 0, %v1910
        %v1912 = vrot.slane %v1907, %v1911
        %v1914 = vmul.f32 %v1749, %v1912
        %v1915 = vmul.f32 %v1754, %v1912
        %v1916 = vmul.f32 %v1759, %v1912
        %v1917 = vmul.f32 %v1764, %v1912
        %v1918 = vmul.f32 %v1769, %v1912
        %v1919 = vmul.f32 %v1774, %v1912
        %v1920 = vmul.f32 %v1779, %v1912
        %v1921 = vmul.f32 %v1784, %v1912
        %v1922 = vmul.f32 %v1789, %v1912
        %v1923 = vmul.f32 %v1794, %v1912
        %v1924 = vmul.f32 %v1799, %v1912
        %v1925 = vmul.f32 %v1804, %v1912
        %v1926 = vmul.f32 %v1809, %v1912
        %v1927 = vmul.f32 %v1814, %v1912
        %v1928 = vmul.f32 %v1819, %v1912
        %v1929 = vmul.f32 %v1824, %v1912
        %v1930 = vmul.f32 %v1829, %v1912
        %v1931 = vmul.f32 %v1834, %v1912
        %v1932 = vmul.f32 %v1839, %v1912
        %v1933 = vmul.f32 %v1844, %v1912
        %v1934 = vmul.f32 %v1849, %v1912
        %v1935 = vmul.f32 %v1854, %v1912
        %v1936 = vmul.f32 %v1859, %v1912
        %v1937 = vmul.f32 %v1864, %v1912
        %v1938 = vmul.f32 %v1869, %v1912
        %v1939 = vmul.f32 %v1874, %v1912
        %v1940 = vmul.f32 %v1879, %v1912
        %v1941 = vmul.f32 %v1884, %v1912
        %v1942 = vmul.f32 %v1889, %v1912
        %v1943 = vmul.f32 %v1894, %v1912
        %v1944 = vmul.f32 %v1899, %v1912
        %v1945 = vmul.f32 %v1904, %v1912
        %v1946 = vld [vmem:[%s4] sm:$0x1]
        %v1948 = vlaneseq
        %v1949 = vshrl.u32 %v1948, 7
        %v1950 = vsub.s32 0, %v1949
        %v1951 = vrot.slane %v1946, %v1950
        %v1953 = vadd.f32 %v1914, %v1951
        %v1954 = vadd.f32 %v1915, %v1951
        %v1955 = vadd.f32 %v1916, %v1951
        %v1956 = vadd.f32 %v1917, %v1951
        %v1957 = vadd.f32 %v1918, %v1951
        %v1958 = vadd.f32 %v1919, %v1951
        %v1959 = vadd.f32 %v1920, %v1951
        %v1960 = vadd.f32 %v1921, %v1951
        %v1961 = vadd.f32 %v1922, %v1951
        %v1962 = vadd.f32 %v1923, %v1951
        %v1963 = vadd.f32 %v1924, %v1951
        %v1964 = vadd.f32 %v1925, %v1951
        %v1965 = vadd.f32 %v1926, %v1951
        %v1966 = vadd.f32 %v1927, %v1951
        %v1967 = vadd.f32 %v1928, %v1951
        %v1968 = vadd.f32 %v1929, %v1951
        %v1969 = vadd.f32 %v1930, %v1951
        %v1970 = vadd.f32 %v1931, %v1951
        %v1971 = vadd.f32 %v1932, %v1951
        %v1972 = vadd.f32 %v1933, %v1951
        %v1973 = vadd.f32 %v1934, %v1951
        %v1974 = vadd.f32 %v1935, %v1951
        %v1975 = vadd.f32 %v1936, %v1951
        %v1976 = vadd.f32 %v1937, %v1951
        %v1977 = vadd.f32 %v1938, %v1951
        %v1978 = vadd.f32 %v1939, %v1951
        %v1979 = vadd.f32 %v1940, %v1951
        %v1980 = vadd.f32 %v1941, %v1951
        %v1981 = vadd.f32 %v1942, %v1951
        %v1982 = vadd.f32 %v1943, %v1951
        %v1983 = vadd.f32 %v1944, %v1951
        %v1984 = vadd.f32 %v1945, %v1951
        %v1985 = vmax.f32 %v1953, 0.0
        %v1986 = vmax.f32 %v1954, 0.0
        %v1987 = vmax.f32 %v1955, 0.0
        %v1988 = vmax.f32 %v1956, 0.0
        %v1989 = vmax.f32 %v1957, 0.0
        %v1990 = vmax.f32 %v1958, 0.0
        %v1991 = vmax.f32 %v1959, 0.0
        %v1992 = vmax.f32 %v1960, 0.0
        %v1993 = vmax.f32 %v1961, 0.0
        %v1994 = vmax.f32 %v1962, 0.0
        %v1995 = vmax.f32 %v1963, 0.0
        %v1996 = vmax.f32 %v1964, 0.0
        %v1997 = vmax.f32 %v1965, 0.0
        %v1998 = vmax.f32 %v1966, 0.0
        %v1999 = vmax.f32 %v1967, 0.0
        %v2000 = vmax.f32 %v1968, 0.0
        %v2001 = vmax.f32 %v1969, 0.0
        %v2002 = vmax.f32 %v1970, 0.0
        %v2003 = vmax.f32 %v1971, 0.0
        %v2004 = vmax.f32 %v1972, 0.0
        %v2005 = vmax.f32 %v1973, 0.0
        %v2006 = vmax.f32 %v1974, 0.0
        %v2007 = vmax.f32 %v1975, 0.0
        %v2008 = vmax.f32 %v1976, 0.0
        %v2009 = vmax.f32 %v1977, 0.0
        %v2010 = vmax.f32 %v1978, 0.0
        %v2011 = vmax.f32 %v1979, 0.0
        %v2012 = vmax.f32 %v1980, 0.0
        %v2013 = vmax.f32 %v1981, 0.0
        %v2014 = vmax.f32 %v1982, 0.0
        %v2015 = vmax.f32 %v1983, 0.0
        %v2016 = vmax.f32 %v1984, 0.0
        %2017 = vst [vmem:[%s761 + $0x8] sm:$0xff] %v1985
        %2018 = vst [vmem:[%s761 + $0x10] sm:$0xff] %v1986
        %2019 = vst [vmem:[%s761 + $0x28] sm:$0xff] %v1987
        %2020 = vst [vmem:[%s761 + $0x30] sm:$0xff] %v1988
        %2021 = vst [vmem:[%s761 + $0x48] sm:$0xff] %v1989
        %2022 = vst [vmem:[%s761 + $0x50] sm:$0xff] %v1990
        %2023 = vst [vmem:[%s761 + $0x68] sm:$0xff] %v1991
        %2024 = vst [vmem:[%s761 + $0x70] sm:$0xff] %v1992
        %2025 = vst [vmem:[%s761 + $0x88] sm:$0xff] %v1993
        %2026 = vst [vmem:[%s761 + $0x90] sm:$0xff] %v1994
        %2027 = vst [vmem:[%s761 + $0xa8] sm:$0xff] %v1995
        %2028 = vst [vmem:[%s761 + $0xb0] sm:$0xff] %v1996
        %2029 = vst [vmem:[%s761 + $0xc8] sm:$0xff] %v1997
        %2030 = vst [vmem:[%s761 + $0xd0] sm:$0xff] %v1998
        %2031 = vst [vmem:[%s761 + $0xe8] sm:$0xff] %v1999
        %2032 = vst [vmem:[%s761 + $0xf0] sm:$0xff] %v2000
        %2033 = vst [vmem:[%s761 + $0x108] sm:$0xff] %v2001
        %2034 = vst [vmem:[%s761 + $0x110] sm:$0xff] %v2002
        %2035 = vst [vmem:[%s761 + $0x128] sm:$0xff] %v2003
        %2036 = vst [vmem:[%s761 + $0x130] sm:$0xff] %v2004
        %2037 = vst [vmem:[%s761 + $0x148] sm:$0xff] %v2005
        %2038 = vst [vmem:[%s761 + $0x150] sm:$0xff] %v2006
        %2039 = vst [vmem:[%s761 + $0x168] sm:$0xff] %v2007
        %2040 = vst [vmem:[%s761 + $0x170] sm:$0xff] %v2008
        %2041 = vst [vmem:[%s761 + $0x188] sm:$0xff] %v2009
        %2042 = vst [vmem:[%s761 + $0x190] sm:$0xff] %v2010
        %2043 = vst [vmem:[%s761 + $0x1a8] sm:$0xff] %v2011
        %2044 = vst [vmem:[%s761 + $0x1b0] sm:$0xff] %v2012
        %2045 = vst [vmem:[%s761 + $0x1c8] sm:$0xff] %v2013
        %2046 = vst [vmem:[%s761 + $0x1d0] sm:$0xff] %v2014
        %2047 = vst [vmem:[%s761 + $0x1e8] sm:$0xff] %v2015
        %2048 = vst [vmem:[%s761 + $0x1f0] sm:$0xff] %v2016
        %v2049 = vld [vmem:[%s5] sm:$0x7]
        %v2050 = vld [vmem:[%s5 + $0x4] sm:$0x7]
        %v2051 = vld [vmem:[%s5 + $0x8] sm:$0x7]
        %v2052 = vld [vmem:[#allocation2 + $0x7] sm:$0xff]
        %v2053 = vld [vmem:[#allocation2 + $0xf] sm:$0xff]
        %v2054 = vld [vmem:[#allocation2 + $0x27] sm:$0xff]
        %v2055 = vld [vmem:[#allocation2 + $0x2f] sm:$0xff]
        %v2056 = vld [vmem:[#allocation2 + $0x47] sm:$0xff]
        %v2057 = vld [vmem:[#allocation2 + $0x4f] sm:$0xff]
        %v2058 = vld [vmem:[#allocation2 + $0x67] sm:$0xff]
        %v2059 = vld [vmem:[#allocation2 + $0x6f] sm:$0xff]
        %v2060 = vld [vmem:[#allocation2 + $0x87] sm:$0xff]
        %v2061 = vld [vmem:[#allocation2 + $0x8f] sm:$0xff]
        %v2062 = vld [vmem:[#allocation2 + $0xa7] sm:$0xff]
        %v2063 = vld [vmem:[#allocation2 + $0xaf] sm:$0xff]
        %v2064 = vld [vmem:[#allocation2 + $0xc7] sm:$0xff]
        %v2065 = vld [vmem:[#allocation2 + $0xcf] sm:$0xff]
        %v2066 = vld [vmem:[#allocation2 + $0xe7] sm:$0xff]
        %v2067 = vld [vmem:[#allocation2 + $0xef] sm:$0xff]
        %v2068 = vld [vmem:[#allocation2 + $0x107] sm:$0xff]
        %v2069 = vld [vmem:[#allocation2 + $0x10f] sm:$0xff]
        %v2070 = vld [vmem:[#allocation2 + $0x127] sm:$0xff]
        %v2071 = vld [vmem:[#allocation2 + $0x12f] sm:$0xff]
        %v2072 = vld [vmem:[#allocation2 + $0x147] sm:$0xff]
        %v2073 = vld [vmem:[#allocation2 + $0x14f] sm:$0xff]
        %v2074 = vld [vmem:[#allocation2 + $0x167] sm:$0xff]
        %v2075 = vld [vmem:[#allocation2 + $0x16f] sm:$0xff]
        %v2076 = vld [vmem:[#allocation2 + $0x187] sm:$0xff]
        %v2077 = vld [vmem:[#allocation2 + $0x18f] sm:$0xff]
        %v2078 = vld [vmem:[#allocation2 + $0x1a7] sm:$0xff]
        %v2079 = vld [vmem:[#allocation2 + $0x1af] sm:$0xff]
        %v2080 = vld [vmem:[#allocation2 + $0x1c7] sm:$0xff]
        %v2081 = vld [vmem:[#allocation2 + $0x1cf] sm:$0xff]
        %v2082 = vld [vmem:[#allocation2 + $0x1e7] sm:$0xff]
        %v2083 = vld [vmem:[#allocation2 + $0x1ef] sm:$0xff]
        %v2084 = vlaneseq
        %v2085 = vshrl.u32 %v2084, 7
        %v2086 = vsub.s32 0, %v2085
        %v2087 = vrot.slane %v2049, %v2086
        %v2088 = vmul.f32 %v2052, %v2087
        %v2089 = vmul.f32 %v2053, %v2087
        %v2090 = vmul.f32 %v2054, %v2087
        %v2091 = vmul.f32 %v2055, %v2087
        %v2092 = vmul.f32 %v2056, %v2087
        %v2093 = vmul.f32 %v2057, %v2087
        %v2094 = vmul.f32 %v2058, %v2087
        %v2095 = vmul.f32 %v2059, %v2087
        %v2096 = vmul.f32 %v2060, %v2087
        %v2097 = vmul.f32 %v2061, %v2087
        %v2098 = vmul.f32 %v2062, %v2087
        %v2099 = vmul.f32 %v2063, %v2087
        %v2100 = vmul.f32 %v2064, %v2087
        %v2101 = vmul.f32 %v2065, %v2087
        %v2102 = vmul.f32 %v2066, %v2087
        %v2103 = vmul.f32 %v2067, %v2087
        %v2104 = vmul.f32 %v2068, %v2087
        %v2105 = vmul.f32 %v2069, %v2087
        %v2106 = vmul.f32 %v2070, %v2087
        %v2107 = vmul.f32 %v2071, %v2087
        %v2108 = vmul.f32 %v2072, %v2087
        %v2109 = vmul.f32 %v2073, %v2087
        %v2110 = vmul.f32 %v2074, %v2087
        %v2111 = vmul.f32 %v2075, %v2087
        %v2112 = vmul.f32 %v2076, %v2087
        %v2113 = vmul.f32 %v2077, %v2087
        %v2114 = vmul.f32 %v2078, %v2087
        %v2115 = vmul.f32 %v2079, %v2087
        %v2116 = vmul.f32 %v2080, %v2087
        %v2117 = vmul.f32 %v2081, %v2087
        %v2118 = vmul.f32 %v2082, %v2087
        %v2119 = vmul.f32 %v2083, %v2087
        %v2120 = vld [vmem:[#allocation2 + $0x8] sm:$0xff]
        %v2121 = vld [vmem:[#allocation2 + $0x10] sm:$0xff]
        %v2122 = vld [vmem:[#allocation2 + $0x28] sm:$0xff]
        %v2123 = vld [vmem:[#allocation2 + $0x30] sm:$0xff]
        %v2124 = vld [vmem:[#allocation2 + $0x48] sm:$0xff]
        %v2125 = vld [vmem:[#allocation2 + $0x50] sm:$0xff]
        %v2126 = vld [vmem:[#allocation2 + $0x68] sm:$0xff]
        %v2127 = vld [vmem:[#allocation2 + $0x70] sm:$0xff]
        %v2128 = vld [vmem:[#allocation2 + $0x88] sm:$0xff]
        %v2129 = vld [vmem:[#allocation2 + $0x90] sm:$0xff]
        %v2130 = vld [vmem:[#allocation2 + $0xa8] sm:$0xff]
        %v2131 = vld [vmem:[#allocation2 + $0xb0] sm:$0xff]
        %v2132 = vld [vmem:[#allocation2 + $0xc8] sm:$0xff]
        %v2133 = vld [vmem:[#allocation2 + $0xd0] sm:$0xff]
        %v2134 = vld [vmem:[#allocation2 + $0xe8] sm:$0xff]
        %v2135 = vld [vmem:[#allocation2 + $0xf0] sm:$0xff]
        %v2136 = vld [vmem:[#allocation2 + $0x108] sm:$0xff]
        %v2137 = vld [vmem:[#allocation2 + $0x110] sm:$0xff]
        %v2138 = vld [vmem:[#allocation2 + $0x128] sm:$0xff]
        %v2139 = vld [vmem:[#allocation2 + $0x130] sm:$0xff]
        %v2140 = vld [vmem:[#allocation2 + $0x148] sm:$0xff]
        %v2141 = vld [vmem:[#allocation2 + $0x150] sm:$0xff]
        %v2142 = vld [vmem:[#allocation2 + $0x168] sm:$0xff]
        %v2143 = vld [vmem:[#allocation2 + $0x170] sm:$0xff]
        %v2144 = vld [vmem:[#allocation2 + $0x188] sm:$0xff]
        %v2145 = vld [vmem:[#allocation2 + $0x190] sm:$0xff]
        %v2146 = vld [vmem:[#allocation2 + $0x1a8] sm:$0xff]
        %v2147 = vld [vmem:[#allocation2 + $0x1b0] sm:$0xff]
        %v2148 = vld [vmem:[#allocation2 + $0x1c8] sm:$0xff]
        %v2149 = vld [vmem:[#allocation2 + $0x1d0] sm:$0xff]
        %v2150 = vld [vmem:[#allocation2 + $0x1e8] sm:$0xff]
        %v2151 = vld [vmem:[#allocation2 + $0x1f0] sm:$0xff]
        %v2152 = vlaneseq
        %v2153 = vshrl.u32 %v2152, 7
        %v2154 = vsub.s32 1, %v2153
        %v2155 = vrot.slane %v2049, %v2154
        %v2156 = vmul.f32 %v2120, %v2155
        %v2157 = vmul.f32 %v2121, %v2155
        %v2158 = vmul.f32 %v2122, %v2155
        %v2159 = vmul.f32 %v2123, %v2155
        %v2160 = vmul.f32 %v2124, %v2155
        %v2161 = vmul.f32 %v2125, %v2155
        %v2162 = vmul.f32 %v2126, %v2155
        %v2163 = vmul.f32 %v2127, %v2155
        %v2164 = vmul.f32 %v2128, %v2155
        %v2165 = vmul.f32 %v2129, %v2155
        %v2166 = vmul.f32 %v2130, %v2155
        %v2167 = vmul.f32 %v2131, %v2155
        %v2168 = vmul.f32 %v2132, %v2155
        %v2169 = vmul.f32 %v2133, %v2155
        %v2170 = vmul.f32 %v2134, %v2155
        %v2171 = vmul.f32 %v2135, %v2155
        %v2172 = vmul.f32 %v2136, %v2155
        %v2173 = vmul.f32 %v2137, %v2155
        %v2174 = vmul.f32 %v2138, %v2155
        %v2175 = vmul.f32 %v2139, %v2155
        %v2176 = vmul.f32 %v2140, %v2155
        %v2177 = vmul.f32 %v2141, %v2155
        %v2178 = vmul.f32 %v2142, %v2155
        %v2179 = vmul.f32 %v2143, %v2155
        %v2180 = vmul.f32 %v2144, %v2155
        %v2181 = vmul.f32 %v2145, %v2155
        %v2182 = vmul.f32 %v2146, %v2155
        %v2183 = vmul.f32 %v2147, %v2155
        %v2184 = vmul.f32 %v2148, %v2155
        %v2185 = vmul.f32 %v2149, %v2155
        %v2186 = vmul.f32 %v2150, %v2155
        %v2187 = vmul.f32 %v2151, %v2155
        %v2188 = vadd.f32 %v2088, %v2156
        %v2189 = vadd.f32 %v2089, %v2157
        %v2190 = vadd.f32 %v2090, %v2158
        %v2191 = vadd.f32 %v2091, %v2159
        %v2192 = vadd.f32 %v2092, %v2160
        %v2193 = vadd.f32 %v2093, %v2161
        %v2194 = vadd.f32 %v2094, %v2162
        %v2195 = vadd.f32 %v2095, %v2163
        %v2196 = vadd.f32 %v2096, %v2164
        %v2197 = vadd.f32 %v2097, %v2165
        %v2198 = vadd.f32 %v2098, %v2166
        %v2199 = vadd.f32 %v2099, %v2167
        %v2200 = vadd.f32 %v2100, %v2168
        %v2201 = vadd.f32 %v2101, %v2169
        %v2202 = vadd.f32 %v2102, %v2170
        %v2203 = vadd.f32 %v2103, %v2171
        %v2204 = vadd.f32 %v2104, %v2172
        %v2205 = vadd.f32 %v2105, %v2173
        %v2206 = vadd.f32 %v2106, %v2174
        %v2207 = vadd.f32 %v2107, %v2175
        %v2208 = vadd.f32 %v2108, %v2176
        %v2209 = vadd.f32 %v2109, %v2177
        %v2210 = vadd.f32 %v2110, %v2178
        %v2211 = vadd.f32 %v2111, %v2179
        %v2212 = vadd.f32 %v2112, %v2180
        %v2213 = vadd.f32 %v2113, %v2181
        %v2214 = vadd.f32 %v2114, %v2182
        %v2215 = vadd.f32 %v2115, %v2183
        %v2216 = vadd.f32 %v2116, %v2184
        %v2217 = vadd.f32 %v2117, %v2185
        %v2218 = vadd.f32 %v2118, %v2186
        %v2219 = vadd.f32 %v2119, %v2187
        %v2220 = vld [vmem:[#allocation2 + $0x9] sm:$0xff]
        %v2221 = vld [vmem:[#allocation2 + $0x11] sm:$0xff]
        %v2222 = vld [vmem:[#allocation2 + $0x29] sm:$0xff]
        %v2223 = vld [vmem:[#allocation2 + $0x31] sm:$0xff]
        %v2224 = vld [vmem:[#allocation2 + $0x49] sm:$0xff]
        %v2225 = vld [vmem:[#allocation2 + $0x51] sm:$0xff]
        %v2226 = vld [vmem:[#allocation2 + $0x69] sm:$0xff]
        %v2227 = vld [vmem:[#allocation2 + $0x71] sm:$0xff]
        %v2228 = vld [vmem:[#allocation2 + $0x89] sm:$0xff]
        %v2229 = vld [vmem:[#allocation2 + $0x91] sm:$0xff]
        %v2230 = vld [vmem:[#allocation2 + $0xa9] sm:$0xff]
        %v2231 = vld [vmem:[#allocation2 + $0xb1] sm:$0xff]
        %v2232 = vld [vmem:[#allocation2 + $0xc9] sm:$0xff]
        %v2233 = vld [vmem:[#allocation2 + $0xd1] sm:$0xff]
        %v2234 = vld [vmem:[#allocation2 + $0xe9] sm:$0xff]
        %v2235 = vld [vmem:[#allocation2 + $0xf1] sm:$0xff]
        %v2236 = vld [vmem:[#allocation2 + $0x109] sm:$0xff]
        %v2237 = vld [vmem:[#allocation2 + $0x111] sm:$0xff]
        %v2238 = vld [vmem:[#allocation2 + $0x129] sm:$0xff]
        %v2239 = vld [vmem:[#allocation2 + $0x131] sm:$0xff]
        %v2240 = vld [vmem:[#allocation2 + $0x149] sm:$0xff]
        %v2241 = vld [vmem:[#allocation2 + $0x151] sm:$0xff]
        %v2242 = vld [vmem:[#allocation2 + $0x169] sm:$0xff]
        %v2243 = vld [vmem:[#allocation2 + $0x171] sm:$0xff]
        %v2244 = vld [vmem:[#allocation2 + $0x189] sm:$0xff]
        %v2245 = vld [vmem:[#allocation2 + $0x191] sm:$0xff]
        %v2246 = vld [vmem:[#allocation2 + $0x1a9] sm:$0xff]
        %v2247 = vld [vmem:[#allocation2 + $0x1b1] sm:$0xff]
        %v2248 = vld [vmem:[#allocation2 + $0x1c9] sm:$0xff]
        %v2249 = vld [vmem:[#allocation2 + $0x1d1] sm:$0xff]
        %v2250 = vld [vmem:[#allocation2 + $0x1e9] sm:$0xff]
        %v2251 = vld [vmem:[#allocation2 + $0x1f1] sm:$0xff]
        %v2252 = vlaneseq
        %v2253 = vshrl.u32 %v2252, 7
        %v2254 = vsub.s32 2, %v2253
        %v2255 = vrot.slane %v2049, %v2254
        %v2256 = vmul.f32 %v2220, %v2255
        %v2257 = vmul.f32 %v2221, %v2255
        %v2258 = vmul.f32 %v2222, %v2255
        %v2259 = vmul.f32 %v2223, %v2255
        %v2260 = vmul.f32 %v2224, %v2255
        %v2261 = vmul.f32 %v2225, %v2255
        %v2262 = vmul.f32 %v2226, %v2255
        %v2263 = vmul.f32 %v2227, %v2255
        %v2264 = vmul.f32 %v2228, %v2255
        %v2265 = vmul.f32 %v2229, %v2255
        %v2266 = vmul.f32 %v2230, %v2255
        %v2267 = vmul.f32 %v2231, %v2255
        %v2268 = vmul.f32 %v2232, %v2255
        %v2269 = vmul.f32 %v2233, %v2255
        %v2270 = vmul.f32 %v2234, %v2255
        %v2271 = vmul.f32 %v2235, %v2255
        %v2272 = vmul.f32 %v2236, %v2255
        %v2273 = vmul.f32 %v2237, %v2255
        %v2274 = vmul.f32 %v2238, %v2255
        %v2275 = vmul.f32 %v2239, %v2255
        %v2276 = vmul.f32 %v2240, %v2255
        %v2277 = vmul.f32 %v2241, %v2255
        %v2278 = vmul.f32 %v2242, %v2255
        %v2279 = vmul.f32 %v2243, %v2255
        %v2280 = vmul.f32 %v2244, %v2255
        %v2281 = vmul.f32 %v2245, %v2255
        %v2282 = vmul.f32 %v2246, %v2255
        %v2283 = vmul.f32 %v2247, %v2255
        %v2284 = vmul.f32 %v2248, %v2255
        %v2285 = vmul.f32 %v2249, %v2255
        %v2286 = vmul.f32 %v2250, %v2255
        %v2287 = vmul.f32 %v2251, %v2255
        %v2288 = vadd.f32 %v2188, %v2256
        %v2289 = vadd.f32 %v2189, %v2257
        %v2290 = vadd.f32 %v2190, %v2258
        %v2291 = vadd.f32 %v2191, %v2259
        %v2292 = vadd.f32 %v2192, %v2260
        %v2293 = vadd.f32 %v2193, %v2261
        %v2294 = vadd.f32 %v2194, %v2262
        %v2295 = vadd.f32 %v2195, %v2263
        %v2296 = vadd.f32 %v2196, %v2264
        %v2297 = vadd.f32 %v2197, %v2265
        %v2298 = vadd.f32 %v2198, %v2266
        %v2299 = vadd.f32 %v2199, %v2267
        %v2300 = vadd.f32 %v2200, %v2268
        %v2301 = vadd.f32 %v2201, %v2269
        %v2302 = vadd.f32 %v2202, %v2270
        %v2303 = vadd.f32 %v2203, %v2271
        %v2304 = vadd.f32 %v2204, %v2272
        %v2305 = vadd.f32 %v2205, %v2273
        %v2306 = vadd.f32 %v2206, %v2274
        %v2307 = vadd.f32 %v2207, %v2275
        %v2308 = vadd.f32 %v2208, %v2276
        %v2309 = vadd.f32 %v2209, %v2277
        %v2310 = vadd.f32 %v2210, %v2278
        %v2311 = vadd.f32 %v2211, %v2279
        %v2312 = vadd.f32 %v2212, %v2280
        %v2313 = vadd.f32 %v2213, %v2281
        %v2314 = vadd.f32 %v2214, %v2282
        %v2315 = vadd.f32 %v2215, %v2283
        %v2316 = vadd.f32 %v2216, %v2284
        %v2317 = vadd.f32 %v2217, %v2285
        %v2318 = vadd.f32 %v2218, %v2286
        %v2319 = vadd.f32 %v2219, %v2287
        %v2320 = vld [vmem:[%s761 + $0x7] sm:$0xff]
        %v2321 = vld [vmem:[%s761 + $0xf] sm:$0xff]
        %v2322 = vld [vmem:[%s761 + $0x27] sm:$0xff]
        %v2323 = vld [vmem:[%s761 + $0x2f] sm:$0xff]
        %v2324 = vld [vmem:[%s761 + $0x47] sm:$0xff]
        %v2325 = vld [vmem:[%s761 + $0x4f] sm:$0xff]
        %v2326 = vld [vmem:[%s761 + $0x67] sm:$0xff]
        %v2327 = vld [vmem:[%s761 + $0x6f] sm:$0xff]
        %v2328 = vld [vmem:[%s761 + $0x87] sm:$0xff]
        %v2329 = vld [vmem:[%s761 + $0x8f] sm:$0xff]
        %v2330 = vld [vmem:[%s761 + $0xa7] sm:$0xff]
        %v2331 = vld [vmem:[%s761 + $0xaf] sm:$0xff]
        %v2332 = vld [vmem:[%s761 + $0xc7] sm:$0xff]
        %v2333 = vld [vmem:[%s761 + $0xcf] sm:$0xff]
        %v2334 = vld [vmem:[%s761 + $0xe7] sm:$0xff]
        %v2335 = vld [vmem:[%s761 + $0xef] sm:$0xff]
        %v2336 = vld [vmem:[%s761 + $0x107] sm:$0xff]
        %v2337 = vld [vmem:[%s761 + $0x10f] sm:$0xff]
        %v2338 = vld [vmem:[%s761 + $0x127] sm:$0xff]
        %v2339 = vld [vmem:[%s761 + $0x12f] sm:$0xff]
        %v2340 = vld [vmem:[%s761 + $0x147] sm:$0xff]
        %v2341 = vld [vmem:[%s761 + $0x14f] sm:$0xff]
        %v2342 = vld [vmem:[%s761 + $0x167] sm:$0xff]
        %v2343 = vld [vmem:[%s761 + $0x16f] sm:$0xff]
        %v2344 = vld [vmem:[%s761 + $0x187] sm:$0xff]
        %v2345 = vld [vmem:[%s761 + $0x18f] sm:$0xff]
        %v2346 = vld [vmem:[%s761 + $0x1a7] sm:$0xff]
        %v2347 = vld [vmem:[%s761 + $0x1af] sm:$0xff]
        %v2348 = vld [vmem:[%s761 + $0x1c7] sm:$0xff]
        %v2349 = vld [vmem:[%s761 + $0x1cf] sm:$0xff]
        %v2350 = vld [vmem:[%s761 + $0x1e7] sm:$0xff]
        %v2351 = vld [vmem:[%s761 + $0x1ef] sm:$0xff]
        %v2352 = vlaneseq
        %v2353 = vshrl.u32 %v2352, 7
        %v2354 = vsub.s32 0, %v2353
        %v2355 = vrot.slane %v2050, %v2354
        %v2356 = vmul.f32 %v2320, %v2355
        %v2357 = vmul.f32 %v2321, %v2355
        %v2358 = vmul.f32 %v2322, %v2355
        %v2359 = vmul.f32 %v2323, %v2355
        %v2360 = vmul.f32 %v2324, %v2355
        %v2361 = vmul.f32 %v2325, %v2355
        %v2362 = vmul.f32 %v2326, %v2355
        %v2363 = vmul.f32 %v2327, %v2355
        %v2364 = vmul.f32 %v2328, %v2355
        %v2365 = vmul.f32 %v2329, %v2355
        %v2366 = vmul.f32 %v2330, %v2355
        %v2367 = vmul.f32 %v2331, %v2355
        %v2368 = vmul.f32 %v2332, %v2355
        %v2369 = vmul.f32 %v2333, %v2355
        %v2370 = vmul.f32 %v2334, %v2355
        %v2371 = vmul.f32 %v2335, %v2355
        %v2372 = vmul.f32 %v2336, %v2355
        %v2373 = vmul.f32 %v2337, %v2355
        %v2374 = vmul.f32 %v2338, %v2355
        %v2375 = vmul.f32 %v2339, %v2355
        %v2376 = vmul.f32 %v2340, %v2355
        %v2377 = vmul.f32 %v2341, %v2355
        %v2378 = vmul.f32 %v2342, %v2355
        %v2379 = vmul.f32 %v2343, %v2355
        %v2380 = vmul.f32 %v2344, %v2355
        %v2381 = vmul.f32 %v2345, %v2355
        %v2382 = vmul.f32 %v2346, %v2355
        %v2383 = vmul.f32 %v2347, %v2355
        %v2384 = vmul.f32 %v2348, %v2355
        %v2385 = vmul.f32 %v2349, %v2355
        %v2386 = vmul.f32 %v2350, %v2355
        %v2387 = vmul.f32 %v2351, %v2355
        %v2388 = vadd.f32 %v2288, %v2356
        %v2389 = vadd.f32 %v2289, %v2357
        %v2390 = vadd.f32 %v2290, %v2358
        %v2391 = vadd.f32 %v2291, %v2359
        %v2392 = vadd.f32 %v2292, %v2360
        %v2393 = vadd.f32 %v2293, %v2361
        %v2394 = vadd.f32 %v2294, %v2362
        %v2395 = vadd.f32 %v2295, %v2363
        %v2396 = vadd.f32 %v2296, %v2364
        %v2397 = vadd.f32 %v2297, %v2365
        %v2398 = vadd.f32 %v2298, %v2366
        %v2399 = vadd.f32 %v2299, %v2367
        %v2400 = vadd.f32 %v2300, %v2368
        %v2401 = vadd.f32 %v2301, %v2369
        %v2402 = vadd.f32 %v2302, %v2370
        %v2403 = vadd.f32 %v2303, %v2371
        %v2404 = vadd.f32 %v2304, %v2372
        %v2405 = vadd.f32 %v2305, %v2373
        %v2406 = vadd.f32 %v2306, %v2374
        %v2407 = vadd.f32 %v2307, %v2375
        %v2408 = vadd.f32 %v2308, %v2376
        %v2409 = vadd.f32 %v2309, %v2377
        %v2410 = vadd.f32 %v2310, %v2378
        %v2411 = vadd.f32 %v2311, %v2379
        %v2412 = vadd.f32 %v2312, %v2380
        %v2413 = vadd.f32 %v2313, %v2381
        %v2414 = vadd.f32 %v2314, %v2382
        %v2415 = vadd.f32 %v2315, %v2383
        %v2416 = vadd.f32 %v2316, %v2384
        %v2417 = vadd.f32 %v2317, %v2385
        %v2418 = vadd.f32 %v2318, %v2386
        %v2419 = vadd.f32 %v2319, %v2387
        %v2420 = vld [vmem:[%s761 + $0x8] sm:$0xff]
        %v2421 = vld [vmem:[%s761 + $0x10] sm:$0xff]
        %v2422 = vld [vmem:[%s761 + $0x28] sm:$0xff]
        %v2423 = vld [vmem:[%s761 + $0x30] sm:$0xff]
        %v2424 = vld [vmem:[%s761 + $0x48] sm:$0xff]
        %v2425 = vld [vmem:[%s761 + $0x50] sm:$0xff]
        %v2426 = vld [vmem:[%s761 + $0x68] sm:$0xff]
        %v2427 = vld [vmem:[%s761 + $0x70] sm:$0xff]
        %v2428 = vld [vmem:[%s761 + $0x88] sm:$0xff]
        %v2429 = vld [vmem:[%s761 + $0x90] sm:$0xff]
        %v2430 = vld [vmem:[%s761 + $0xa8] sm:$0xff]
        %v2431 = vld [vmem:[%s761 + $0xb0] sm:$0xff]
        %v2432 = vld [vmem:[%s761 + $0xc8] sm:$0xff]
        %v2433 = vld [vmem:[%s761 + $0xd0] sm:$0xff]
        %v2434 = vld [vmem:[%s761 + $0xe8] sm:$0xff]
        %v2435 = vld [vmem:[%s761 + $0xf0] sm:$0xff]
        %v2436 = vld [vmem:[%s761 + $0x108] sm:$0xff]
        %v2437 = vld [vmem:[%s761 + $0x110] sm:$0xff]
        %v2438 = vld [vmem:[%s761 + $0x128] sm:$0xff]
        %v2439 = vld [vmem:[%s761 + $0x130] sm:$0xff]
        %v2440 = vld [vmem:[%s761 + $0x148] sm:$0xff]
        %v2441 = vld [vmem:[%s761 + $0x150] sm:$0xff]
        %v2442 = vld [vmem:[%s761 + $0x168] sm:$0xff]
        %v2443 = vld [vmem:[%s761 + $0x170] sm:$0xff]
        %v2444 = vld [vmem:[%s761 + $0x188] sm:$0xff]
        %v2445 = vld [vmem:[%s761 + $0x190] sm:$0xff]
        %v2446 = vld [vmem:[%s761 + $0x1a8] sm:$0xff]
        %v2447 = vld [vmem:[%s761 + $0x1b0] sm:$0xff]
        %v2448 = vld [vmem:[%s761 + $0x1c8] sm:$0xff]
        %v2449 = vld [vmem:[%s761 + $0x1d0] sm:$0xff]
        %v2450 = vld [vmem:[%s761 + $0x1e8] sm:$0xff]
        %v2451 = vld [vmem:[%s761 + $0x1f0] sm:$0xff]
        %v2452 = vlaneseq
        %v2453 = vshrl.u32 %v2452, 7
        %v2454 = vsub.s32 1, %v2453
        %v2455 = vrot.slane %v2050, %v2454
        %v2456 = vmul.f32 %v2420, %v2455
        %v2457 = vmul.f32 %v2421, %v2455
        %v2458 = vmul.f32 %v2422, %v2455
        %v2459 = vmul.f32 %v2423, %v2455
        %v2460 = vmul.f32 %v2424, %v2455
        %v2461 = vmul.f32 %v2425, %v2455
        %v2462 = vmul.f32 %v2426, %v2455
        %v2463 = vmul.f32 %v2427, %v2455
        %v2464 = vmul.f32 %v2428, %v2455
        %v2465 = vmul.f32 %v2429, %v2455
        %v2466 = vmul.f32 %v2430, %v2455
        %v2467 = vmul.f32 %v2431, %v2455
        %v2468 = vmul.f32 %v2432, %v2455
        %v2469 = vmul.f32 %v2433, %v2455
        %v2470 = vmul.f32 %v2434, %v2455
        %v2471 = vmul.f32 %v2435, %v2455
        %v2472 = vmul.f32 %v2436, %v2455
        %v2473 = vmul.f32 %v2437, %v2455
        %v2474 = vmul.f32 %v2438, %v2455
        %v2475 = vmul.f32 %v2439, %v2455
        %v2476 = vmul.f32 %v2440, %v2455
        %v2477 = vmul.f32 %v2441, %v2455
        %v2478 = vmul.f32 %v2442, %v2455
        %v2479 = vmul.f32 %v2443, %v2455
        %v2480 = vmul.f32 %v2444, %v2455
        %v2481 = vmul.f32 %v2445, %v2455
        %v2482 = vmul.f32 %v2446, %v2455
        %v2483 = vmul.f32 %v2447, %v2455
        %v2484 = vmul.f32 %v2448, %v2455
        %v2485 = vmul.f32 %v2449, %v2455
        %v2486 = vmul.f32 %v2450, %v2455
        %v2487 = vmul.f32 %v2451, %v2455
        %v2488 = vadd.f32 %v2388, %v2456
        %v2489 = vadd.f32 %v2389, %v2457
        %v2490 = vadd.f32 %v2390, %v2458
        %v2491 = vadd.f32 %v2391, %v2459
        %v2492 = vadd.f32 %v2392, %v2460
        %v2493 = vadd.f32 %v2393, %v2461
        %v2494 = vadd.f32 %v2394, %v2462
        %v2495 = vadd.f32 %v2395, %v2463
        %v2496 = vadd.f32 %v2396, %v2464
        %v2497 = vadd.f32 %v2397, %v2465
        %v2498 = vadd.f32 %v2398, %v2466
        %v2499 = vadd.f32 %v2399, %v2467
        %v2500 = vadd.f32 %v2400, %v2468
        %v2501 = vadd.f32 %v2401, %v2469
        %v2502 = vadd.f32 %v2402, %v2470
        %v2503 = vadd.f32 %v2403, %v2471
        %v2504 = vadd.f32 %v2404, %v2472
        %v2505 = vadd.f32 %v2405, %v2473
        %v2506 = vadd.f32 %v2406, %v2474
        %v2507 = vadd.f32 %v2407, %v2475
        %v2508 = vadd.f32 %v2408, %v2476
        %v2509 = vadd.f32 %v2409, %v2477
        %v2510 = vadd.f32 %v2410, %v2478
        %v2511 = vadd.f32 %v2411, %v2479
        %v2512 = vadd.f32 %v2412, %v2480
        %v2513 = vadd.f32 %v2413, %v2481
        %v2514 = vadd.f32 %v2414, %v2482
        %v2515 = vadd.f32 %v2415, %v2483
        %v2516 = vadd.f32 %v2416, %v2484
        %v2517 = vadd.f32 %v2417, %v2485
        %v2518 = vadd.f32 %v2418, %v2486
        %v2519 = vadd.f32 %v2419, %v2487
        %v2520 = vld [vmem:[%s761 + $0x9] sm:$0xff]
        %v2521 = vld [vmem:[%s761 + $0x11] sm:$0xff]
        %v2522 = vld [vmem:[%s761 + $0x29] sm:$0xff]
        %v2523 = vld [vmem:[%s761 + $0x31] sm:$0xff]
        %v2524 = vld [vmem:[%s761 + $0x49] sm:$0xff]
        %v2525 = vld [vmem:[%s761 + $0x51] sm:$0xff]
        %v2526 = vld [vmem:[%s761 + $0x69] sm:$0xff]
        %v2527 = vld [vmem:[%s761 + $0x71] sm:$0xff]
        %v2528 = vld [vmem:[%s761 + $0x89] sm:$0xff]
        %v2529 = vld [vmem:[%s761 + $0x91] sm:$0xff]
        %v2530 = vld [vmem:[%s761 + $0xa9] sm:$0xff]
        %v2531 = vld [vmem:[%s761 + $0xb1] sm:$0xff]
        %v2532 = vld [vmem:[%s761 + $0xc9] sm:$0xff]
        %v2533 = vld [vmem:[%s761 + $0xd1] sm:$0xff]
        %v2534 = vld [vmem:[%s761 + $0xe9] sm:$0xff]
        %v2535 = vld [vmem:[%s761 + $0xf1] sm:$0xff]
        %v2536 = vld [vmem:[%s761 + $0x109] sm:$0xff]
        %v2537 = vld [vmem:[%s761 + $0x111] sm:$0xff]
        %v2538 = vld [vmem:[%s761 + $0x129] sm:$0xff]
        %v2539 = vld [vmem:[%s761 + $0x131] sm:$0xff]
        %v2540 = vld [vmem:[%s761 + $0x149] sm:$0xff]
        %v2541 = vld [vmem:[%s761 + $0x151] sm:$0xff]
        %v2542 = vld [vmem:[%s761 + $0x169] sm:$0xff]
        %v2543 = vld [vmem:[%s761 + $0x171] sm:$0xff]
        %v2544 = vld [vmem:[%s761 + $0x189] sm:$0xff]
        %v2545 = vld [vmem:[%s761 + $0x191] sm:$0xff]
        %v2546 = vld [vmem:[%s761 + $0x1a9] sm:$0xff]
        %v2547 = vld [vmem:[%s761 + $0x1b1] sm:$0xff]
        %v2548 = vld [vmem:[%s761 + $0x1c9] sm:$0xff]
        %v2549 = vld [vmem:[%s761 + $0x1d1] sm:$0xff]
        %v2550 = vld [vmem:[%s761 + $0x1e9] sm:$0xff]
        %v2551 = vld [vmem:[%s761 + $0x1f1] sm:$0xff]
        %v2552 = vlaneseq
        %v2553 = vshrl.u32 %v2552, 7
        %v2554 = vsub.s32 2, %v2553
        %v2555 = vrot.slane %v2050, %v2554
        %v2556 = vmul.f32 %v2520, %v2555
        %v2557 = vmul.f32 %v2521, %v2555
        %v2558 = vmul.f32 %v2522, %v2555
        %v2559 = vmul.f32 %v2523, %v2555
        %v2560 = vmul.f32 %v2524, %v2555
        %v2561 = vmul.f32 %v2525, %v2555
        %v2562 = vmul.f32 %v2526, %v2555
        %v2563 = vmul.f32 %v2527, %v2555
        %v2564 = vmul.f32 %v2528, %v2555
        %v2565 = vmul.f32 %v2529, %v2555
        %v2566 = vmul.f32 %v2530, %v2555
        %v2567 = vmul.f32 %v2531, %v2555
        %v2568 = vmul.f32 %v2532, %v2555
        %v2569 = vmul.f32 %v2533, %v2555
        %v2570 = vmul.f32 %v2534, %v2555
        %v2571 = vmul.f32 %v2535, %v2555
        %v2572 = vmul.f32 %v2536, %v2555
        %v2573 = vmul.f32 %v2537, %v2555
        %v2574 = vmul.f32 %v2538, %v2555
        %v2575 = vmul.f32 %v2539, %v2555
        %v2576 = vmul.f32 %v2540, %v2555
        %v2577 = vmul.f32 %v2541, %v2555
        %v2578 = vmul.f32 %v2542, %v2555
        %v2579 = vmul.f32 %v2543, %v2555
        %v2580 = vmul.f32 %v2544, %v2555
        %v2581 = vmul.f32 %v2545, %v2555
        %v2582 = vmul.f32 %v2546, %v2555
        %v2583 = vmul.f32 %v2547, %v2555
        %v2584 = vmul.f32 %v2548, %v2555
        %v2585 = vmul.f32 %v2549, %v2555
        %v2586 = vmul.f32 %v2550, %v2555
        %v2587 = vmul.f32 %v2551, %v2555
        %v2588 = vadd.f32 %v2488, %v2556
        %v2589 = vadd.f32 %v2489, %v2557
        %v2590 = vadd.f32 %v2490, %v2558
        %v2591 = vadd.f32 %v2491, %v2559
        %v2592 = vadd.f32 %v2492, %v2560
        %v2593 = vadd.f32 %v2493, %v2561
        %v2594 = vadd.f32 %v2494, %v2562
        %v2595 = vadd.f32 %v2495, %v2563
        %v2596 = vadd.f32 %v2496, %v2564
        %v2597 = vadd.f32 %v2497, %v2565
        %v2598 = vadd.f32 %v2498, %v2566
        %v2599 = vadd.f32 %v2499, %v2567
        %v2600 = vadd.f32 %v2500, %v2568
        %v2601 = vadd.f32 %v2501, %v2569
        %v2602 = vadd.f32 %v2502, %v2570
        %v2603 = vadd.f32 %v2503, %v2571
        %v2604 = vadd.f32 %v2504, %v2572
        %v2605 = vadd.f32 %v2505, %v2573
        %v2606 = vadd.f32 %v2506, %v2574
        %v2607 = vadd.f32 %v2507, %v2575
        %v2608 = vadd.f32 %v2508, %v2576
        %v2609 = vadd.f32 %v2509, %v2577
        %v2610 = vadd.f32 %v2510, %v2578
        %v2611 = vadd.f32 %v2511, %v2579
        %v2612 = vadd.f32 %v2512, %v2580
        %v2613 = vadd.f32 %v2513, %v2581
        %v2614 = vadd.f32 %v2514, %v2582
        %v2615 = vadd.f32 %v2515, %v2583
        %v2616 = vadd.f32 %v2516, %v2584
        %v2617 = vadd.f32 %v2517, %v2585
        %v2618 = vadd.f32 %v2518, %v2586
        %v2619 = vadd.f32 %v2519, %v2587
        %v2620 = vld [vmem:[%s1365 + $0x7] sm:$0xff]
        %v2621 = vld [vmem:[%s1365 + $0xf] sm:$0xff]
        %v2622 = vld [vmem:[%s1365 + $0x27] sm:$0xff]
        %v2623 = vld [vmem:[%s1365 + $0x2f] sm:$0xff]
        %v2624 = vld [vmem:[%s1365 + $0x47] sm:$0xff]
        %v2625 = vld [vmem:[%s1365 + $0x4f] sm:$0xff]
        %v2626 = vld [vmem:[%s1365 + $0x67] sm:$0xff]
        %v2627 = vld [vmem:[%s1365 + $0x6f] sm:$0xff]
        %v2628 = vld [vmem:[%s1365 + $0x87] sm:$0xff]
        %v2629 = vld [vmem:[%s1365 + $0x8f] sm:$0xff]
        %v2630 = vld [vmem:[%s1365 + $0xa7] sm:$0xff]
        %v2631 = vld [vmem:[%s1365 + $0xaf] sm:$0xff]
        %v2632 = vld [vmem:[%s1365 + $0xc7] sm:$0xff]
        %v2633 = vld [vmem:[%s1365 + $0xcf] sm:$0xff]
        %v2634 = vld [vmem:[%s1365 + $0xe7] sm:$0xff]
        %v2635 = vld [vmem:[%s1365 + $0xef] sm:$0xff]
        %v2636 = vld [vmem:[%s1365 + $0x107] sm:$0xff]
        %v2637 = vld [vmem:[%s1365 + $0x10f] sm:$0xff]
        %v2638 = vld [vmem:[%s1365 + $0x127] sm:$0xff]
        %v2639 = vld [vmem:[%s1365 + $0x12f] sm:$0xff]
        %v2640 = vld [vmem:[%s1365 + $0x147] sm:$0xff]
        %v2641 = vld [vmem:[%s1365 + $0x14f] sm:$0xff]
        %v2642 = vld [vmem:[%s1365 + $0x167] sm:$0xff]
        %v2643 = vld [vmem:[%s1365 + $0x16f] sm:$0xff]
        %v2644 = vld [vmem:[%s1365 + $0x187] sm:$0xff]
        %v2645 = vld [vmem:[%s1365 + $0x18f] sm:$0xff]
        %v2646 = vld [vmem:[%s1365 + $0x1a7] sm:$0xff]
        %v2647 = vld [vmem:[%s1365 + $0x1af] sm:$0xff]
        %v2648 = vld [vmem:[%s1365 + $0x1c7] sm:$0xff]
        %v2649 = vld [vmem:[%s1365 + $0x1cf] sm:$0xff]
        %v2650 = vld [vmem:[%s1365 + $0x1e7] sm:$0xff]
        %v2651 = vld [vmem:[%s1365 + $0x1ef] sm:$0xff]
        %v2652 = vlaneseq
        %v2653 = vshrl.u32 %v2652, 7
        %v2654 = vsub.s32 0, %v2653
        %v2655 = vrot.slane %v2051, %v2654
        %v2656 = vmul.f32 %v2620, %v2655
        %v2657 = vmul.f32 %v2621, %v2655
        %v2658 = vmul.f32 %v2622, %v2655
        %v2659 = vmul.f32 %v2623, %v2655
        %v2660 = vmul.f32 %v2624, %v2655
        %v2661 = vmul.f32 %v2625, %v2655
        %v2662 = vmul.f32 %v2626, %v2655
        %v2663 = vmul.f32 %v2627, %v2655
        %v2664 = vmul.f32 %v2628, %v2655
        %v2665 = vmul.f32 %v2629, %v2655
        %v2666 = vmul.f32 %v2630, %v2655
        %v2667 = vmul.f32 %v2631, %v2655
        %v2668 = vmul.f32 %v2632, %v2655
        %v2669 = vmul.f32 %v2633, %v2655
        %v2670 = vmul.f32 %v2634, %v2655
        %v2671 = vmul.f32 %v2635, %v2655
        %v2672 = vmul.f32 %v2636, %v2655
        %v2673 = vmul.f32 %v2637, %v2655
        %v2674 = vmul.f32 %v2638, %v2655
        %v2675 = vmul.f32 %v2639, %v2655
        %v2676 = vmul.f32 %v2640, %v2655
        %v2677 = vmul.f32 %v2641, %v2655
        %v2678 = vmul.f32 %v2642, %v2655
        %v2679 = vmul.f32 %v2643, %v2655
        %v2680 = vmul.f32 %v2644, %v2655
        %v2681 = vmul.f32 %v2645, %v2655
        %v2682 = vmul.f32 %v2646, %v2655
        %v2683 = vmul.f32 %v2647, %v2655
        %v2684 = vmul.f32 %v2648, %v2655
        %v2685 = vmul.f32 %v2649, %v2655
        %v2686 = vmul.f32 %v2650, %v2655
        %v2687 = vmul.f32 %v2651, %v2655
        %v2688 = vadd.f32 %v2588, %v2656
        %v2689 = vadd.f32 %v2589, %v2657
        %v2690 = vadd.f32 %v2590, %v2658
        %v2691 = vadd.f32 %v2591, %v2659
        %v2692 = vadd.f32 %v2592, %v2660
        %v2693 = vadd.f32 %v2593, %v2661
        %v2694 = vadd.f32 %v2594, %v2662
        %v2695 = vadd.f32 %v2595, %v2663
        %v2696 = vadd.f32 %v2596, %v2664
        %v2697 = vadd.f32 %v2597, %v2665
        %v2698 = vadd.f32 %v2598, %v2666
        %v2699 = vadd.f32 %v2599, %v2667
        %v2700 = vadd.f32 %v2600, %v2668
        %v2701 = vadd.f32 %v2601, %v2669
        %v2702 = vadd.f32 %v2602, %v2670
        %v2703 = vadd.f32 %v2603, %v2671
        %v2704 = vadd.f32 %v2604, %v2672
        %v2705 = vadd.f32 %v2605, %v2673
        %v2706 = vadd.f32 %v2606, %v2674
        %v2707 = vadd.f32 %v2607, %v2675
        %v2708 = vadd.f32 %v2608, %v2676
        %v2709 = vadd.f32 %v2609, %v2677
        %v2710 = vadd.f32 %v2610, %v2678
        %v2711 = vadd.f32 %v2611, %v2679
        %v2712 = vadd.f32 %v2612, %v2680
        %v2713 = vadd.f32 %v2613, %v2681
        %v2714 = vadd.f32 %v2614, %v2682
        %v2715 = vadd.f32 %v2615, %v2683
        %v2716 = vadd.f32 %v2616, %v2684
        %v2717 = vadd.f32 %v2617, %v2685
        %v2718 = vadd.f32 %v2618, %v2686
        %v2719 = vadd.f32 %v2619, %v2687
        %v2720 = vld [vmem:[%s1365 + $0x8] sm:$0xff]
        %v2721 = vld [vmem:[%s1365 + $0x10] sm:$0xff]
        %v2722 = vld [vmem:[%s1365 + $0x28] sm:$0xff]
        %v2723 = vld [vmem:[%s1365 + $0x30] sm:$0xff]
        %v2724 = vld [vmem:[%s1365 + $0x48] sm:$0xff]
        %v2725 = vld [vmem:[%s1365 + $0x50] sm:$0xff]
        %v2726 = vld [vmem:[%s1365 + $0x68] sm:$0xff]
        %v2727 = vld [vmem:[%s1365 + $0x70] sm:$0xff]
        %v2728 = vld [vmem:[%s1365 + $0x88] sm:$0xff]
        %v2729 = vld [vmem:[%s1365 + $0x90] sm:$0xff]
        %v2730 = vld [vmem:[%s1365 + $0xa8] sm:$0xff]
        %v2731 = vld [vmem:[%s1365 + $0xb0] sm:$0xff]
        %v2732 = vld [vmem:[%s1365 + $0xc8] sm:$0xff]
        %v2733 = vld [vmem:[%s1365 + $0xd0] sm:$0xff]
        %v2734 = vld [vmem:[%s1365 + $0xe8] sm:$0xff]
        %v2735 = vld [vmem:[%s1365 + $0xf0] sm:$0xff]
        %v2736 = vld [vmem:[%s1365 + $0x108] sm:$0xff]
        %v2737 = vld [vmem:[%s1365 + $0x110] sm:$0xff]
        %v2738 = vld [vmem:[%s1365 + $0x128] sm:$0xff]
        %v2739 = vld [vmem:[%s1365 + $0x130] sm:$0xff]
        %v2740 = vld [vmem:[%s1365 + $0x148] sm:$0xff]
        %v2741 = vld [vmem:[%s1365 + $0x150] sm:$0xff]
        %v2742 = vld [vmem:[%s1365 + $0x168] sm:$0xff]
        %v2743 = vld [vmem:[%s1365 + $0x170] sm:$0xff]
        %v2744 = vld [vmem:[%s1365 + $0x188] sm:$0xff]
        %v2745 = vld [vmem:[%s1365 + $0x190] sm:$0xff]
        %v2746 = vld [vmem:[%s1365 + $0x1a8] sm:$0xff]
        %v2747 = vld [vmem:[%s1365 + $0x1b0] sm:$0xff]
        %v2748 = vld [vmem:[%s1365 + $0x1c8] sm:$0xff]
        %v2749 = vld [vmem:[%s1365 + $0x1d0] sm:$0xff]
        %v2750 = vld [vmem:[%s1365 + $0x1e8] sm:$0xff]
        %v2751 = vld [vmem:[%s1365 + $0x1f0] sm:$0xff]
        %v2752 = vlaneseq
        %v2753 = vshrl.u32 %v2752, 7
        %v2754 = vsub.s32 1, %v2753
        %v2755 = vrot.slane %v2051, %v2754
        %v2756 = vmul.f32 %v2720, %v2755
        %v2757 = vmul.f32 %v2721, %v2755
        %v2758 = vmul.f32 %v2722, %v2755
        %v2759 = vmul.f32 %v2723, %v2755
        %v2760 = vmul.f32 %v2724, %v2755
        %v2761 = vmul.f32 %v2725, %v2755
        %v2762 = vmul.f32 %v2726, %v2755
        %v2763 = vmul.f32 %v2727, %v2755
        %v2764 = vmul.f32 %v2728, %v2755
        %v2765 = vmul.f32 %v2729, %v2755
        %v2766 = vmul.f32 %v2730, %v2755
        %v2767 = vmul.f32 %v2731, %v2755
        %v2768 = vmul.f32 %v2732, %v2755
        %v2769 = vmul.f32 %v2733, %v2755
        %v2770 = vmul.f32 %v2734, %v2755
        %v2771 = vmul.f32 %v2735, %v2755
        %v2772 = vmul.f32 %v2736, %v2755
        %v2773 = vmul.f32 %v2737, %v2755
        %v2774 = vmul.f32 %v2738, %v2755
        %v2775 = vmul.f32 %v2739, %v2755
        %v2776 = vmul.f32 %v2740, %v2755
        %v2777 = vmul.f32 %v2741, %v2755
        %v2778 = vmul.f32 %v2742, %v2755
        %v2779 = vmul.f32 %v2743, %v2755
        %v2780 = vmul.f32 %v2744, %v2755
        %v2781 = vmul.f32 %v2745, %v2755
        %v2782 = vmul.f32 %v2746, %v2755
        %v2783 = vmul.f32 %v2747, %v2755
        %v2784 = vmul.f32 %v2748, %v2755
        %v2785 = vmul.f32 %v2749, %v2755
        %v2786 = vmul.f32 %v2750, %v2755
        %v2787 = vmul.f32 %v2751, %v2755
        %v2788 = vadd.f32 %v2688, %v2756
        %v2789 = vadd.f32 %v2689, %v2757
        %v2790 = vadd.f32 %v2690, %v2758
        %v2791 = vadd.f32 %v2691, %v2759
        %v2792 = vadd.f32 %v2692, %v2760
        %v2793 = vadd.f32 %v2693, %v2761
        %v2794 = vadd.f32 %v2694, %v2762
        %v2795 = vadd.f32 %v2695, %v2763
        %v2796 = vadd.f32 %v2696, %v2764
        %v2797 = vadd.f32 %v2697, %v2765
        %v2798 = vadd.f32 %v2698, %v2766
        %v2799 = vadd.f32 %v2699, %v2767
        %v2800 = vadd.f32 %v2700, %v2768
        %v2801 = vadd.f32 %v2701, %v2769
        %v2802 = vadd.f32 %v2702, %v2770
        %v2803 = vadd.f32 %v2703, %v2771
        %v2804 = vadd.f32 %v2704, %v2772
        %v2805 = vadd.f32 %v2705, %v2773
        %v2806 = vadd.f32 %v2706, %v2774
        %v2807 = vadd.f32 %v2707, %v2775
        %v2808 = vadd.f32 %v2708, %v2776
        %v2809 = vadd.f32 %v2709, %v2777
        %v2810 = vadd.f32 %v2710, %v2778
        %v2811 = vadd.f32 %v2711, %v2779
        %v2812 = vadd.f32 %v2712, %v2780
        %v2813 = vadd.f32 %v2713, %v2781
        %v2814 = vadd.f32 %v2714, %v2782
        %v2815 = vadd.f32 %v2715, %v2783
        %v2816 = vadd.f32 %v2716, %v2784
        %v2817 = vadd.f32 %v2717, %v2785
        %v2818 = vadd.f32 %v2718, %v2786
        %v2819 = vadd.f32 %v2719, %v2787
        %v2820 = vld [vmem:[%s1365 + $0x9] sm:$0xff]
        %v2821 = vld [vmem:[%s1365 + $0x11] sm:$0xff]
        %v2822 = vld [vmem:[%s1365 + $0x29] sm:$0xff]
        %v2823 = vld [vmem:[%s1365 + $0x31] sm:$0xff]
        %v2824 = vld [vmem:[%s1365 + $0x49] sm:$0xff]
        %v2825 = vld [vmem:[%s1365 + $0x51] sm:$0xff]
        %v2826 = vld [vmem:[%s1365 + $0x69] sm:$0xff]
        %v2827 = vld [vmem:[%s1365 + $0x71] sm:$0xff]
        %v2828 = vld [vmem:[%s1365 + $0x89] sm:$0xff]
        %v2829 = vld [vmem:[%s1365 + $0x91] sm:$0xff]
        %v2830 = vld [vmem:[%s1365 + $0xa9] sm:$0xff]
        %v2831 = vld [vmem:[%s1365 + $0xb1] sm:$0xff]
        %v2832 = vld [vmem:[%s1365 + $0xc9] sm:$0xff]
        %v2833 = vld [vmem:[%s1365 + $0xd1] sm:$0xff]
        %v2834 = vld [vmem:[%s1365 + $0xe9] sm:$0xff]
        %v2835 = vld [vmem:[%s1365 + $0xf1] sm:$0xff]
        %v2836 = vld [vmem:[%s1365 + $0x109] sm:$0xff]
        %v2837 = vld [vmem:[%s1365 + $0x111] sm:$0xff]
        %v2838 = vld [vmem:[%s1365 + $0x129] sm:$0xff]
        %v2839 = vld [vmem:[%s1365 + $0x131] sm:$0xff]
        %v2840 = vld [vmem:[%s1365 + $0x149] sm:$0xff]
        %v2841 = vld [vmem:[%s1365 + $0x151] sm:$0xff]
        %v2842 = vld [vmem:[%s1365 + $0x169] sm:$0xff]
        %v2843 = vld [vmem:[%s1365 + $0x171] sm:$0xff]
        %v2844 = vld [vmem:[%s1365 + $0x189] sm:$0xff]
        %v2845 = vld [vmem:[%s1365 + $0x191] sm:$0xff]
        %v2846 = vld [vmem:[%s1365 + $0x1a9] sm:$0xff]
        %v2847 = vld [vmem:[%s1365 + $0x1b1] sm:$0xff]
        %v2848 = vld [vmem:[%s1365 + $0x1c9] sm:$0xff]
        %v2849 = vld [vmem:[%s1365 + $0x1d1] sm:$0xff]
        %v2850 = vld [vmem:[%s1365 + $0x1e9] sm:$0xff]
        %v2851 = vld [vmem:[%s1365 + $0x1f1] sm:$0xff]
        %v2852 = vlaneseq
        %v2853 = vshrl.u32 %v2852, 7
        %v2854 = vsub.s32 2, %v2853
        %v2855 = vrot.slane %v2051, %v2854
        %v2856 = vmul.f32 %v2820, %v2855
        %v2857 = vmul.f32 %v2821, %v2855
        %v2858 = vmul.f32 %v2822, %v2855
        %v2859 = vmul.f32 %v2823, %v2855
        %v2860 = vmul.f32 %v2824, %v2855
        %v2861 = vmul.f32 %v2825, %v2855
        %v2862 = vmul.f32 %v2826, %v2855
        %v2863 = vmul.f32 %v2827, %v2855
        %v2864 = vmul.f32 %v2828, %v2855
        %v2865 = vmul.f32 %v2829, %v2855
        %v2866 = vmul.f32 %v2830, %v2855
        %v2867 = vmul.f32 %v2831, %v2855
        %v2868 = vmul.f32 %v2832, %v2855
        %v2869 = vmul.f32 %v2833, %v2855
        %v2870 = vmul.f32 %v2834, %v2855
        %v2871 = vmul.f32 %v2835, %v2855
        %v2872 = vmul.f32 %v2836, %v2855
        %v2873 = vmul.f32 %v2837, %v2855
        %v2874 = vmul.f32 %v2838, %v2855
        %v2875 = vmul.f32 %v2839, %v2855
        %v2876 = vmul.f32 %v2840, %v2855
        %v2877 = vmul.f32 %v2841, %v2855
        %v2878 = vmul.f32 %v2842, %v2855
        %v2879 = vmul.f32 %v2843, %v2855
        %v2880 = vmul.f32 %v2844, %v2855
        %v2881 = vmul.f32 %v2845, %v2855
        %v2882 = vmul.f32 %v2846, %v2855
        %v2883 = vmul.f32 %v2847, %v2855
        %v2884 = vmul.f32 %v2848, %v2855
        %v2885 = vmul.f32 %v2849, %v2855
        %v2886 = vmul.f32 %v2850, %v2855
        %v2887 = vmul.f32 %v2851, %v2855
        %v2888 = vadd.f32 %v2788, %v2856
        %v2889 = vadd.f32 %v2789, %v2857
        %v2890 = vadd.f32 %v2790, %v2858
        %v2891 = vadd.f32 %v2791, %v2859
        %v2892 = vadd.f32 %v2792, %v2860
        %v2893 = vadd.f32 %v2793, %v2861
        %v2894 = vadd.f32 %v2794, %v2862
        %v2895 = vadd.f32 %v2795, %v2863
        %v2896 = vadd.f32 %v2796, %v2864
        %v2897 = vadd.f32 %v2797, %v2865
        %v2898 = vadd.f32 %v2798, %v2866
        %v2899 = vadd.f32 %v2799, %v2867
        %v2900 = vadd.f32 %v2800, %v2868
        %v2901 = vadd.f32 %v2801, %v2869
        %v2902 = vadd.f32 %v2802, %v2870
        %v2903 = vadd.f32 %v2803, %v2871
        %v2904 = vadd.f32 %v2804, %v2872
        %v2905 = vadd.f32 %v2805, %v2873
        %v2906 = vadd.f32 %v2806, %v2874
        %v2907 = vadd.f32 %v2807, %v2875
        %v2908 = vadd.f32 %v2808, %v2876
        %v2909 = vadd.f32 %v2809, %v2877
        %v2910 = vadd.f32 %v2810, %v2878
        %v2911 = vadd.f32 %v2811, %v2879
        %v2912 = vadd.f32 %v2812, %v2880
        %v2913 = vadd.f32 %v2813, %v2881
        %v2914 = vadd.f32 %v2814, %v2882
        %v2915 = vadd.f32 %v2815, %v2883
        %v2916 = vadd.f32 %v2816, %v2884
        %v2917 = vadd.f32 %v2817, %v2885
        %v2918 = vadd.f32 %v2818, %v2886
        %v2919 = vadd.f32 %v2819, %v2887
        %v2920 = vld [vmem:[#allocation9] sm:$0xff]
        %v2921 = vld [vmem:[#allocation9 + $0x8] sm:$0xff]
        %v2922 = vld [vmem:[#allocation9 + $0x10] sm:$0xff]
        %v2923 = vld [vmem:[#allocation9 + $0x18] sm:$0xff]
        %v2924 = vld [vmem:[#allocation9 + $0x20] sm:$0xff]
        %v2925 = vld [vmem:[#allocation9 + $0x28] sm:$0xff]
        %v2926 = vld [vmem:[#allocation9 + $0x30] sm:$0xff]
        %v2927 = vld [vmem:[#allocation9 + $0x38] sm:$0xff]
        %v2928 = vld [vmem:[#allocation9 + $0x40] sm:$0xff]
        %v2929 = vld [vmem:[#allocation9 + $0x48] sm:$0xff]
        %v2930 = vld [vmem:[#allocation9 + $0x50] sm:$0xff]
        %v2931 = vld [vmem:[#allocation9 + $0x58] sm:$0xff]
        %v2932 = vld [vmem:[#allocation9 + $0x60] sm:$0xff]
        %v2933 = vld [vmem:[#allocation9 + $0x68] sm:$0xff]
        %v2934 = vld [vmem:[#allocation9 + $0x70] sm:$0xff]
        %v2935 = vld [vmem:[#allocation9 + $0x78] sm:$0xff]
        %2936 = vmatprep.subr.mxu0 0.0
        %2937 = vmatpush1.msra.mxu0 %v2920
        %2938 = vmatprep.subr.mxu0 0.0
        %2939 = vmatpush1.msra.mxu0 %v2921
        %2940 = vmatprep.subr.mxu0 0.0
        %2941 = vmatpush1.msra.mxu0 %v2922
        %2942 = vmatprep.subr.mxu0 0.0
        %2943 = vmatpush1.msra.mxu0 %v2923
        %2944 = vmatprep.subr.mxu0 0.0
        %2945 = vmatpush1.msra.mxu0 %v2924
        %2946 = vmatprep.subr.mxu0 0.0
        %2947 = vmatpush1.msra.mxu0 %v2925
        %2948 = vmatprep.subr.mxu0 0.0
        %2949 = vmatpush1.msra.mxu0 %v2926
        %2950 = vmatprep.subr.mxu0 0.0
        %2951 = vmatpush1.msra.mxu0 %v2927
        %2952 = vmatprep.subr.mxu0 0.0
        %2953 = vmatpush1.msra.mxu0 %v2928
        %2954 = vmatprep.subr.mxu0 0.0
        %2955 = vmatpush1.msra.mxu0 %v2929
        %2956 = vmatprep.subr.mxu0 0.0
        %2957 = vmatpush1.msra.mxu0 %v2930
        %2958 = vmatprep.subr.mxu0 0.0
        %2959 = vmatpush1.msra.mxu0 %v2931
        %2960 = vmatprep.subr.mxu0 0.0
        %2961 = vmatpush1.msra.mxu0 %v2932
        %2962 = vmatprep.subr.mxu0 0.0
        %2963 = vmatpush1.msra.mxu0 %v2933
        %2964 = vmatprep.subr.mxu0 0.0
        %2965 = vmatpush1.msra.mxu0 %v2934
        %2966 = vmatprep.subr.mxu0 0.0
        %2967 = vmatpush1.msra.mxu0 %v2935
        %2968 = vmatprep.subr.mxu0 0.0
        %2969 = vmatpush1.msra.mxu0 0.0
        %2970 = vmatprep.subr.mxu0 0.0
        %2971 = vmatpush1.msra.mxu0 0.0
        %2972 = vmatprep.subr.mxu0 0.0
        %2973 = vmatpush1.msra.mxu0 0.0
        %2974 = vmatprep.subr.mxu0 0.0
        %2975 = vmatpush1.msra.mxu0 0.0
        %2976 = vmatprep.subr.mxu0 0.0
        %2977 = vmatpush1.msra.mxu0 0.0
        %2978 = vmatprep.subr.mxu0 0.0
        %2979 = vmatpush1.msra.mxu0 0.0
        %2980 = vmatprep.subr.mxu0 0.0
        %2981 = vmatpush1.msra.mxu0 0.0
        %2982 = vmatprep.subr.mxu0 0.0
        %2983 = vmatpush1.msra.mxu0 0.0
        %2984 = vmatprep.subr.mxu0 0.0
        %2985 = vmatpush1.msra.mxu0 0.0
        %2986 = vmatprep.subr.mxu0 0.0
        %2987 = vmatpush1.msra.mxu0 0.0
        %2988 = vmatprep.subr.mxu0 0.0
        %2989 = vmatpush1.msra.mxu0 0.0
        %2990 = vmatprep.subr.mxu0 0.0
        %2991 = vmatpush1.msra.mxu0 0.0
        %2992 = vmatprep.subr.mxu0 0.0
        %2993 = vmatpush1.msra.mxu0 0.0
        %2994 = vmatprep.subr.mxu0 0.0
        %2995 = vmatpush1.msra.mxu0 0.0
        %2996 = vmatprep.subr.mxu0 0.0
        %2997 = vmatpush1.msra.mxu0 0.0
        %2998 = vmatprep.subr.mxu0 0.0
        %2999 = vmatpush1.msra.mxu0 0.0
        %3000 = vmatprep.mubr.f32.mxu0 0.0
        %3001 = vmatmul.mubr.f32.gmra.mrb[0].mxu0 %v2888
        %v3002 = vpop.f32.mrb[0].mxu0
        %v3003 = vadd.f32 0.0, %v3002
        %v3004 = vpop.f32.mrb[0].mxu0
        %3005 = vmatprep.mubr.f32.mxu0 0.0
        %3006 = vmatmul.mubr.f32.gmra.mrb[0].mxu0 %v2889
        %v3007 = vpop.f32.mrb[0].mxu0
        %v3008 = vadd.f32 0.0, %v3007
        %v3009 = vpop.f32.mrb[0].mxu0
        %3010 = vmatprep.mubr.f32.mxu0 0.0
        %3011 = vmatmul.mubr.f32.gmra.mrb[0].mxu0 %v2890
        %v3012 = vpop.f32.mrb[0].mxu0
        %v3013 = vadd.f32 0.0, %v3012
        %v3014 = vpop.f32.mrb[0].mxu0
        %3015 = vmatprep.mubr.f32.mxu0 0.0
        %3016 = vmatmul.mubr.f32.gmra.mrb[0].mxu0 %v2891
        %v3017 = vpop.f32.mrb[0].mxu0
        %v3018 = vadd.f32 0.0, %v3017
        %v3019 = vpop.f32.mrb[0].mxu0
        %3020 = vmatprep.mubr.f32.mxu0 0.0
        %3021 = vmatmul.mubr.f32.gmra.mrb[0].mxu0 %v2892
        %v3022 = vpop.f32.mrb[0].mxu0
        %v3023 = vadd.f32 0.0, %v3022
        %v3024 = vpop.f32.mrb[0].mxu0
        %3025 = vmatprep.mubr.f32.mxu0 0.0
        %3026 = vmatmul.mubr.f32.gmra.mrb[0].mxu0 %v2893
        %v3027 = vpop.f32.mrb[0].mxu0
        %v3028 = vadd.f32 0.0, %v3027
        %v3029 = vpop.f32.mrb[0].mxu0
        %3030 = vmatprep.mubr.f32.mxu0 0.0
        %3031 = vmatmul.mubr.f32.gmra.mrb[0].mxu0 %v2894
        %v3032 = vpop.f32.mrb[0].mxu0
        %v3033 = vadd.f32 0.0, %v3032
        %v3034 = vpop.f32.mrb[0].mxu0
        %3035 = vmatprep.mubr.f32.mxu0 0.0
        %3036 = vmatmul.mubr.f32.gmra.mrb[0].mxu0 %v2895
        %v3037 = vpop.f32.mrb[0].mxu0
        %v3038 = vadd.f32 0.0, %v3037
        %v3039 = vpop.f32.mrb[0].mxu0
        %3040 = vmatprep.mubr.f32.mxu0 0.0
        %3041 = vmatmul.mubr.f32.gmra.mrb[0].mxu0 %v2896
        %v3042 = vpop.f32.mrb[0].mxu0
        %v3043 = vadd.f32 0.0, %v3042
        %v3044 = vpop.f32.mrb[0].mxu0
        %3045 = vmatprep.mubr.f32.mxu0 0.0
        %3046 = vmatmul.mubr.f32.gmra.mrb[0].mxu0 %v2897
        %v3047 = vpop.f32.mrb[0].mxu0
        %v3048 = vadd.f32 0.0, %v3047
        %v3049 = vpop.f32.mrb[0].mxu0
        %3050 = vmatprep.mubr.f32.mxu0 0.0
        %3051 = vmatmul.mubr.f32.gmra.mrb[0].mxu0 %v2898
        %v3052 = vpop.f32.mrb[0].mxu0
        %v3053 = vadd.f32 0.0, %v3052
        %v3054 = vpop.f32.mrb[0].mxu0
        %3055 = vmatprep.mubr.f32.mxu0 0.0
        %3056 = vmatmul.mubr.f32.gmra.mrb[0].mxu0 %v2899
        %v3057 = vpop.f32.mrb[0].mxu0
        %v3058 = vadd.f32 0.0, %v3057
        %v3059 = vpop.f32.mrb[0].mxu0
        %3060 = vmatprep.mubr.f32.mxu0 0.0
        %3061 = vmatmul.mubr.f32.gmra.mrb[0].mxu0 %v2900
        %v3062 = vpop.f32.mrb[0].mxu0
        %v3063 = vadd.f32 0.0, %v3062
        %v3064 = vpop.f32.mrb[0].mxu0
        %3065 = vmatprep.mubr.f32.mxu0 0.0
        %3066 = vmatmul.mubr.f32.gmra.mrb[0].mxu0 %v2901
        %v3067 = vpop.f32.mrb[0].mxu0
        %v3068 = vadd.f32 0.0, %v3067
        %v3069 = vpop.f32.mrb[0].mxu0
        %3070 = vmatprep.mubr.f32.mxu0 0.0
        %3071 = vmatmul.mubr.f32.gmra.mrb[0].mxu0 %v2902
        %v3072 = vpop.f32.mrb[0].mxu0
        %v3073 = vadd.f32 0.0, %v3072
        %v3074 = vpop.f32.mrb[0].mxu0
        %3075 = vmatprep.mubr.f32.mxu0 0.0
        %3076 = vmatmul.mubr.f32.gmra.mrb[0].mxu0 %v2903
        %v3077 = vpop.f32.mrb[0].mxu0
        %v3078 = vadd.f32 0.0, %v3077
        %v3079 = vpop.f32.mrb[0].mxu0
        %3080 = vmatprep.mubr.f32.mxu0 0.0
        %3081 = vmatmul.mubr.f32.gmra.mrb[0].mxu0 %v2904
        %v3082 = vpop.f32.mrb[0].mxu0
        %v3083 = vadd.f32 0.0, %v3082
        %v3084 = vpop.f32.mrb[0].mxu0
        %3085 = vmatprep.mubr.f32.mxu0 0.0
        %3086 = vmatmul.mubr.f32.gmra.mrb[0].mxu0 %v2905
        %v3087 = vpop.f32.mrb[0].mxu0
        %v3088 = vadd.f32 0.0, %v3087
        %v3089 = vpop.f32.mrb[0].mxu0
        %3090 = vmatprep.mubr.f32.mxu0 0.0
        %3091 = vmatmul.mubr.f32.gmra.mrb[0].mxu0 %v2906
        %v3092 = vpop.f32.mrb[0].mxu0
        %v3093 = vadd.f32 0.0, %v3092
        %v3094 = vpop.f32.mrb[0].mxu0
        %3095 = vmatprep.mubr.f32.mxu0 0.0
        %3096 = vmatmul.mubr.f32.gmra.mrb[0].mxu0 %v2907
        %v3097 = vpop.f32.mrb[0].mxu0
        %v3098 = vadd.f32 0.0, %v3097
        %v3099 = vpop.f32.mrb[0].mxu0
        %3100 = vmatprep.mubr.f32.mxu0 0.0
        %3101 = vmatmul.mubr.f32.gmra.mrb[0].mxu0 %v2908
        %v3102 = vpop.f32.mrb[0].mxu0
        %v3103 = vadd.f32 0.0, %v3102
        %v3104 = vpop.f32.mrb[0].mxu0
        %3105 = vmatprep.mubr.f32.mxu0 0.0
        %3106 = vmatmul.mubr.f32.gmra.mrb[0].mxu0 %v2909
        %v3107 = vpop.f32.mrb[0].mxu0
        %v3108 = vadd.f32 0.0, %v3107
        %v3109 = vpop.f32.mrb[0].mxu0
        %3110 = vmatprep.mubr.f32.mxu0 0.0
        %3111 = vmatmul.mubr.f32.gmra.mrb[0].mxu0 %v2910
        %v3112 = vpop.f32.mrb[0].mxu0
        %v3113 = vadd.f32 0.0, %v3112
        %v3114 = vpop.f32.mrb[0].mxu0
        %3115 = vmatprep.mubr.f32.mxu0 0.0
        %3116 = vmatmul.mubr.f32.gmra.mrb[0].mxu0 %v2911
        %v3117 = vpop.f32.mrb[0].mxu0
        %v3118 = vadd.f32 0.0, %v3117
        %v3119 = vpop.f32.mrb[0].mxu0
        %3120 = vmatprep.mubr.f32.mxu0 0.0
        %3121 = vmatmul.mubr.f32.gmra.mrb[0].mxu0 %v2912
        %v3122 = vpop.f32.mrb[0].mxu0
        %v3123 = vadd.f32 0.0, %v3122
        %v3124 = vpop.f32.mrb[0].mxu0
        %3125 = vmatprep.mubr.f32.mxu0 0.0
        %3126 = vmatmul.mubr.f32.gmra.mrb[0].mxu0 %v2913
        %v3127 = vpop.f32.mrb[0].mxu0
        %v3128 = vadd.f32 0.0, %v3127
        %v3129 = vpop.f32.mrb[0].mxu0
        %3130 = vmatprep.mubr.f32.mxu0 0.0
        %3131 = vmatmul.mubr.f32.gmra.mrb[0].mxu0 %v2914
        %v3132 = vpop.f32.mrb[0].mxu0
        %v3133 = vadd.f32 0.0, %v3132
        %v3134 = vpop.f32.mrb[0].mxu0
        %3135 = vmatprep.mubr.f32.mxu0 0.0
        %3136 = vmatmul.mubr.f32.gmra.mrb[0].mxu0 %v2915
        %v3137 = vpop.f32.mrb[0].mxu0
        %v3138 = vadd.f32 0.0, %v3137
        %v3139 = vpop.f32.mrb[0].mxu0
        %3140 = vmatprep.mubr.f32.mxu0 0.0
        %3141 = vmatmul.mubr.f32.gmra.mrb[0].mxu0 %v2916
        %v3142 = vpop.f32.mrb[0].mxu0
        %v3143 = vadd.f32 0.0, %v3142
        %v3144 = vpop.f32.mrb[0].mxu0
        %3145 = vmatprep.mubr.f32.mxu0 0.0
        %3146 = vmatmul.mubr.f32.gmra.mrb[0].mxu0 %v2917
        %v3147 = vpop.f32.mrb[0].mxu0
        %v3148 = vadd.f32 0.0, %v3147
        %v3149 = vpop.f32.mrb[0].mxu0
        %3150 = vmatprep.mubr.f32.mxu0 0.0
        %3151 = vmatmul.mubr.f32.gmra.mrb[0].mxu0 %v2918
        %v3152 = vpop.f32.mrb[0].mxu0
        %v3153 = vadd.f32 0.0, %v3152
        %v3154 = vpop.f32.mrb[0].mxu0
        %3155 = vmatprep.mubr.f32.mxu0 0.0
        %3156 = vmatmul.mubr.f32.gmra.mrb[0].mxu0 %v2919
        %v3157 = vpop.f32.mrb[0].mxu0
        %v3158 = vadd.f32 0.0, %v3157
        %v3159 = vpop.f32.mrb[0].mxu0
        %3160 = vdwg.mxu0
        %v3161 = vld [vmem:[#allocation11] sm:$0x1]
        %v3163 = vlaneseq
        %v3164 = vshrl.u32 %v3163, 7
        %v3165 = vsub.s32 0, %v3164
        %v3166 = vrot.slane %v3161, %v3165
        %v3168 = vmul.f32 %v3003, %v3166
        %v3169 = vmul.f32 %v3008, %v3166
        %v3170 = vmul.f32 %v3013, %v3166
        %v3171 = vmul.f32 %v3018, %v3166
        %v3172 = vmul.f32 %v3023, %v3166
        %v3173 = vmul.f32 %v3028, %v3166
        %v3174 = vmul.f32 %v3033, %v3166
        %v3175 = vmul.f32 %v3038, %v3166
        %v3176 = vmul.f32 %v3043, %v3166
        %v3177 = vmul.f32 %v3048, %v3166
        %v3178 = vmul.f32 %v3053, %v3166
        %v3179 = vmul.f32 %v3058, %v3166
        %v3180 = vmul.f32 %v3063, %v3166
        %v3181 = vmul.f32 %v3068, %v3166
        %v3182 = vmul.f32 %v3073, %v3166
        %v3183 = vmul.f32 %v3078, %v3166
        %v3184 = vmul.f32 %v3083, %v3166
        %v3185 = vmul.f32 %v3088, %v3166
        %v3186 = vmul.f32 %v3093, %v3166
        %v3187 = vmul.f32 %v3098, %v3166
        %v3188 = vmul.f32 %v3103, %v3166
        %v3189 = vmul.f32 %v3108, %v3166
        %v3190 = vmul.f32 %v3113, %v3166
        %v3191 = vmul.f32 %v3118, %v3166
        %v3192 = vmul.f32 %v3123, %v3166
        %v3193 = vmul.f32 %v3128, %v3166
        %v3194 = vmul.f32 %v3133, %v3166
        %v3195 = vmul.f32 %v3138, %v3166
        %v3196 = vmul.f32 %v3143, %v3166
        %v3197 = vmul.f32 %v3148, %v3166
        %v3198 = vmul.f32 %v3153, %v3166
        %v3199 = vmul.f32 %v3158, %v3166
        %v3200 = vld [vmem:[%s8] sm:$0x1]
        %v3202 = vlaneseq
        %v3203 = vshrl.u32 %v3202, 7
        %v3204 = vsub.s32 0, %v3203
        %v3205 = vrot.slane %v3200, %v3204
        %v3207 = vadd.f32 %v3168, %v3205
        %v3208 = vadd.f32 %v3169, %v3205
        %v3209 = vadd.f32 %v3170, %v3205
        %v3210 = vadd.f32 %v3171, %v3205
        %v3211 = vadd.f32 %v3172, %v3205
        %v3212 = vadd.f32 %v3173, %v3205
        %v3213 = vadd.f32 %v3174, %v3205
        %v3214 = vadd.f32 %v3175, %v3205
        %v3215 = vadd.f32 %v3176, %v3205
        %v3216 = vadd.f32 %v3177, %v3205
        %v3217 = vadd.f32 %v3178, %v3205
        %v3218 = vadd.f32 %v3179, %v3205
        %v3219 = vadd.f32 %v3180, %v3205
        %v3220 = vadd.f32 %v3181, %v3205
        %v3221 = vadd.f32 %v3182, %v3205
        %v3222 = vadd.f32 %v3183, %v3205
        %v3223 = vadd.f32 %v3184, %v3205
        %v3224 = vadd.f32 %v3185, %v3205
        %v3225 = vadd.f32 %v3186, %v3205
        %v3226 = vadd.f32 %v3187, %v3205
        %v3227 = vadd.f32 %v3188, %v3205
        %v3228 = vadd.f32 %v3189, %v3205
        %v3229 = vadd.f32 %v3190, %v3205
        %v3230 = vadd.f32 %v3191, %v3205
        %v3231 = vadd.f32 %v3192, %v3205
        %v3232 = vadd.f32 %v3193, %v3205
        %v3233 = vadd.f32 %v3194, %v3205
        %v3234 = vadd.f32 %v3195, %v3205
        %v3235 = vadd.f32 %v3196, %v3205
        %v3236 = vadd.f32 %v3197, %v3205
        %v3237 = vadd.f32 %v3198, %v3205
        %v3238 = vadd.f32 %v3199, %v3205
        %3239 = vst [vmem:[%s761 + $0x8] sm:$0xff] %v3207
        %3240 = vst [vmem:[%s761 + $0x10] sm:$0xff] %v3208
        %3241 = vst [vmem:[%s761 + $0x28] sm:$0xff] %v3209
        %3242 = vst [vmem:[%s761 + $0x30] sm:$0xff] %v3210
        %3243 = vst [vmem:[%s761 + $0x48] sm:$0xff] %v3211
        %3244 = vst [vmem:[%s761 + $0x50] sm:$0xff] %v3212
        %3245 = vst [vmem:[%s761 + $0x68] sm:$0xff] %v3213
        %3246 = vst [vmem:[%s761 + $0x70] sm:$0xff] %v3214
        %3247 = vst [vmem:[%s761 + $0x88] sm:$0xff] %v3215
        %3248 = vst [vmem:[%s761 + $0x90] sm:$0xff] %v3216
        %3249 = vst [vmem:[%s761 + $0xa8] sm:$0xff] %v3217
        %3250 = vst [vmem:[%s761 + $0xb0] sm:$0xff] %v3218
        %3251 = vst [vmem:[%s761 + $0xc8] sm:$0xff] %v3219
        %3252 = vst [vmem:[%s761 + $0xd0] sm:$0xff] %v3220
        %3253 = vst [vmem:[%s761 + $0xe8] sm:$0xff] %v3221
        %3254 = vst [vmem:[%s761 + $0xf0] sm:$0xff] %v3222
        %3255 = vst [vmem:[%s761 + $0x108] sm:$0xff] %v3223
        %3256 = vst [vmem:[%s761 + $0x110] sm:$0xff] %v3224
        %3257 = vst [vmem:[%s761 + $0x128] sm:$0xff] %v3225
        %3258 = vst [vmem:[%s761 + $0x130] sm:$0xff] %v3226
        %3259 = vst [vmem:[%s761 + $0x148] sm:$0xff] %v3227
        %3260 = vst [vmem:[%s761 + $0x150] sm:$0xff] %v3228
        %3261 = vst [vmem:[%s761 + $0x168] sm:$0xff] %v3229
        %3262 = vst [vmem:[%s761 + $0x170] sm:$0xff] %v3230
        %3263 = vst [vmem:[%s761 + $0x188] sm:$0xff] %v3231
        %3264 = vst [vmem:[%s761 + $0x190] sm:$0xff] %v3232
        %3265 = vst [vmem:[%s761 + $0x1a8] sm:$0xff] %v3233
        %3266 = vst [vmem:[%s761 + $0x1b0] sm:$0xff] %v3234
        %3267 = vst [vmem:[%s761 + $0x1c8] sm:$0xff] %v3235
        %3268 = vst [vmem:[%s761 + $0x1d0] sm:$0xff] %v3236
        %3269 = vst [vmem:[%s761 + $0x1e8] sm:$0xff] %v3237
        %3270 = vst [vmem:[%s761 + $0x1f0] sm:$0xff] %v3238
        %v3271 = vld [vmem:[%s9] sm:$0x7]
        %v3272 = vld [vmem:[%s9 + $0x4] sm:$0x7]
        %v3273 = vld [vmem:[%s9 + $0x8] sm:$0x7]
        %v3274 = vld [vmem:[#allocation2 + $0x7] sm:$0xff]
        %v3275 = vld [vmem:[#allocation2 + $0xf] sm:$0xff]
        %v3276 = vld [vmem:[#allocation2 + $0x27] sm:$0xff]
        %v3277 = vld [vmem:[#allocation2 + $0x2f] sm:$0xff]
        %v3278 = vld [vmem:[#allocation2 + $0x47] sm:$0xff]
        %v3279 = vld [vmem:[#allocation2 + $0x4f] sm:$0xff]
        %v3280 = vld [vmem:[#allocation2 + $0x67] sm:$0xff]
        %v3281 = vld [vmem:[#allocation2 + $0x6f] sm:$0xff]
        %v3282 = vld [vmem:[#allocation2 + $0x87] sm:$0xff]
        %v3283 = vld [vmem:[#allocation2 + $0x8f] sm:$0xff]
        %v3284 = vld [vmem:[#allocation2 + $0xa7] sm:$0xff]
        %v3285 = vld [vmem:[#allocation2 + $0xaf] sm:$0xff]
        %v3286 = vld [vmem:[#allocation2 + $0xc7] sm:$0xff]
        %v3287 = vld [vmem:[#allocation2 + $0xcf] sm:$0xff]
        %v3288 = vld [vmem:[#allocation2 + $0xe7] sm:$0xff]
        %v3289 = vld [vmem:[#allocation2 + $0xef] sm:$0xff]
        %v3290 = vld [vmem:[#allocation2 + $0x107] sm:$0xff]
        %v3291 = vld [vmem:[#allocation2 + $0x10f] sm:$0xff]
        %v3292 = vld [vmem:[#allocation2 + $0x127] sm:$0xff]
        %v3293 = vld [vmem:[#allocation2 + $0x12f] sm:$0xff]
        %v3294 = vld [vmem:[#allocation2 + $0x147] sm:$0xff]
        %v3295 = vld [vmem:[#allocation2 + $0x14f] sm:$0xff]
        %v3296 = vld [vmem:[#allocation2 + $0x167] sm:$0xff]
        %v3297 = vld [vmem:[#allocation2 + $0x16f] sm:$0xff]
        %v3298 = vld [vmem:[#allocation2 + $0x187] sm:$0xff]
        %v3299 = vld [vmem:[#allocation2 + $0x18f] sm:$0xff]
        %v3300 = vld [vmem:[#allocation2 + $0x1a7] sm:$0xff]
        %v3301 = vld [vmem:[#allocation2 + $0x1af] sm:$0xff]
        %v3302 = vld [vmem:[#allocation2 + $0x1c7] sm:$0xff]
        %v3303 = vld [vmem:[#allocation2 + $0x1cf] sm:$0xff]
        %v3304 = vld [vmem:[#allocation2 + $0x1e7] sm:$0xff]
        %v3305 = vld [vmem:[#allocation2 + $0x1ef] sm:$0xff]
        %v3306 = vlaneseq
        %v3307 = vshrl.u32 %v3306, 7
        %v3308 = vsub.s32 0, %v3307
        %v3309 = vrot.slane %v3271, %v3308
        %v3310 = vmul.f32 %v3274, %v3309
        %v3311 = vmul.f32 %v3275, %v3309
        %v3312 = vmul.f32 %v3276, %v3309
        %v3313 = vmul.f32 %v3277, %v3309
        %v3314 = vmul.f32 %v3278, %v3309
        %v3315 = vmul.f32 %v3279, %v3309
        %v3316 = vmul.f32 %v3280, %v3309
        %v3317 = vmul.f32 %v3281, %v3309
        %v3318 = vmul.f32 %v3282, %v3309
        %v3319 = vmul.f32 %v3283, %v3309
        %v3320 = vmul.f32 %v3284, %v3309
        %v3321 = vmul.f32 %v3285, %v3309
        %v3322 = vmul.f32 %v3286, %v3309
        %v3323 = vmul.f32 %v3287, %v3309
        %v3324 = vmul.f32 %v3288, %v3309
        %v3325 = vmul.f32 %v3289, %v3309
        %v3326 = vmul.f32 %v3290, %v3309
        %v3327 = vmul.f32 %v3291, %v3309
        %v3328 = vmul.f32 %v3292, %v3309
        %v3329 = vmul.f32 %v3293, %v3309
        %v3330 = vmul.f32 %v3294, %v3309
        %v3331 = vmul.f32 %v3295, %v3309
        %v3332 = vmul.f32 %v3296, %v3309
        %v3333 = vmul.f32 %v3297, %v3309
        %v3334 = vmul.f32 %v3298, %v3309
        %v3335 = vmul.f32 %v3299, %v3309
        %v3336 = vmul.f32 %v3300, %v3309
        %v3337 = vmul.f32 %v3301, %v3309
        %v3338 = vmul.f32 %v3302, %v3309
        %v3339 = vmul.f32 %v3303, %v3309
        %v3340 = vmul.f32 %v3304, %v3309
        %v3341 = vmul.f32 %v3305, %v3309
        %v3342 = vld [vmem:[#allocation2 + $0x8] sm:$0xff]
        %v3343 = vld [vmem:[#allocation2 + $0x10] sm:$0xff]
        %v3344 = vld [vmem:[#allocation2 + $0x28] sm:$0xff]
        %v3345 = vld [vmem:[#allocation2 + $0x30] sm:$0xff]
        %v3346 = vld [vmem:[#allocation2 + $0x48] sm:$0xff]
        %v3347 = vld [vmem:[#allocation2 + $0x50] sm:$0xff]
        %v3348 = vld [vmem:[#allocation2 + $0x68] sm:$0xff]
        %v3349 = vld [vmem:[#allocation2 + $0x70] sm:$0xff]
        %v3350 = vld [vmem:[#allocation2 + $0x88] sm:$0xff]
        %v3351 = vld [vmem:[#allocation2 + $0x90] sm:$0xff]
        %v3352 = vld [vmem:[#allocation2 + $0xa8] sm:$0xff]
        %v3353 = vld [vmem:[#allocation2 + $0xb0] sm:$0xff]
        %v3354 = vld [vmem:[#allocation2 + $0xc8] sm:$0xff]
        %v3355 = vld [vmem:[#allocation2 + $0xd0] sm:$0xff]
        %v3356 = vld [vmem:[#allocation2 + $0xe8] sm:$0xff]
        %v3357 = vld [vmem:[#allocation2 + $0xf0] sm:$0xff]
        %v3358 = vld [vmem:[#allocation2 + $0x108] sm:$0xff]
        %v3359 = vld [vmem:[#allocation2 + $0x110] sm:$0xff]
        %v3360 = vld [vmem:[#allocation2 + $0x128] sm:$0xff]
        %v3361 = vld [vmem:[#allocation2 + $0x130] sm:$0xff]
        %v3362 = vld [vmem:[#allocation2 + $0x148] sm:$0xff]
        %v3363 = vld [vmem:[#allocation2 + $0x150] sm:$0xff]
        %v3364 = vld [vmem:[#allocation2 + $0x168] sm:$0xff]
        %v3365 = vld [vmem:[#allocation2 + $0x170] sm:$0xff]
        %v3366 = vld [vmem:[#allocation2 + $0x188] sm:$0xff]
        %v3367 = vld [vmem:[#allocation2 + $0x190] sm:$0xff]
        %v3368 = vld [vmem:[#allocation2 + $0x1a8] sm:$0xff]
        %v3369 = vld [vmem:[#allocation2 + $0x1b0] sm:$0xff]
        %v3370 = vld [vmem:[#allocation2 + $0x1c8] sm:$0xff]
        %v3371 = vld [vmem:[#allocation2 + $0x1d0] sm:$0xff]
        %v3372 = vld [vmem:[#allocation2 + $0x1e8] sm:$0xff]
        %v3373 = vld [vmem:[#allocation2 + $0x1f0] sm:$0xff]
        %v3374 = vlaneseq
        %v3375 = vshrl.u32 %v3374, 7
        %v3376 = vsub.s32 1, %v3375
        %v3377 = vrot.slane %v3271, %v3376
        %v3378 = vmul.f32 %v3342, %v3377
        %v3379 = vmul.f32 %v3343, %v3377
        %v3380 = vmul.f32 %v3344, %v3377
        %v3381 = vmul.f32 %v3345, %v3377
        %v3382 = vmul.f32 %v3346, %v3377
        %v3383 = vmul.f32 %v3347, %v3377
        %v3384 = vmul.f32 %v3348, %v3377
        %v3385 = vmul.f32 %v3349, %v3377
        %v3386 = vmul.f32 %v3350, %v3377
        %v3387 = vmul.f32 %v3351, %v3377
        %v3388 = vmul.f32 %v3352, %v3377
        %v3389 = vmul.f32 %v3353, %v3377
        %v3390 = vmul.f32 %v3354, %v3377
        %v3391 = vmul.f32 %v3355, %v3377
        %v3392 = vmul.f32 %v3356, %v3377
        %v3393 = vmul.f32 %v3357, %v3377
        %v3394 = vmul.f32 %v3358, %v3377
        %v3395 = vmul.f32 %v3359, %v3377
        %v3396 = vmul.f32 %v3360, %v3377
        %v3397 = vmul.f32 %v3361, %v3377
        %v3398 = vmul.f32 %v3362, %v3377
        %v3399 = vmul.f32 %v3363, %v3377
        %v3400 = vmul.f32 %v3364, %v3377
        %v3401 = vmul.f32 %v3365, %v3377
        %v3402 = vmul.f32 %v3366, %v3377
        %v3403 = vmul.f32 %v3367, %v3377
        %v3404 = vmul.f32 %v3368, %v3377
        %v3405 = vmul.f32 %v3369, %v3377
        %v3406 = vmul.f32 %v3370, %v3377
        %v3407 = vmul.f32 %v3371, %v3377
        %v3408 = vmul.f32 %v3372, %v3377
        %v3409 = vmul.f32 %v3373, %v3377
        %v3410 = vadd.f32 %v3310, %v3378
        %v3411 = vadd.f32 %v3311, %v3379
        %v3412 = vadd.f32 %v3312, %v3380
        %v3413 = vadd.f32 %v3313, %v3381
        %v3414 = vadd.f32 %v3314, %v3382
        %v3415 = vadd.f32 %v3315, %v3383
        %v3416 = vadd.f32 %v3316, %v3384
        %v3417 = vadd.f32 %v3317, %v3385
        %v3418 = vadd.f32 %v3318, %v3386
        %v3419 = vadd.f32 %v3319, %v3387
        %v3420 = vadd.f32 %v3320, %v3388
        %v3421 = vadd.f32 %v3321, %v3389
        %v3422 = vadd.f32 %v3322, %v3390
        %v3423 = vadd.f32 %v3323, %v3391
        %v3424 = vadd.f32 %v3324, %v3392
        %v3425 = vadd.f32 %v3325, %v3393
        %v3426 = vadd.f32 %v3326, %v3394
        %v3427 = vadd.f32 %v3327, %v3395
        %v3428 = vadd.f32 %v3328, %v3396
        %v3429 = vadd.f32 %v3329, %v3397
        %v3430 = vadd.f32 %v3330, %v3398
        %v3431 = vadd.f32 %v3331, %v3399
        %v3432 = vadd.f32 %v3332, %v3400
        %v3433 = vadd.f32 %v3333, %v3401
        %v3434 = vadd.f32 %v3334, %v3402
        %v3435 = vadd.f32 %v3335, %v3403
        %v3436 = vadd.f32 %v3336, %v3404
        %v3437 = vadd.f32 %v3337, %v3405
        %v3438 = vadd.f32 %v3338, %v3406
        %v3439 = vadd.f32 %v3339, %v3407
        %v3440 = vadd.f32 %v3340, %v3408
        %v3441 = vadd.f32 %v3341, %v3409
        %v3442 = vld [vmem:[#allocation2 + $0x9] sm:$0xff]
        %v3443 = vld [vmem:[#allocation2 + $0x11] sm:$0xff]
        %v3444 = vld [vmem:[#allocation2 + $0x29] sm:$0xff]
        %v3445 = vld [vmem:[#allocation2 + $0x31] sm:$0xff]
        %v3446 = vld [vmem:[#allocation2 + $0x49] sm:$0xff]
        %v3447 = vld [vmem:[#allocation2 + $0x51] sm:$0xff]
        %v3448 = vld [vmem:[#allocation2 + $0x69] sm:$0xff]
        %v3449 = vld [vmem:[#allocation2 + $0x71] sm:$0xff]
        %v3450 = vld [vmem:[#allocation2 + $0x89] sm:$0xff]
        %v3451 = vld [vmem:[#allocation2 + $0x91] sm:$0xff]
        %v3452 = vld [vmem:[#allocation2 + $0xa9] sm:$0xff]
        %v3453 = vld [vmem:[#allocation2 + $0xb1] sm:$0xff]
        %v3454 = vld [vmem:[#allocation2 + $0xc9] sm:$0xff]
        %v3455 = vld [vmem:[#allocation2 + $0xd1] sm:$0xff]
        %v3456 = vld [vmem:[#allocation2 + $0xe9] sm:$0xff]
        %v3457 = vld [vmem:[#allocation2 + $0xf1] sm:$0xff]
        %v3458 = vld [vmem:[#allocation2 + $0x109] sm:$0xff]
        %v3459 = vld [vmem:[#allocation2 + $0x111] sm:$0xff]
        %v3460 = vld [vmem:[#allocation2 + $0x129] sm:$0xff]
        %v3461 = vld [vmem:[#allocation2 + $0x131] sm:$0xff]
        %v3462 = vld [vmem:[#allocation2 + $0x149] sm:$0xff]
        %v3463 = vld [vmem:[#allocation2 + $0x151] sm:$0xff]
        %v3464 = vld [vmem:[#allocation2 + $0x169] sm:$0xff]
        %v3465 = vld [vmem:[#allocation2 + $0x171] sm:$0xff]
        %v3466 = vld [vmem:[#allocation2 + $0x189] sm:$0xff]
        %v3467 = vld [vmem:[#allocation2 + $0x191] sm:$0xff]
        %v3468 = vld [vmem:[#allocation2 + $0x1a9] sm:$0xff]
        %v3469 = vld [vmem:[#allocation2 + $0x1b1] sm:$0xff]
        %v3470 = vld [vmem:[#allocation2 + $0x1c9] sm:$0xff]
        %v3471 = vld [vmem:[#allocation2 + $0x1d1] sm:$0xff]
        %v3472 = vld [vmem:[#allocation2 + $0x1e9] sm:$0xff]
        %v3473 = vld [vmem:[#allocation2 + $0x1f1] sm:$0xff]
        %v3474 = vlaneseq
        %v3475 = vshrl.u32 %v3474, 7
        %v3476 = vsub.s32 2, %v3475
        %v3477 = vrot.slane %v3271, %v3476
        %v3478 = vmul.f32 %v3442, %v3477
        %v3479 = vmul.f32 %v3443, %v3477
        %v3480 = vmul.f32 %v3444, %v3477
        %v3481 = vmul.f32 %v3445, %v3477
        %v3482 = vmul.f32 %v3446, %v3477
        %v3483 = vmul.f32 %v3447, %v3477
        %v3484 = vmul.f32 %v3448, %v3477
        %v3485 = vmul.f32 %v3449, %v3477
        %v3486 = vmul.f32 %v3450, %v3477
        %v3487 = vmul.f32 %v3451, %v3477
        %v3488 = vmul.f32 %v3452, %v3477
        %v3489 = vmul.f32 %v3453, %v3477
        %v3490 = vmul.f32 %v3454, %v3477
        %v3491 = vmul.f32 %v3455, %v3477
        %v3492 = vmul.f32 %v3456, %v3477
        %v3493 = vmul.f32 %v3457, %v3477
        %v3494 = vmul.f32 %v3458, %v3477
        %v3495 = vmul.f32 %v3459, %v3477
        %v3496 = vmul.f32 %v3460, %v3477
        %v3497 = vmul.f32 %v3461, %v3477
        %v3498 = vmul.f32 %v3462, %v3477
        %v3499 = vmul.f32 %v3463, %v3477
        %v3500 = vmul.f32 %v3464, %v3477
        %v3501 = vmul.f32 %v3465, %v3477
        %v3502 = vmul.f32 %v3466, %v3477
        %v3503 = vmul.f32 %v3467, %v3477
        %v3504 = vmul.f32 %v3468, %v3477
        %v3505 = vmul.f32 %v3469, %v3477
        %v3506 = vmul.f32 %v3470, %v3477
        %v3507 = vmul.f32 %v3471, %v3477
        %v3508 = vmul.f32 %v3472, %v3477
        %v3509 = vmul.f32 %v3473, %v3477
        %v3510 = vadd.f32 %v3410, %v3478
        %v3511 = vadd.f32 %v3411, %v3479
        %v3512 = vadd.f32 %v3412, %v3480
        %v3513 = vadd.f32 %v3413, %v3481
        %v3514 = vadd.f32 %v3414, %v3482
        %v3515 = vadd.f32 %v3415, %v3483
        %v3516 = vadd.f32 %v3416, %v3484
        %v3517 = vadd.f32 %v3417, %v3485
        %v3518 = vadd.f32 %v3418, %v3486
        %v3519 = vadd.f32 %v3419, %v3487
        %v3520 = vadd.f32 %v3420, %v3488
        %v3521 = vadd.f32 %v3421, %v3489
        %v3522 = vadd.f32 %v3422, %v3490
        %v3523 = vadd.f32 %v3423, %v3491
        %v3524 = vadd.f32 %v3424, %v3492
        %v3525 = vadd.f32 %v3425, %v3493
        %v3526 = vadd.f32 %v3426, %v3494
        %v3527 = vadd.f32 %v3427, %v3495
        %v3528 = vadd.f32 %v3428, %v3496
        %v3529 = vadd.f32 %v3429, %v3497
        %v3530 = vadd.f32 %v3430, %v3498
        %v3531 = vadd.f32 %v3431, %v3499
        %v3532 = vadd.f32 %v3432, %v3500
        %v3533 = vadd.f32 %v3433, %v3501
        %v3534 = vadd.f32 %v3434, %v3502
        %v3535 = vadd.f32 %v3435, %v3503
        %v3536 = vadd.f32 %v3436, %v3504
        %v3537 = vadd.f32 %v3437, %v3505
        %v3538 = vadd.f32 %v3438, %v3506
        %v3539 = vadd.f32 %v3439, %v3507
        %v3540 = vadd.f32 %v3440, %v3508
        %v3541 = vadd.f32 %v3441, %v3509
        %v3542 = vld [vmem:[%s761 + $0x7] sm:$0xff]
        %v3543 = vld [vmem:[%s761 + $0xf] sm:$0xff]
        %v3544 = vld [vmem:[%s761 + $0x27] sm:$0xff]
        %v3545 = vld [vmem:[%s761 + $0x2f] sm:$0xff]
        %v3546 = vld [vmem:[%s761 + $0x47] sm:$0xff]
        %v3547 = vld [vmem:[%s761 + $0x4f] sm:$0xff]
        %v3548 = vld [vmem:[%s761 + $0x67] sm:$0xff]
        %v3549 = vld [vmem:[%s761 + $0x6f] sm:$0xff]
        %v3550 = vld [vmem:[%s761 + $0x87] sm:$0xff]
        %v3551 = vld [vmem:[%s761 + $0x8f] sm:$0xff]
        %v3552 = vld [vmem:[%s761 + $0xa7] sm:$0xff]
        %v3553 = vld [vmem:[%s761 + $0xaf] sm:$0xff]
        %v3554 = vld [vmem:[%s761 + $0xc7] sm:$0xff]
        %v3555 = vld [vmem:[%s761 + $0xcf] sm:$0xff]
        %v3556 = vld [vmem:[%s761 + $0xe7] sm:$0xff]
        %v3557 = vld [vmem:[%s761 + $0xef] sm:$0xff]
        %v3558 = vld [vmem:[%s761 + $0x107] sm:$0xff]
        %v3559 = vld [vmem:[%s761 + $0x10f] sm:$0xff]
        %v3560 = vld [vmem:[%s761 + $0x127] sm:$0xff]
        %v3561 = vld [vmem:[%s761 + $0x12f] sm:$0xff]
        %v3562 = vld [vmem:[%s761 + $0x147] sm:$0xff]
        %v3563 = vld [vmem:[%s761 + $0x14f] sm:$0xff]
        %v3564 = vld [vmem:[%s761 + $0x167] sm:$0xff]
        %v3565 = vld [vmem:[%s761 + $0x16f] sm:$0xff]
        %v3566 = vld [vmem:[%s761 + $0x187] sm:$0xff]
        %v3567 = vld [vmem:[%s761 + $0x18f] sm:$0xff]
        %v3568 = vld [vmem:[%s761 + $0x1a7] sm:$0xff]
        %v3569 = vld [vmem:[%s761 + $0x1af] sm:$0xff]
        %v3570 = vld [vmem:[%s761 + $0x1c7] sm:$0xff]
        %v3571 = vld [vmem:[%s761 + $0x1cf] sm:$0xff]
        %v3572 = vld [vmem:[%s761 + $0x1e7] sm:$0xff]
        %v3573 = vld [vmem:[%s761 + $0x1ef] sm:$0xff]
        %v3574 = vlaneseq
        %v3575 = vshrl.u32 %v3574, 7
        %v3576 = vsub.s32 0, %v3575
        %v3577 = vrot.slane %v3272, %v3576
        %v3578 = vmul.f32 %v3542, %v3577
        %v3579 = vmul.f32 %v3543, %v3577
        %v3580 = vmul.f32 %v3544, %v3577
        %v3581 = vmul.f32 %v3545, %v3577
        %v3582 = vmul.f32 %v3546, %v3577
        %v3583 = vmul.f32 %v3547, %v3577
        %v3584 = vmul.f32 %v3548, %v3577
        %v3585 = vmul.f32 %v3549, %v3577
        %v3586 = vmul.f32 %v3550, %v3577
        %v3587 = vmul.f32 %v3551, %v3577
        %v3588 = vmul.f32 %v3552, %v3577
        %v3589 = vmul.f32 %v3553, %v3577
        %v3590 = vmul.f32 %v3554, %v3577
        %v3591 = vmul.f32 %v3555, %v3577
        %v3592 = vmul.f32 %v3556, %v3577
        %v3593 = vmul.f32 %v3557, %v3577
        %v3594 = vmul.f32 %v3558, %v3577
        %v3595 = vmul.f32 %v3559, %v3577
        %v3596 = vmul.f32 %v3560, %v3577
        %v3597 = vmul.f32 %v3561, %v3577
        %v3598 = vmul.f32 %v3562, %v3577
        %v3599 = vmul.f32 %v3563, %v3577
        %v3600 = vmul.f32 %v3564, %v3577
        %v3601 = vmul.f32 %v3565, %v3577
        %v3602 = vmul.f32 %v3566, %v3577
        %v3603 = vmul.f32 %v3567, %v3577
        %v3604 = vmul.f32 %v3568, %v3577
        %v3605 = vmul.f32 %v3569, %v3577
        %v3606 = vmul.f32 %v3570, %v3577
        %v3607 = vmul.f32 %v3571, %v3577
        %v3608 = vmul.f32 %v3572, %v3577
        %v3609 = vmul.f32 %v3573, %v3577
        %v3610 = vadd.f32 %v3510, %v3578
        %v3611 = vadd.f32 %v3511, %v3579
        %v3612 = vadd.f32 %v3512, %v3580
        %v3613 = vadd.f32 %v3513, %v3581
        %v3614 = vadd.f32 %v3514, %v3582
        %v3615 = vadd.f32 %v3515, %v3583
        %v3616 = vadd.f32 %v3516, %v3584
        %v3617 = vadd.f32 %v3517, %v3585
        %v3618 = vadd.f32 %v3518, %v3586
        %v3619 = vadd.f32 %v3519, %v3587
        %v3620 = vadd.f32 %v3520, %v3588
        %v3621 = vadd.f32 %v3521, %v3589
        %v3622 = vadd.f32 %v3522, %v3590
        %v3623 = vadd.f32 %v3523, %v3591
        %v3624 = vadd.f32 %v3524, %v3592
        %v3625 = vadd.f32 %v3525, %v3593
        %v3626 = vadd.f32 %v3526, %v3594
        %v3627 = vadd.f32 %v3527, %v3595
        %v3628 = vadd.f32 %v3528, %v3596
        %v3629 = vadd.f32 %v3529, %v3597
        %v3630 = vadd.f32 %v3530, %v3598
        %v3631 = vadd.f32 %v3531, %v3599
        %v3632 = vadd.f32 %v3532, %v3600
        %v3633 = vadd.f32 %v3533, %v3601
        %v3634 = vadd.f32 %v3534, %v3602
        %v3635 = vadd.f32 %v3535, %v3603
        %v3636 = vadd.f32 %v3536, %v3604
        %v3637 = vadd.f32 %v3537, %v3605
        %v3638 = vadd.f32 %v3538, %v3606
        %v3639 = vadd.f32 %v3539, %v3607
        %v3640 = vadd.f32 %v3540, %v3608
        %v3641 = vadd.f32 %v3541, %v3609
        %v3642 = vld [vmem:[%s761 + $0x8] sm:$0xff]
        %v3643 = vld [vmem:[%s761 + $0x10] sm:$0xff]
        %v3644 = vld [vmem:[%s761 + $0x28] sm:$0xff]
        %v3645 = vld [vmem:[%s761 + $0x30] sm:$0xff]
        %v3646 = vld [vmem:[%s761 + $0x48] sm:$0xff]
        %v3647 = vld [vmem:[%s761 + $0x50] sm:$0xff]
        %v3648 = vld [vmem:[%s761 + $0x68] sm:$0xff]
        %v3649 = vld [vmem:[%s761 + $0x70] sm:$0xff]
        %v3650 = vld [vmem:[%s761 + $0x88] sm:$0xff]
        %v3651 = vld [vmem:[%s761 + $0x90] sm:$0xff]
        %v3652 = vld [vmem:[%s761 + $0xa8] sm:$0xff]
        %v3653 = vld [vmem:[%s761 + $0xb0] sm:$0xff]
        %v3654 = vld [vmem:[%s761 + $0xc8] sm:$0xff]
        %v3655 = vld [vmem:[%s761 + $0xd0] sm:$0xff]
        %v3656 = vld [vmem:[%s761 + $0xe8] sm:$0xff]
        %v3657 = vld [vmem:[%s761 + $0xf0] sm:$0xff]
        %v3658 = vld [vmem:[%s761 + $0x108] sm:$0xff]
        %v3659 = vld [vmem:[%s761 + $0x110] sm:$0xff]
        %v3660 = vld [vmem:[%s761 + $0x128] sm:$0xff]
        %v3661 = vld [vmem:[%s761 + $0x130] sm:$0xff]
        %v3662 = vld [vmem:[%s761 + $0x148] sm:$0xff]
        %v3663 = vld [vmem:[%s761 + $0x150] sm:$0xff]
        %v3664 = vld [vmem:[%s761 + $0x168] sm:$0xff]
        %v3665 = vld [vmem:[%s761 + $0x170] sm:$0xff]
        %v3666 = vld [vmem:[%s761 + $0x188] sm:$0xff]
        %v3667 = vld [vmem:[%s761 + $0x190] sm:$0xff]
        %v3668 = vld [vmem:[%s761 + $0x1a8] sm:$0xff]
        %v3669 = vld [vmem:[%s761 + $0x1b0] sm:$0xff]
        %v3670 = vld [vmem:[%s761 + $0x1c8] sm:$0xff]
        %v3671 = vld [vmem:[%s761 + $0x1d0] sm:$0xff]
        %v3672 = vld [vmem:[%s761 + $0x1e8] sm:$0xff]
        %v3673 = vld [vmem:[%s761 + $0x1f0] sm:$0xff]
        %v3674 = vlaneseq
        %v3675 = vshrl.u32 %v3674, 7
        %v3676 = vsub.s32 1, %v3675
        %v3677 = vrot.slane %v3272, %v3676
        %v3678 = vmul.f32 %v3642, %v3677
        %v3679 = vmul.f32 %v3643, %v3677
        %v3680 = vmul.f32 %v3644, %v3677
        %v3681 = vmul.f32 %v3645, %v3677
        %v3682 = vmul.f32 %v3646, %v3677
        %v3683 = vmul.f32 %v3647, %v3677
        %v3684 = vmul.f32 %v3648, %v3677
        %v3685 = vmul.f32 %v3649, %v3677
        %v3686 = vmul.f32 %v3650, %v3677
        %v3687 = vmul.f32 %v3651, %v3677
        %v3688 = vmul.f32 %v3652, %v3677
        %v3689 = vmul.f32 %v3653, %v3677
        %v3690 = vmul.f32 %v3654, %v3677
        %v3691 = vmul.f32 %v3655, %v3677
        %v3692 = vmul.f32 %v3656, %v3677
        %v3693 = vmul.f32 %v3657, %v3677
        %v3694 = vmul.f32 %v3658, %v3677
        %v3695 = vmul.f32 %v3659, %v3677
        %v3696 = vmul.f32 %v3660, %v3677
        %v3697 = vmul.f32 %v3661, %v3677
        %v3698 = vmul.f32 %v3662, %v3677
        %v3699 = vmul.f32 %v3663, %v3677
        %v3700 = vmul.f32 %v3664, %v3677
        %v3701 = vmul.f32 %v3665, %v3677
        %v3702 = vmul.f32 %v3666, %v3677
        %v3703 = vmul.f32 %v3667, %v3677
        %v3704 = vmul.f32 %v3668, %v3677
        %v3705 = vmul.f32 %v3669, %v3677
        %v3706 = vmul.f32 %v3670, %v3677
        %v3707 = vmul.f32 %v3671, %v3677
        %v3708 = vmul.f32 %v3672, %v3677
        %v3709 = vmul.f32 %v3673, %v3677
        %v3710 = vadd.f32 %v3610, %v3678
        %v3711 = vadd.f32 %v3611, %v3679
        %v3712 = vadd.f32 %v3612, %v3680
        %v3713 = vadd.f32 %v3613, %v3681
        %v3714 = vadd.f32 %v3614, %v3682
        %v3715 = vadd.f32 %v3615, %v3683
        %v3716 = vadd.f32 %v3616, %v3684
        %v3717 = vadd.f32 %v3617, %v3685
        %v3718 = vadd.f32 %v3618, %v3686
        %v3719 = vadd.f32 %v3619, %v3687
        %v3720 = vadd.f32 %v3620, %v3688
        %v3721 = vadd.f32 %v3621, %v3689
        %v3722 = vadd.f32 %v3622, %v3690
        %v3723 = vadd.f32 %v3623, %v3691
        %v3724 = vadd.f32 %v3624, %v3692
        %v3725 = vadd.f32 %v3625, %v3693
        %v3726 = vadd.f32 %v3626, %v3694
        %v3727 = vadd.f32 %v3627, %v3695
        %v3728 = vadd.f32 %v3628, %v3696
        %v3729 = vadd.f32 %v3629, %v3697
        %v3730 = vadd.f32 %v3630, %v3698
        %v3731 = vadd.f32 %v3631, %v3699
        %v3732 = vadd.f32 %v3632, %v3700
        %v3733 = vadd.f32 %v3633, %v3701
        %v3734 = vadd.f32 %v3634, %v3702
        %v3735 = vadd.f32 %v3635, %v3703
        %v3736 = vadd.f32 %v3636, %v3704
        %v3737 = vadd.f32 %v3637, %v3705
        %v3738 = vadd.f32 %v3638, %v3706
        %v3739 = vadd.f32 %v3639, %v3707
        %v3740 = vadd.f32 %v3640, %v3708
        %v3741 = vadd.f32 %v3641, %v3709
        %v3742 = vld [vmem:[%s761 + $0x9] sm:$0xff]
        %v3743 = vld [vmem:[%s761 + $0x11] sm:$0xff]
        %v3744 = vld [vmem:[%s761 + $0x29] sm:$0xff]
        %v3745 = vld [vmem:[%s761 + $0x31] sm:$0xff]
        %v3746 = vld [vmem:[%s761 + $0x49] sm:$0xff]
        %v3747 = vld [vmem:[%s761 + $0x51] sm:$0xff]
        %v3748 = vld [vmem:[%s761 + $0x69] sm:$0xff]
        %v3749 = vld [vmem:[%s761 + $0x71] sm:$0xff]
        %v3750 = vld [vmem:[%s761 + $0x89] sm:$0xff]
        %v3751 = vld [vmem:[%s761 + $0x91] sm:$0xff]
        %v3752 = vld [vmem:[%s761 + $0xa9] sm:$0xff]
        %v3753 = vld [vmem:[%s761 + $0xb1] sm:$0xff]
        %v3754 = vld [vmem:[%s761 + $0xc9] sm:$0xff]
        %v3755 = vld [vmem:[%s761 + $0xd1] sm:$0xff]
        %v3756 = vld [vmem:[%s761 + $0xe9] sm:$0xff]
        %v3757 = vld [vmem:[%s761 + $0xf1] sm:$0xff]
        %v3758 = vld [vmem:[%s761 + $0x109] sm:$0xff]
        %v3759 = vld [vmem:[%s761 + $0x111] sm:$0xff]
        %v3760 = vld [vmem:[%s761 + $0x129] sm:$0xff]
        %v3761 = vld [vmem:[%s761 + $0x131] sm:$0xff]
        %v3762 = vld [vmem:[%s761 + $0x149] sm:$0xff]
        %v3763 = vld [vmem:[%s761 + $0x151] sm:$0xff]
        %v3764 = vld [vmem:[%s761 + $0x169] sm:$0xff]
        %v3765 = vld [vmem:[%s761 + $0x171] sm:$0xff]
        %v3766 = vld [vmem:[%s761 + $0x189] sm:$0xff]
        %v3767 = vld [vmem:[%s761 + $0x191] sm:$0xff]
        %v3768 = vld [vmem:[%s761 + $0x1a9] sm:$0xff]
        %v3769 = vld [vmem:[%s761 + $0x1b1] sm:$0xff]
        %v3770 = vld [vmem:[%s761 + $0x1c9] sm:$0xff]
        %v3771 = vld [vmem:[%s761 + $0x1d1] sm:$0xff]
        %v3772 = vld [vmem:[%s761 + $0x1e9] sm:$0xff]
        %v3773 = vld [vmem:[%s761 + $0x1f1] sm:$0xff]
        %v3774 = vlaneseq
        %v3775 = vshrl.u32 %v3774, 7
        %v3776 = vsub.s32 2, %v3775
        %v3777 = vrot.slane %v3272, %v3776
        %v3778 = vmul.f32 %v3742, %v3777
        %v3779 = vmul.f32 %v3743, %v3777
        %v3780 = vmul.f32 %v3744, %v3777
        %v3781 = vmul.f32 %v3745, %v3777
        %v3782 = vmul.f32 %v3746, %v3777
        %v3783 = vmul.f32 %v3747, %v3777
        %v3784 = vmul.f32 %v3748, %v3777
        %v3785 = vmul.f32 %v3749, %v3777
        %v3786 = vmul.f32 %v3750, %v3777
        %v3787 = vmul.f32 %v3751, %v3777
        %v3788 = vmul.f32 %v3752, %v3777
        %v3789 = vmul.f32 %v3753, %v3777
        %v3790 = vmul.f32 %v3754, %v3777
        %v3791 = vmul.f32 %v3755, %v3777
        %v3792 = vmul.f32 %v3756, %v3777
        %v3793 = vmul.f32 %v3757, %v3777
        %v3794 = vmul.f32 %v3758, %v3777
        %v3795 = vmul.f32 %v3759, %v3777
        %v3796 = vmul.f32 %v3760, %v3777
        %v3797 = vmul.f32 %v3761, %v3777
        %v3798 = vmul.f32 %v3762, %v3777
        %v3799 = vmul.f32 %v3763, %v3777
        %v3800 = vmul.f32 %v3764, %v3777
        %v3801 = vmul.f32 %v3765, %v3777
        %v3802 = vmul.f32 %v3766, %v3777
        %v3803 = vmul.f32 %v3767, %v3777
        %v3804 = vmul.f32 %v3768, %v3777
        %v3805 = vmul.f32 %v3769, %v3777
        %v3806 = vmul.f32 %v3770, %v3777
        %v3807 = vmul.f32 %v3771, %v3777
        %v3808 = vmul.f32 %v3772, %v3777
        %v3809 = vmul.f32 %v3773, %v3777
        %v3810 = vadd.f32 %v3710, %v3778
        %v3811 = vadd.f32 %v3711, %v3779
        %v3812 = vadd.f32 %v3712, %v3780
        %v3813 = vadd.f32 %v3713, %v3781
        %v3814 = vadd.f32 %v3714, %v3782
        %v3815 = vadd.f32 %v3715, %v3783
        %v3816 = vadd.f32 %v3716, %v3784
        %v3817 = vadd.f32 %v3717, %v3785
        %v3818 = vadd.f32 %v3718, %v3786
        %v3819 = vadd.f32 %v3719, %v3787
        %v3820 = vadd.f32 %v3720, %v3788
        %v3821 = vadd.f32 %v3721, %v3789
        %v3822 = vadd.f32 %v3722, %v3790
        %v3823 = vadd.f32 %v3723, %v3791
        %v3824 = vadd.f32 %v3724, %v3792
        %v3825 = vadd.f32 %v3725, %v3793
        %v3826 = vadd.f32 %v3726, %v3794
        %v3827 = vadd.f32 %v3727, %v3795
        %v3828 = vadd.f32 %v3728, %v3796
        %v3829 = vadd.f32 %v3729, %v3797
        %v3830 = vadd.f32 %v3730, %v3798
        %v3831 = vadd.f32 %v3731, %v3799
        %v3832 = vadd.f32 %v3732, %v3800
        %v3833 = vadd.f32 %v3733, %v3801
        %v3834 = vadd.f32 %v3734, %v3802
        %v3835 = vadd.f32 %v3735, %v3803
        %v3836 = vadd.f32 %v3736, %v3804
        %v3837 = vadd.f32 %v3737, %v3805
        %v3838 = vadd.f32 %v3738, %v3806
        %v3839 = vadd.f32 %v3739, %v3807
        %v3840 = vadd.f32 %v3740, %v3808
        %v3841 = vadd.f32 %v3741, %v3809
        %v3842 = vld [vmem:[%s1365 + $0x7] sm:$0xff]
        %v3843 = vld [vmem:[%s1365 + $0xf] sm:$0xff]
        %v3844 = vld [vmem:[%s1365 + $0x27] sm:$0xff]
        %v3845 = vld [vmem:[%s1365 + $0x2f] sm:$0xff]
        %v3846 = vld [vmem:[%s1365 + $0x47] sm:$0xff]
        %v3847 = vld [vmem:[%s1365 + $0x4f] sm:$0xff]
        %v3848 = vld [vmem:[%s1365 + $0x67] sm:$0xff]
        %v3849 = vld [vmem:[%s1365 + $0x6f] sm:$0xff]
        %v3850 = vld [vmem:[%s1365 + $0x87] sm:$0xff]
        %v3851 = vld [vmem:[%s1365 + $0x8f] sm:$0xff]
        %v3852 = vld [vmem:[%s1365 + $0xa7] sm:$0xff]
        %v3853 = vld [vmem:[%s1365 + $0xaf] sm:$0xff]
        %v3854 = vld [vmem:[%s1365 + $0xc7] sm:$0xff]
        %v3855 = vld [vmem:[%s1365 + $0xcf] sm:$0xff]
        %v3856 = vld [vmem:[%s1365 + $0xe7] sm:$0xff]
        %v3857 = vld [vmem:[%s1365 + $0xef] sm:$0xff]
        %v3858 = vld [vmem:[%s1365 + $0x107] sm:$0xff]
        %v3859 = vld [vmem:[%s1365 + $0x10f] sm:$0xff]
        %v3860 = vld [vmem:[%s1365 + $0x127] sm:$0xff]
        %v3861 = vld [vmem:[%s1365 + $0x12f] sm:$0xff]
        %v3862 = vld [vmem:[%s1365 + $0x147] sm:$0xff]
        %v3863 = vld [vmem:[%s1365 + $0x14f] sm:$0xff]
        %v3864 = vld [vmem:[%s1365 + $0x167] sm:$0xff]
        %v3865 = vld [vmem:[%s1365 + $0x16f] sm:$0xff]
        %v3866 = vld [vmem:[%s1365 + $0x187] sm:$0xff]
        %v3867 = vld [vmem:[%s1365 + $0x18f] sm:$0xff]
        %v3868 = vld [vmem:[%s1365 + $0x1a7] sm:$0xff]
        %v3869 = vld [vmem:[%s1365 + $0x1af] sm:$0xff]
        %v3870 = vld [vmem:[%s1365 + $0x1c7] sm:$0xff]
        %v3871 = vld [vmem:[%s1365 + $0x1cf] sm:$0xff]
        %v3872 = vld [vmem:[%s1365 + $0x1e7] sm:$0xff]
        %v3873 = vld [vmem:[%s1365 + $0x1ef] sm:$0xff]
        %v3874 = vlaneseq
        %v3875 = vshrl.u32 %v3874, 7
        %v3876 = vsub.s32 0, %v3875
        %v3877 = vrot.slane %v3273, %v3876
        %v3878 = vmul.f32 %v3842, %v3877
        %v3879 = vmul.f32 %v3843, %v3877
        %v3880 = vmul.f32 %v3844, %v3877
        %v3881 = vmul.f32 %v3845, %v3877
        %v3882 = vmul.f32 %v3846, %v3877
        %v3883 = vmul.f32 %v3847, %v3877
        %v3884 = vmul.f32 %v3848, %v3877
        %v3885 = vmul.f32 %v3849, %v3877
        %v3886 = vmul.f32 %v3850, %v3877
        %v3887 = vmul.f32 %v3851, %v3877
        %v3888 = vmul.f32 %v3852, %v3877
        %v3889 = vmul.f32 %v3853, %v3877
        %v3890 = vmul.f32 %v3854, %v3877
        %v3891 = vmul.f32 %v3855, %v3877
        %v3892 = vmul.f32 %v3856, %v3877
        %v3893 = vmul.f32 %v3857, %v3877
        %v3894 = vmul.f32 %v3858, %v3877
        %v3895 = vmul.f32 %v3859, %v3877
        %v3896 = vmul.f32 %v3860, %v3877
        %v3897 = vmul.f32 %v3861, %v3877
        %v3898 = vmul.f32 %v3862, %v3877
        %v3899 = vmul.f32 %v3863, %v3877
        %v3900 = vmul.f32 %v3864, %v3877
        %v3901 = vmul.f32 %v3865, %v3877
        %v3902 = vmul.f32 %v3866, %v3877
        %v3903 = vmul.f32 %v3867, %v3877
        %v3904 = vmul.f32 %v3868, %v3877
        %v3905 = vmul.f32 %v3869, %v3877
        %v3906 = vmul.f32 %v3870, %v3877
        %v3907 = vmul.f32 %v3871, %v3877
        %v3908 = vmul.f32 %v3872, %v3877
        %v3909 = vmul.f32 %v3873, %v3877
        %v3910 = vadd.f32 %v3810, %v3878
        %v3911 = vadd.f32 %v3811, %v3879
        %v3912 = vadd.f32 %v3812, %v3880
        %v3913 = vadd.f32 %v3813, %v3881
        %v3914 = vadd.f32 %v3814, %v3882
        %v3915 = vadd.f32 %v3815, %v3883
        %v3916 = vadd.f32 %v3816, %v3884
        %v3917 = vadd.f32 %v3817, %v3885
        %v3918 = vadd.f32 %v3818, %v3886
        %v3919 = vadd.f32 %v3819, %v3887
        %v3920 = vadd.f32 %v3820, %v3888
        %v3921 = vadd.f32 %v3821, %v3889
        %v3922 = vadd.f32 %v3822, %v3890
        %v3923 = vadd.f32 %v3823, %v3891
        %v3924 = vadd.f32 %v3824, %v3892
        %v3925 = vadd.f32 %v3825, %v3893
        %v3926 = vadd.f32 %v3826, %v3894
        %v3927 = vadd.f32 %v3827, %v3895
        %v3928 = vadd.f32 %v3828, %v3896
        %v3929 = vadd.f32 %v3829, %v3897
        %v3930 = vadd.f32 %v3830, %v3898
        %v3931 = vadd.f32 %v3831, %v3899
        %v3932 = vadd.f32 %v3832, %v3900
        %v3933 = vadd.f32 %v3833, %v3901
        %v3934 = vadd.f32 %v3834, %v3902
        %v3935 = vadd.f32 %v3835, %v3903
        %v3936 = vadd.f32 %v3836, %v3904
        %v3937 = vadd.f32 %v3837, %v3905
        %v3938 = vadd.f32 %v3838, %v3906
        %v3939 = vadd.f32 %v3839, %v3907
        %v3940 = vadd.f32 %v3840, %v3908
        %v3941 = vadd.f32 %v3841, %v3909
        %v3942 = vld [vmem:[%s1365 + $0x8] sm:$0xff]
        %v3943 = vld [vmem:[%s1365 + $0x10] sm:$0xff]
        %v3944 = vld [vmem:[%s1365 + $0x28] sm:$0xff]
        %v3945 = vld [vmem:[%s1365 + $0x30] sm:$0xff]
        %v3946 = vld [vmem:[%s1365 + $0x48] sm:$0xff]
        %v3947 = vld [vmem:[%s1365 + $0x50] sm:$0xff]
        %v3948 = vld [vmem:[%s1365 + $0x68] sm:$0xff]
        %v3949 = vld [vmem:[%s1365 + $0x70] sm:$0xff]
        %v3950 = vld [vmem:[%s1365 + $0x88] sm:$0xff]
        %v3951 = vld [vmem:[%s1365 + $0x90] sm:$0xff]
        %v3952 = vld [vmem:[%s1365 + $0xa8] sm:$0xff]
        %v3953 = vld [vmem:[%s1365 + $0xb0] sm:$0xff]
        %v3954 = vld [vmem:[%s1365 + $0xc8] sm:$0xff]
        %v3955 = vld [vmem:[%s1365 + $0xd0] sm:$0xff]
        %v3956 = vld [vmem:[%s1365 + $0xe8] sm:$0xff]
        %v3957 = vld [vmem:[%s1365 + $0xf0] sm:$0xff]
        %v3958 = vld [vmem:[%s1365 + $0x108] sm:$0xff]
        %v3959 = vld [vmem:[%s1365 + $0x110] sm:$0xff]
        %v3960 = vld [vmem:[%s1365 + $0x128] sm:$0xff]
        %v3961 = vld [vmem:[%s1365 + $0x130] sm:$0xff]
        %v3962 = vld [vmem:[%s1365 + $0x148] sm:$0xff]
        %v3963 = vld [vmem:[%s1365 + $0x150] sm:$0xff]
        %v3964 = vld [vmem:[%s1365 + $0x168] sm:$0xff]
        %v3965 = vld [vmem:[%s1365 + $0x170] sm:$0xff]
        %v3966 = vld [vmem:[%s1365 + $0x188] sm:$0xff]
        %v3967 = vld [vmem:[%s1365 + $0x190] sm:$0xff]
        %v3968 = vld [vmem:[%s1365 + $0x1a8] sm:$0xff]
        %v3969 = vld [vmem:[%s1365 + $0x1b0] sm:$0xff]
        %v3970 = vld [vmem:[%s1365 + $0x1c8] sm:$0xff]
        %v3971 = vld [vmem:[%s1365 + $0x1d0] sm:$0xff]
        %v3972 = vld [vmem:[%s1365 + $0x1e8] sm:$0xff]
        %v3973 = vld [vmem:[%s1365 + $0x1f0] sm:$0xff]
        %v3974 = vlaneseq
        %v3975 = vshrl.u32 %v3974, 7
        %v3976 = vsub.s32 1, %v3975
        %v3977 = vrot.slane %v3273, %v3976
        %v3978 = vmul.f32 %v3942, %v3977
        %v3979 = vmul.f32 %v3943, %v3977
        %v3980 = vmul.f32 %v3944, %v3977
        %v3981 = vmul.f32 %v3945, %v3977
        %v3982 = vmul.f32 %v3946, %v3977
        %v3983 = vmul.f32 %v3947, %v3977
        %v3984 = vmul.f32 %v3948, %v3977
        %v3985 = vmul.f32 %v3949, %v3977
        %v3986 = vmul.f32 %v3950, %v3977
        %v3987 = vmul.f32 %v3951, %v3977
        %v3988 = vmul.f32 %v3952, %v3977
        %v3989 = vmul.f32 %v3953, %v3977
        %v3990 = vmul.f32 %v3954, %v3977
        %v3991 = vmul.f32 %v3955, %v3977
        %v3992 = vmul.f32 %v3956, %v3977
        %v3993 = vmul.f32 %v3957, %v3977
        %v3994 = vmul.f32 %v3958, %v3977
        %v3995 = vmul.f32 %v3959, %v3977
        %v3996 = vmul.f32 %v3960, %v3977
        %v3997 = vmul.f32 %v3961, %v3977
        %v3998 = vmul.f32 %v3962, %v3977
        %v3999 = vmul.f32 %v3963, %v3977
        %v4000 = vmul.f32 %v3964, %v3977
        %v4001 = vmul.f32 %v3965, %v3977
        %v4002 = vmul.f32 %v3966, %v3977
        %v4003 = vmul.f32 %v3967, %v3977
        %v4004 = vmul.f32 %v3968, %v3977
        %v4005 = vmul.f32 %v3969, %v3977
        %v4006 = vmul.f32 %v3970, %v3977
        %v4007 = vmul.f32 %v3971, %v3977
        %v4008 = vmul.f32 %v3972, %v3977
        %v4009 = vmul.f32 %v3973, %v3977
        %v4010 = vadd.f32 %v3910, %v3978
        %v4011 = vadd.f32 %v3911, %v3979
        %v4012 = vadd.f32 %v3912, %v3980
        %v4013 = vadd.f32 %v3913, %v3981
        %v4014 = vadd.f32 %v3914, %v3982
        %v4015 = vadd.f32 %v3915, %v3983
        %v4016 = vadd.f32 %v3916, %v3984
        %v4017 = vadd.f32 %v3917, %v3985
        %v4018 = vadd.f32 %v3918, %v3986
        %v4019 = vadd.f32 %v3919, %v3987
        %v4020 = vadd.f32 %v3920, %v3988
        %v4021 = vadd.f32 %v3921, %v3989
        %v4022 = vadd.f32 %v3922, %v3990
        %v4023 = vadd.f32 %v3923, %v3991
        %v4024 = vadd.f32 %v3924, %v3992
        %v4025 = vadd.f32 %v3925, %v3993
        %v4026 = vadd.f32 %v3926, %v3994
        %v4027 = vadd.f32 %v3927, %v3995
        %v4028 = vadd.f32 %v3928, %v3996
        %v4029 = vadd.f32 %v3929, %v3997
        %v4030 = vadd.f32 %v3930, %v3998
        %v4031 = vadd.f32 %v3931, %v3999
        %v4032 = vadd.f32 %v3932, %v4000
        %v4033 = vadd.f32 %v3933, %v4001
        %v4034 = vadd.f32 %v3934, %v4002
        %v4035 = vadd.f32 %v3935, %v4003
        %v4036 = vadd.f32 %v3936, %v4004
        %v4037 = vadd.f32 %v3937, %v4005
        %v4038 = vadd.f32 %v3938, %v4006
        %v4039 = vadd.f32 %v3939, %v4007
        %v4040 = vadd.f32 %v3940, %v4008
        %v4041 = vadd.f32 %v3941, %v4009
        %v4042 = vld [vmem:[%s1365 + $0x9] sm:$0xff]
        %v4043 = vld [vmem:[%s1365 + $0x11] sm:$0xff]
        %v4044 = vld [vmem:[%s1365 + $0x29] sm:$0xff]
        %v4045 = vld [vmem:[%s1365 + $0x31] sm:$0xff]
        %v4046 = vld [vmem:[%s1365 + $0x49] sm:$0xff]
        %v4047 = vld [vmem:[%s1365 + $0x51] sm:$0xff]
        %v4048 = vld [vmem:[%s1365 + $0x69] sm:$0xff]
        %v4049 = vld [vmem:[%s1365 + $0x71] sm:$0xff]
        %v4050 = vld [vmem:[%s1365 + $0x89] sm:$0xff]
        %v4051 = vld [vmem:[%s1365 + $0x91] sm:$0xff]
        %v4052 = vld [vmem:[%s1365 + $0xa9] sm:$0xff]
        %v4053 = vld [vmem:[%s1365 + $0xb1] sm:$0xff]
        %v4054 = vld [vmem:[%s1365 + $0xc9] sm:$0xff]
        %v4055 = vld [vmem:[%s1365 + $0xd1] sm:$0xff]
        %v4056 = vld [vmem:[%s1365 + $0xe9] sm:$0xff]
        %v4057 = vld [vmem:[%s1365 + $0xf1] sm:$0xff]
        %v4058 = vld [vmem:[%s1365 + $0x109] sm:$0xff]
        %v4059 = vld [vmem:[%s1365 + $0x111] sm:$0xff]
        %v4060 = vld [vmem:[%s1365 + $0x129] sm:$0xff]
        %v4061 = vld [vmem:[%s1365 + $0x131] sm:$0xff]
        %v4062 = vld [vmem:[%s1365 + $0x149] sm:$0xff]
        %v4063 = vld [vmem:[%s1365 + $0x151] sm:$0xff]
        %v4064 = vld [vmem:[%s1365 + $0x169] sm:$0xff]
        %v4065 = vld [vmem:[%s1365 + $0x171] sm:$0xff]
        %v4066 = vld [vmem:[%s1365 + $0x189] sm:$0xff]
        %v4067 = vld [vmem:[%s1365 + $0x191] sm:$0xff]
        %v4068 = vld [vmem:[%s1365 + $0x1a9] sm:$0xff]
        %v4069 = vld [vmem:[%s1365 + $0x1b1] sm:$0xff]
        %v4070 = vld [vmem:[%s1365 + $0x1c9] sm:$0xff]
        %v4071 = vld [vmem:[%s1365 + $0x1d1] sm:$0xff]
        %v4072 = vld [vmem:[%s1365 + $0x1e9] sm:$0xff]
        %v4073 = vld [vmem:[%s1365 + $0x1f1] sm:$0xff]
        %v4074 = vlaneseq
        %v4075 = vshrl.u32 %v4074, 7
        %v4076 = vsub.s32 2, %v4075
        %v4077 = vrot.slane %v3273, %v4076
        %v4078 = vmul.f32 %v4042, %v4077
        %v4079 = vmul.f32 %v4043, %v4077
        %v4080 = vmul.f32 %v4044, %v4077
        %v4081 = vmul.f32 %v4045, %v4077
        %v4082 = vmul.f32 %v4046, %v4077
        %v4083 = vmul.f32 %v4047, %v4077
        %v4084 = vmul.f32 %v4048, %v4077
        %v4085 = vmul.f32 %v4049, %v4077
        %v4086 = vmul.f32 %v4050, %v4077
        %v4087 = vmul.f32 %v4051, %v4077
        %v4088 = vmul.f32 %v4052, %v4077
        %v4089 = vmul.f32 %v4053, %v4077
        %v4090 = vmul.f32 %v4054, %v4077
        %v4091 = vmul.f32 %v4055, %v4077
        %v4092 = vmul.f32 %v4056, %v4077
        %v4093 = vmul.f32 %v4057, %v4077
        %v4094 = vmul.f32 %v4058, %v4077
        %v4095 = vmul.f32 %v4059, %v4077
        %v4096 = vmul.f32 %v4060, %v4077
        %v4097 = vmul.f32 %v4061, %v4077
        %v4098 = vmul.f32 %v4062, %v4077
        %v4099 = vmul.f32 %v4063, %v4077
        %v4100 = vmul.f32 %v4064, %v4077
        %v4101 = vmul.f32 %v4065, %v4077
        %v4102 = vmul.f32 %v4066, %v4077
        %v4103 = vmul.f32 %v4067, %v4077
        %v4104 = vmul.f32 %v4068, %v4077
        %v4105 = vmul.f32 %v4069, %v4077
        %v4106 = vmul.f32 %v4070, %v4077
        %v4107 = vmul.f32 %v4071, %v4077
        %v4108 = vmul.f32 %v4072, %v4077
        %v4109 = vmul.f32 %v4073, %v4077
        %v4110 = vadd.f32 %v4010, %v4078
        %v4111 = vadd.f32 %v4011, %v4079
        %v4112 = vadd.f32 %v4012, %v4080
        %v4113 = vadd.f32 %v4013, %v4081
        %v4114 = vadd.f32 %v4014, %v4082
        %v4115 = vadd.f32 %v4015, %v4083
        %v4116 = vadd.f32 %v4016, %v4084
        %v4117 = vadd.f32 %v4017, %v4085
        %v4118 = vadd.f32 %v4018, %v4086
        %v4119 = vadd.f32 %v4019, %v4087
        %v4120 = vadd.f32 %v4020, %v4088
        %v4121 = vadd.f32 %v4021, %v4089
        %v4122 = vadd.f32 %v4022, %v4090
        %v4123 = vadd.f32 %v4023, %v4091
        %v4124 = vadd.f32 %v4024, %v4092
        %v4125 = vadd.f32 %v4025, %v4093
        %v4126 = vadd.f32 %v4026, %v4094
        %v4127 = vadd.f32 %v4027, %v4095
        %v4128 = vadd.f32 %v4028, %v4096
        %v4129 = vadd.f32 %v4029, %v4097
        %v4130 = vadd.f32 %v4030, %v4098
        %v4131 = vadd.f32 %v4031, %v4099
        %v4132 = vadd.f32 %v4032, %v4100
        %v4133 = vadd.f32 %v4033, %v4101
        %v4134 = vadd.f32 %v4034, %v4102
        %v4135 = vadd.f32 %v4035, %v4103
        %v4136 = vadd.f32 %v4036, %v4104
        %v4137 = vadd.f32 %v4037, %v4105
        %v4138 = vadd.f32 %v4038, %v4106
        %v4139 = vadd.f32 %v4039, %v4107
        %v4140 = vadd.f32 %v4040, %v4108
        %v4141 = vadd.f32 %v4041, %v4109
        %v4142 = vld [vmem:[#allocation12] sm:$0xff]
        %v4143 = vld [vmem:[#allocation12 + $0x8] sm:$0xff]
        %v4144 = vld [vmem:[#allocation12 + $0x10] sm:$0xff]
        %v4145 = vld [vmem:[#allocation12 + $0x18] sm:$0xff]
        %v4146 = vld [vmem:[#allocation12 + $0x20] sm:$0xff]
        %v4147 = vld [vmem:[#allocation12 + $0x28] sm:$0xff]
        %v4148 = vld [vmem:[#allocation12 + $0x30] sm:$0xff]
        %v4149 = vld [vmem:[#allocation12 + $0x38] sm:$0xff]
        %v4150 = vld [vmem:[#allocation12 + $0x40] sm:$0xff]
        %v4151 = vld [vmem:[#allocation12 + $0x48] sm:$0xff]
        %v4152 = vld [vmem:[#allocation12 + $0x50] sm:$0xff]
        %v4153 = vld [vmem:[#allocation12 + $0x58] sm:$0xff]
        %v4154 = vld [vmem:[#allocation12 + $0x60] sm:$0xff]
        %v4155 = vld [vmem:[#allocation12 + $0x68] sm:$0xff]
        %v4156 = vld [vmem:[#allocation12 + $0x70] sm:$0xff]
        %v4157 = vld [vmem:[#allocation12 + $0x78] sm:$0xff]
        %4158 = vmatprep.subr.mxu0 0.0
        %4159 = vmatpush1.msra.mxu0 %v4142
        %4160 = vmatprep.subr.mxu0 0.0
        %4161 = vmatpush1.msra.mxu0 %v4143
        %4162 = vmatprep.subr.mxu0 0.0
        %4163 = vmatpush1.msra.mxu0 %v4144
        %4164 = vmatprep.subr.mxu0 0.0
        %4165 = vmatpush1.msra.mxu0 %v4145
        %4166 = vmatprep.subr.mxu0 0.0
        %4167 = vmatpush1.msra.mxu0 %v4146
        %4168 = vmatprep.subr.mxu0 0.0
        %4169 = vmatpush1.msra.mxu0 %v4147
        %4170 = vmatprep.subr.mxu0 0.0
        %4171 = vmatpush1.msra.mxu0 %v4148
        %4172 = vmatprep.subr.mxu0 0.0
        %4173 = vmatpush1.msra.mxu0 %v4149
        %4174 = vmatprep.subr.mxu0 0.0
        %4175 = vmatpush1.msra.mxu0 %v4150
        %4176 = vmatprep.subr.mxu0 0.0
        %4177 = vmatpush1.msra.mxu0 %v4151
        %4178 = vmatprep.subr.mxu0 0.0
        %4179 = vmatpush1.msra.mxu0 %v4152
        %4180 = vmatprep.subr.mxu0 0.0
        %4181 = vmatpush1.msra.mxu0 %v4153
        %4182 = vmatprep.subr.mxu0 0.0
        %4183 = vmatpush1.msra.mxu0 %v4154
        %4184 = vmatprep.subr.mxu0 0.0
        %4185 = vmatpush1.msra.mxu0 %v4155
        %4186 = vmatprep.subr.mxu0 0.0
        %4187 = vmatpush1.msra.mxu0 %v4156
        %4188 = vmatprep.subr.mxu0 0.0
        %4189 = vmatpush1.msra.mxu0 %v4157
        %4190 = vmatprep.subr.mxu0 0.0
        %4191 = vmatpush1.msra.mxu0 0.0
        %4192 = vmatprep.subr.mxu0 0.0
        %4193 = vmatpush1.msra.mxu0 0.0
        %4194 = vmatprep.subr.mxu0 0.0
        %4195 = vmatpush1.msra.mxu0 0.0
        %4196 = vmatprep.subr.mxu0 0.0
        %4197 = vmatpush1.msra.mxu0 0.0
        %4198 = vmatprep.subr.mxu0 0.0
        %4199 = vmatpush1.msra.mxu0 0.0
        %4200 = vmatprep.subr.mxu0 0.0
        %4201 = vmatpush1.msra.mxu0 0.0
        %4202 = vmatprep.subr.mxu0 0.0
        %4203 = vmatpush1.msra.mxu0 0.0
        %4204 = vmatprep.subr.mxu0 0.0
        %4205 = vmatpush1.msra.mxu0 0.0
        %4206 = vmatprep.subr.mxu0 0.0
        %4207 = vmatpush1.msra.mxu0 0.0
        %4208 = vmatprep.subr.mxu0 0.0
        %4209 = vmatpush1.msra.mxu0 0.0
        %4210 = vmatprep.subr.mxu0 0.0
        %4211 = vmatpush1.msra.mxu0 0.0
        %4212 = vmatprep.subr.mxu0 0.0
        %4213 = vmatpush1.msra.mxu0 0.0
        %4214 = vmatprep.subr.mxu0 0.0
        %4215 = vmatpush1.msra.mxu0 0.0
        %4216 = vmatprep.subr.mxu0 0.0
        %4217 = vmatpush1.msra.mxu0 0.0
        %4218 = vmatprep.subr.mxu0 0.0
        %4219 = vmatpush1.msra.mxu0 0.0
        %4220 = vmatprep.subr.mxu0 0.0
        %4221 = vmatpush1.msra.mxu0 0.0
        %4222 = vmatprep.mubr.f32.mxu0 0.0
        %4223 = vmatmul.mubr.f32.gmra.mrb[0].mxu0 %v4110
        %v4224 = vpop.f32.mrb[0].mxu0
        %v4225 = vadd.f32 0.0, %v4224
        %v4226 = vpop.f32.mrb[0].mxu0
        %4227 = vmatprep.mubr.f32.mxu0 0.0
        %4228 = vmatmul.mubr.f32.gmra.mrb[0].mxu0 %v4111
        %v4229 = vpop.f32.mrb[0].mxu0
        %v4230 = vadd.f32 0.0, %v4229
        %v4231 = vpop.f32.mrb[0].mxu0
        %4232 = vmatprep.mubr.f32.mxu0 0.0
        %4233 = vmatmul.mubr.f32.gmra.mrb[0].mxu0 %v4112
        %v4234 = vpop.f32.mrb[0].mxu0
        %v4235 = vadd.f32 0.0, %v4234
        %v4236 = vpop.f32.mrb[0].mxu0
        %4237 = vmatprep.mubr.f32.mxu0 0.0
        %4238 = vmatmul.mubr.f32.gmra.mrb[0].mxu0 %v4113
        %v4239 = vpop.f32.mrb[0].mxu0
        %v4240 = vadd.f32 0.0, %v4239
        %v4241 = vpop.f32.mrb[0].mxu0
        %4242 = vmatprep.mubr.f32.mxu0 0.0
        %4243 = vmatmul.mubr.f32.gmra.mrb[0].mxu0 %v4114
        %v4244 = vpop.f32.mrb[0].mxu0
        %v4245 = vadd.f32 0.0, %v4244
        %v4246 = vpop.f32.mrb[0].mxu0
        %4247 = vmatprep.mubr.f32.mxu0 0.0
        %4248 = vmatmul.mubr.f32.gmra.mrb[0].mxu0 %v4115
        %v4249 = vpop.f32.mrb[0].mxu0
        %v4250 = vadd.f32 0.0, %v4249
        %v4251 = vpop.f32.mrb[0].mxu0
        %4252 = vmatprep.mubr.f32.mxu0 0.0
        %4253 = vmatmul.mubr.f32.gmra.mrb[0].mxu0 %v4116
        %v4254 = vpop.f32.mrb[0].mxu0
        %v4255 = vadd.f32 0.0, %v4254
        %v4256 = vpop.f32.mrb[0].mxu0
        %4257 = vmatprep.mubr.f32.mxu0 0.0
        %4258 = vmatmul.mubr.f32.gmra.mrb[0].mxu0 %v4117
        %v4259 = vpop.f32.mrb[0].mxu0
        %v4260 = vadd.f32 0.0, %v4259
        %v4261 = vpop.f32.mrb[0].mxu0
        %4262 = vmatprep.mubr.f32.mxu0 0.0
        %4263 = vmatmul.mubr.f32.gmra.mrb[0].mxu0 %v4118
        %v4264 = vpop.f32.mrb[0].mxu0
        %v4265 = vadd.f32 0.0, %v4264
        %v4266 = vpop.f32.mrb[0].mxu0
        %4267 = vmatprep.mubr.f32.mxu0 0.0
        %4268 = vmatmul.mubr.f32.gmra.mrb[0].mxu0 %v4119
        %v4269 = vpop.f32.mrb[0].mxu0
        %v4270 = vadd.f32 0.0, %v4269
        %v4271 = vpop.f32.mrb[0].mxu0
        %4272 = vmatprep.mubr.f32.mxu0 0.0
        %4273 = vmatmul.mubr.f32.gmra.mrb[0].mxu0 %v4120
        %v4274 = vpop.f32.mrb[0].mxu0
        %v4275 = vadd.f32 0.0, %v4274
        %v4276 = vpop.f32.mrb[0].mxu0
        %4277 = vmatprep.mubr.f32.mxu0 0.0
        %4278 = vmatmul.mubr.f32.gmra.mrb[0].mxu0 %v4121
        %v4279 = vpop.f32.mrb[0].mxu0
        %v4280 = vadd.f32 0.0, %v4279
        %v4281 = vpop.f32.mrb[0].mxu0
        %4282 = vmatprep.mubr.f32.mxu0 0.0
        %4283 = vmatmul.mubr.f32.gmra.mrb[0].mxu0 %v4122
        %v4284 = vpop.f32.mrb[0].mxu0
        %v4285 = vadd.f32 0.0, %v4284
        %v4286 = vpop.f32.mrb[0].mxu0
        %4287 = vmatprep.mubr.f32.mxu0 0.0
        %4288 = vmatmul.mubr.f32.gmra.mrb[0].mxu0 %v4123
        %v4289 = vpop.f32.mrb[0].mxu0
        %v4290 = vadd.f32 0.0, %v4289
        %v4291 = vpop.f32.mrb[0].mxu0
        %4292 = vmatprep.mubr.f32.mxu0 0.0
        %4293 = vmatmul.mubr.f32.gmra.mrb[0].mxu0 %v4124
        %v4294 = vpop.f32.mrb[0].mxu0
        %v4295 = vadd.f32 0.0, %v4294
        %v4296 = vpop.f32.mrb[0].mxu0
        %4297 = vmatprep.mubr.f32.mxu0 0.0
        %4298 = vmatmul.mubr.f32.gmra.mrb[0].mxu0 %v4125
        %v4299 = vpop.f32.mrb[0].mxu0
        %v4300 = vadd.f32 0.0, %v4299
        %v4301 = vpop.f32.mrb[0].mxu0
        %4302 = vmatprep.mubr.f32.mxu0 0.0
        %4303 = vmatmul.mubr.f32.gmra.mrb[0].mxu0 %v4126
        %v4304 = vpop.f32.mrb[0].mxu0
        %v4305 = vadd.f32 0.0, %v4304
        %v4306 = vpop.f32.mrb[0].mxu0
        %4307 = vmatprep.mubr.f32.mxu0 0.0
        %4308 = vmatmul.mubr.f32.gmra.mrb[0].mxu0 %v4127
        %v4309 = vpop.f32.mrb[0].mxu0
        %v4310 = vadd.f32 0.0, %v4309
        %v4311 = vpop.f32.mrb[0].mxu0
        %4312 = vmatprep.mubr.f32.mxu0 0.0
        %4313 = vmatmul.mubr.f32.gmra.mrb[0].mxu0 %v4128
        %v4314 = vpop.f32.mrb[0].mxu0
        %v4315 = vadd.f32 0.0, %v4314
        %v4316 = vpop.f32.mrb[0].mxu0
        %4317 = vmatprep.mubr.f32.mxu0 0.0
        %4318 = vmatmul.mubr.f32.gmra.mrb[0].mxu0 %v4129
        %v4319 = vpop.f32.mrb[0].mxu0
        %v4320 = vadd.f32 0.0, %v4319
        %v4321 = vpop.f32.mrb[0].mxu0
        %4322 = vmatprep.mubr.f32.mxu0 0.0
        %4323 = vmatmul.mubr.f32.gmra.mrb[0].mxu0 %v4130
        %v4324 = vpop.f32.mrb[0].mxu0
        %v4325 = vadd.f32 0.0, %v4324
        %v4326 = vpop.f32.mrb[0].mxu0
        %4327 = vmatprep.mubr.f32.mxu0 0.0
        %4328 = vmatmul.mubr.f32.gmra.mrb[0].mxu0 %v4131
        %v4329 = vpop.f32.mrb[0].mxu0
        %v4330 = vadd.f32 0.0, %v4329
        %v4331 = vpop.f32.mrb[0].mxu0
        %4332 = vmatprep.mubr.f32.mxu0 0.0
        %4333 = vmatmul.mubr.f32.gmra.mrb[0].mxu0 %v4132
        %v4334 = vpop.f32.mrb[0].mxu0
        %v4335 = vadd.f32 0.0, %v4334
        %v4336 = vpop.f32.mrb[0].mxu0
        %4337 = vmatprep.mubr.f32.mxu0 0.0
        %4338 = vmatmul.mubr.f32.gmra.mrb[0].mxu0 %v4133
        %v4339 = vpop.f32.mrb[0].mxu0
        %v4340 = vadd.f32 0.0, %v4339
        %v4341 = vpop.f32.mrb[0].mxu0
        %4342 = vmatprep.mubr.f32.mxu0 0.0
        %4343 = vmatmul.mubr.f32.gmra.mrb[0].mxu0 %v4134
        %v4344 = vpop.f32.mrb[0].mxu0
        %v4345 = vadd.f32 0.0, %v4344
        %v4346 = vpop.f32.mrb[0].mxu0
        %4347 = vmatprep.mubr.f32.mxu0 0.0
        %4348 = vmatmul.mubr.f32.gmra.mrb[0].mxu0 %v4135
        %v4349 = vpop.f32.mrb[0].mxu0
        %v4350 = vadd.f32 0.0, %v4349
        %v4351 = vpop.f32.mrb[0].mxu0
        %4352 = vmatprep.mubr.f32.mxu0 0.0
        %4353 = vmatmul.mubr.f32.gmra.mrb[0].mxu0 %v4136
        %v4354 = vpop.f32.mrb[0].mxu0
        %v4355 = vadd.f32 0.0, %v4354
        %v4356 = vpop.f32.mrb[0].mxu0
        %4357 = vmatprep.mubr.f32.mxu0 0.0
        %4358 = vmatmul.mubr.f32.gmra.mrb[0].mxu0 %v4137
        %v4359 = vpop.f32.mrb[0].mxu0
        %v4360 = vadd.f32 0.0, %v4359
        %v4361 = vpop.f32.mrb[0].mxu0
        %4362 = vmatprep.mubr.f32.mxu0 0.0
        %4363 = vmatmul.mubr.f32.gmra.mrb[0].mxu0 %v4138
        %v4364 = vpop.f32.mrb[0].mxu0
        %v4365 = vadd.f32 0.0, %v4364
        %v4366 = vpop.f32.mrb[0].mxu0
        %4367 = vmatprep.mubr.f32.mxu0 0.0
        %4368 = vmatmul.mubr.f32.gmra.mrb[0].mxu0 %v4139
        %v4369 = vpop.f32.mrb[0].mxu0
        %v4370 = vadd.f32 0.0, %v4369
        %v4371 = vpop.f32.mrb[0].mxu0
        %4372 = vmatprep.mubr.f32.mxu0 0.0
        %4373 = vmatmul.mubr.f32.gmra.mrb[0].mxu0 %v4140
        %v4374 = vpop.f32.mrb[0].mxu0
        %v4375 = vadd.f32 0.0, %v4374
        %v4376 = vpop.f32.mrb[0].mxu0
        %4377 = vmatprep.mubr.f32.mxu0 0.0
        %4378 = vmatmul.mubr.f32.gmra.mrb[0].mxu0 %v4141
        %v4379 = vpop.f32.mrb[0].mxu0
        %v4380 = vadd.f32 0.0, %v4379
        %v4381 = vpop.f32.mrb[0].mxu0
        %4382 = vdwg.mxu0
        %v4383 = vld [vmem:[%s11] sm:$0x1]
        %v4385 = vlaneseq
        %v4386 = vshrl.u32 %v4385, 7
        %v4387 = vsub.s32 0, %v4386
        %v4388 = vrot.slane %v4383, %v4387
        %v4390 = vmul.f32 %v4225, %v4388
        %v4391 = vmul.f32 %v4230, %v4388
        %v4392 = vmul.f32 %v4235, %v4388
        %v4393 = vmul.f32 %v4240, %v4388
        %v4394 = vmul.f32 %v4245, %v4388
        %v4395 = vmul.f32 %v4250, %v4388
        %v4396 = vmul.f32 %v4255, %v4388
        %v4397 = vmul.f32 %v4260, %v4388
        %v4398 = vmul.f32 %v4265, %v4388
        %v4399 = vmul.f32 %v4270, %v4388
        %v4400 = vmul.f32 %v4275, %v4388
        %v4401 = vmul.f32 %v4280, %v4388
        %v4402 = vmul.f32 %v4285, %v4388
        %v4403 = vmul.f32 %v4290, %v4388
        %v4404 = vmul.f32 %v4295, %v4388
        %v4405 = vmul.f32 %v4300, %v4388
        %v4406 = vmul.f32 %v4305, %v4388
        %v4407 = vmul.f32 %v4310, %v4388
        %v4408 = vmul.f32 %v4315, %v4388
        %v4409 = vmul.f32 %v4320, %v4388
        %v4410 = vmul.f32 %v4325, %v4388
        %v4411 = vmul.f32 %v4330, %v4388
        %v4412 = vmul.f32 %v4335, %v4388
        %v4413 = vmul.f32 %v4340, %v4388
        %v4414 = vmul.f32 %v4345, %v4388
        %v4415 = vmul.f32 %v4350, %v4388
        %v4416 = vmul.f32 %v4355, %v4388
        %v4417 = vmul.f32 %v4360, %v4388
        %v4418 = vmul.f32 %v4365, %v4388
        %v4419 = vmul.f32 %v4370, %v4388
        %v4420 = vmul.f32 %v4375, %v4388
        %v4421 = vmul.f32 %v4380, %v4388
        %v4422 = vld [vmem:[%s12] sm:$0x1]
        %v4424 = vlaneseq
        %v4425 = vshrl.u32 %v4424, 7
        %v4426 = vsub.s32 0, %v4425
        %v4427 = vrot.slane %v4422, %v4426
        %v4429 = vadd.f32 %v4390, %v4427
        %v4430 = vadd.f32 %v4391, %v4427
        %v4431 = vadd.f32 %v4392, %v4427
        %v4432 = vadd.f32 %v4393, %v4427
        %v4433 = vadd.f32 %v4394, %v4427
        %v4434 = vadd.f32 %v4395, %v4427
        %v4435 = vadd.f32 %v4396, %v4427
        %v4436 = vadd.f32 %v4397, %v4427
        %v4437 = vadd.f32 %v4398, %v4427
        %v4438 = vadd.f32 %v4399, %v4427
        %v4439 = vadd.f32 %v4400, %v4427
        %v4440 = vadd.f32 %v4401, %v4427
        %v4441 = vadd.f32 %v4402, %v4427
        %v4442 = vadd.f32 %v4403, %v4427
        %v4443 = vadd.f32 %v4404, %v4427
        %v4444 = vadd.f32 %v4405, %v4427
        %v4445 = vadd.f32 %v4406, %v4427
        %v4446 = vadd.f32 %v4407, %v4427
        %v4447 = vadd.f32 %v4408, %v4427
        %v4448 = vadd.f32 %v4409, %v4427
        %v4449 = vadd.f32 %v4410, %v4427
        %v4450 = vadd.f32 %v4411, %v4427
        %v4451 = vadd.f32 %v4412, %v4427
        %v4452 = vadd.f32 %v4413, %v4427
        %v4453 = vadd.f32 %v4414, %v4427
        %v4454 = vadd.f32 %v4415, %v4427
        %v4455 = vadd.f32 %v4416, %v4427
        %v4456 = vadd.f32 %v4417, %v4427
        %v4457 = vadd.f32 %v4418, %v4427
        %v4458 = vadd.f32 %v4419, %v4427
        %v4459 = vadd.f32 %v4420, %v4427
        %v4460 = vadd.f32 %v4421, %v4427
        %v4461 = vld [vmem:[#allocation14] sm:$0xff]
        %v4462 = vld [vmem:[#allocation14 + $0x8] sm:$0xff]
        %v4463 = vld [vmem:[#allocation14 + $0x10] sm:$0xff]
        %v4464 = vld [vmem:[#allocation14 + $0x18] sm:$0xff]
        %v4465 = vld [vmem:[#allocation14 + $0x20] sm:$0xff]
        %v4466 = vld [vmem:[#allocation14 + $0x28] sm:$0xff]
        %v4467 = vld [vmem:[#allocation14 + $0x30] sm:$0xff]
        %v4468 = vld [vmem:[#allocation14 + $0x38] sm:$0xff]
        %v4469 = vld [vmem:[#allocation14 + $0x40] sm:$0xff]
        %v4470 = vld [vmem:[#allocation14 + $0x48] sm:$0xff]
        %v4471 = vld [vmem:[#allocation14 + $0x50] sm:$0xff]
        %v4472 = vld [vmem:[#allocation14 + $0x58] sm:$0xff]
        %v4473 = vld [vmem:[#allocation14 + $0x60] sm:$0xff]
        %v4474 = vld [vmem:[#allocation14 + $0x68] sm:$0xff]
        %v4475 = vld [vmem:[#allocation14 + $0x70] sm:$0xff]
        %v4476 = vld [vmem:[#allocation14 + $0x78] sm:$0xff]
        %4477 = vmatprep.subr.mxu0 0.0
        %4478 = vmatpush1.msra.mxu0 %v4461
        %4479 = vmatprep.subr.mxu0 0.0
        %4480 = vmatpush1.msra.mxu0 %v4462
        %4481 = vmatprep.subr.mxu0 0.0
        %4482 = vmatpush1.msra.mxu0 %v4463
        %4483 = vmatprep.subr.mxu0 0.0
        %4484 = vmatpush1.msra.mxu0 %v4464
        %4485 = vmatprep.subr.mxu0 0.0
        %4486 = vmatpush1.msra.mxu0 %v4465
        %4487 = vmatprep.subr.mxu0 0.0
        %4488 = vmatpush1.msra.mxu0 %v4466
        %4489 = vmatprep.subr.mxu0 0.0
        %4490 = vmatpush1.msra.mxu0 %v4467
        %4491 = vmatprep.subr.mxu0 0.0
        %4492 = vmatpush1.msra.mxu0 %v4468
        %4493 = vmatprep.subr.mxu0 0.0
        %4494 = vmatpush1.msra.mxu0 %v4469
        %4495 = vmatprep.subr.mxu0 0.0
        %4496 = vmatpush1.msra.mxu0 %v4470
        %4497 = vmatprep.subr.mxu0 0.0
        %4498 = vmatpush1.msra.mxu0 %v4471
        %4499 = vmatprep.subr.mxu0 0.0
        %4500 = vmatpush1.msra.mxu0 %v4472
        %4501 = vmatprep.subr.mxu0 0.0
        %4502 = vmatpush1.msra.mxu0 %v4473
        %4503 = vmatprep.subr.mxu0 0.0
        %4504 = vmatpush1.msra.mxu0 %v4474
        %4505 = vmatprep.subr.mxu0 0.0
        %4506 = vmatpush1.msra.mxu0 %v4475
        %4507 = vmatprep.subr.mxu0 0.0
        %4508 = vmatpush1.msra.mxu0 %v4476
        %4509 = vmatprep.subr.mxu0 0.0
        %4510 = vmatpush1.msra.mxu0 0.0
        %4511 = vmatprep.subr.mxu0 0.0
        %4512 = vmatpush1.msra.mxu0 0.0
        %4513 = vmatprep.subr.mxu0 0.0
        %4514 = vmatpush1.msra.mxu0 0.0
        %4515 = vmatprep.subr.mxu0 0.0
        %4516 = vmatpush1.msra.mxu0 0.0
        %4517 = vmatprep.subr.mxu0 0.0
        %4518 = vmatpush1.msra.mxu0 0.0
        %4519 = vmatprep.subr.mxu0 0.0
        %4520 = vmatpush1.msra.mxu0 0.0
        %4521 = vmatprep.subr.mxu0 0.0
        %4522 = vmatpush1.msra.mxu0 0.0
        %4523 = vmatprep.subr.mxu0 0.0
        %4524 = vmatpush1.msra.mxu0 0.0
        %4525 = vmatprep.subr.mxu0 0.0
        %4526 = vmatpush1.msra.mxu0 0.0
        %4527 = vmatprep.subr.mxu0 0.0
        %4528 = vmatpush1.msra.mxu0 0.0
        %4529 = vmatprep.subr.mxu0 0.0
        %4530 = vmatpush1.msra.mxu0 0.0
        %4531 = vmatprep.subr.mxu0 0.0
        %4532 = vmatpush1.msra.mxu0 0.0
        %4533 = vmatprep.subr.mxu0 0.0
        %4534 = vmatpush1.msra.mxu0 0.0
        %4535 = vmatprep.subr.mxu0 0.0
        %4536 = vmatpush1.msra.mxu0 0.0
        %4537 = vmatprep.subr.mxu0 0.0
        %4538 = vmatpush1.msra.mxu0 0.0
        %4539 = vmatprep.subr.mxu0 0.0
        %4540 = vmatpush1.msra.mxu0 0.0
        %4541 = vmatprep.mubr.f32.mxu0 0.0
        %4542 = vmatmul.mubr.f32.gmra.mrb[0].mxu0 %v697
        %v4543 = vpop.f32.mrb[0].mxu0
        %v4544 = vadd.f32 0.0, %v4543
        %v4545 = vpop.f32.mrb[0].mxu0
        %4546 = vmatprep.mubr.f32.mxu0 0.0
        %4547 = vmatmul.mubr.f32.gmra.mrb[0].mxu0 %v698
        %v4548 = vpop.f32.mrb[0].mxu0
        %v4549 = vadd.f32 0.0, %v4548
        %v4550 = vpop.f32.mrb[0].mxu0
        %4551 = vmatprep.mubr.f32.mxu0 0.0
        %4552 = vmatmul.mubr.f32.gmra.mrb[0].mxu0 %v699
        %v4553 = vpop.f32.mrb[0].mxu0
        %v4554 = vadd.f32 0.0, %v4553
        %v4555 = vpop.f32.mrb[0].mxu0
        %4556 = vmatprep.mubr.f32.mxu0 0.0
        %4557 = vmatmul.mubr.f32.gmra.mrb[0].mxu0 %v700
        %v4558 = vpop.f32.mrb[0].mxu0
        %v4559 = vadd.f32 0.0, %v4558
        %v4560 = vpop.f32.mrb[0].mxu0
        %4561 = vmatprep.mubr.f32.mxu0 0.0
        %4562 = vmatmul.mubr.f32.gmra.mrb[0].mxu0 %v701
        %v4563 = vpop.f32.mrb[0].mxu0
        %v4564 = vadd.f32 0.0, %v4563
        %v4565 = vpop.f32.mrb[0].mxu0
        %4566 = vmatprep.mubr.f32.mxu0 0.0
        %4567 = vmatmul.mubr.f32.gmra.mrb[0].mxu0 %v702
        %v4568 = vpop.f32.mrb[0].mxu0
        %v4569 = vadd.f32 0.0, %v4568
        %v4570 = vpop.f32.mrb[0].mxu0
        %4571 = vmatprep.mubr.f32.mxu0 0.0
        %4572 = vmatmul.mubr.f32.gmra.mrb[0].mxu0 %v703
        %v4573 = vpop.f32.mrb[0].mxu0
        %v4574 = vadd.f32 0.0, %v4573
        %v4575 = vpop.f32.mrb[0].mxu0
        %4576 = vmatprep.mubr.f32.mxu0 0.0
        %4577 = vmatmul.mubr.f32.gmra.mrb[0].mxu0 %v704
        %v4578 = vpop.f32.mrb[0].mxu0
        %v4579 = vadd.f32 0.0, %v4578
        %v4580 = vpop.f32.mrb[0].mxu0
        %4581 = vmatprep.mubr.f32.mxu0 0.0
        %4582 = vmatmul.mubr.f32.gmra.mrb[0].mxu0 %v705
        %v4583 = vpop.f32.mrb[0].mxu0
        %v4584 = vadd.f32 0.0, %v4583
        %v4585 = vpop.f32.mrb[0].mxu0
        %4586 = vmatprep.mubr.f32.mxu0 0.0
        %4587 = vmatmul.mubr.f32.gmra.mrb[0].mxu0 %v706
        %v4588 = vpop.f32.mrb[0].mxu0
        %v4589 = vadd.f32 0.0, %v4588
        %v4590 = vpop.f32.mrb[0].mxu0
        %4591 = vmatprep.mubr.f32.mxu0 0.0
        %4592 = vmatmul.mubr.f32.gmra.mrb[0].mxu0 %v707
        %v4593 = vpop.f32.mrb[0].mxu0
        %v4594 = vadd.f32 0.0, %v4593
        %v4595 = vpop.f32.mrb[0].mxu0
        %4596 = vmatprep.mubr.f32.mxu0 0.0
        %4597 = vmatmul.mubr.f32.gmra.mrb[0].mxu0 %v708
        %v4598 = vpop.f32.mrb[0].mxu0
        %v4599 = vadd.f32 0.0, %v4598
        %v4600 = vpop.f32.mrb[0].mxu0
        %4601 = vmatprep.mubr.f32.mxu0 0.0
        %4602 = vmatmul.mubr.f32.gmra.mrb[0].mxu0 %v709
        %v4603 = vpop.f32.mrb[0].mxu0
        %v4604 = vadd.f32 0.0, %v4603
        %v4605 = vpop.f32.mrb[0].mxu0
        %4606 = vmatprep.mubr.f32.mxu0 0.0
        %4607 = vmatmul.mubr.f32.gmra.mrb[0].mxu0 %v710
        %v4608 = vpop.f32.mrb[0].mxu0
        %v4609 = vadd.f32 0.0, %v4608
        %v4610 = vpop.f32.mrb[0].mxu0
        %4611 = vmatprep.mubr.f32.mxu0 0.0
        %4612 = vmatmul.mubr.f32.gmra.mrb[0].mxu0 %v711
        %v4613 = vpop.f32.mrb[0].mxu0
        %v4614 = vadd.f32 0.0, %v4613
        %v4615 = vpop.f32.mrb[0].mxu0
        %4616 = vmatprep.mubr.f32.mxu0 0.0
        %4617 = vmatmul.mubr.f32.gmra.mrb[0].mxu0 %v712
        %v4618 = vpop.f32.mrb[0].mxu0
        %v4619 = vadd.f32 0.0, %v4618
        %v4620 = vpop.f32.mrb[0].mxu0
        %4621 = vmatprep.mubr.f32.mxu0 0.0
        %4622 = vmatmul.mubr.f32.gmra.mrb[0].mxu0 %v713
        %v4623 = vpop.f32.mrb[0].mxu0
        %v4624 = vadd.f32 0.0, %v4623
        %v4625 = vpop.f32.mrb[0].mxu0
        %4626 = vmatprep.mubr.f32.mxu0 0.0
        %4627 = vmatmul.mubr.f32.gmra.mrb[0].mxu0 %v714
        %v4628 = vpop.f32.mrb[0].mxu0
        %v4629 = vadd.f32 0.0, %v4628
        %v4630 = vpop.f32.mrb[0].mxu0
        %4631 = vmatprep.mubr.f32.mxu0 0.0
        %4632 = vmatmul.mubr.f32.gmra.mrb[0].mxu0 %v715
        %v4633 = vpop.f32.mrb[0].mxu0
        %v4634 = vadd.f32 0.0, %v4633
        %v4635 = vpop.f32.mrb[0].mxu0
        %4636 = vmatprep.mubr.f32.mxu0 0.0
        %4637 = vmatmul.mubr.f32.gmra.mrb[0].mxu0 %v716
        %v4638 = vpop.f32.mrb[0].mxu0
        %v4639 = vadd.f32 0.0, %v4638
        %v4640 = vpop.f32.mrb[0].mxu0
        %4641 = vmatprep.mubr.f32.mxu0 0.0
        %4642 = vmatmul.mubr.f32.gmra.mrb[0].mxu0 %v717
        %v4643 = vpop.f32.mrb[0].mxu0
        %v4644 = vadd.f32 0.0, %v4643
        %v4645 = vpop.f32.mrb[0].mxu0
        %4646 = vmatprep.mubr.f32.mxu0 0.0
        %4647 = vmatmul.mubr.f32.gmra.mrb[0].mxu0 %v718
        %v4648 = vpop.f32.mrb[0].mxu0
        %v4649 = vadd.f32 0.0, %v4648
        %v4650 = vpop.f32.mrb[0].mxu0
        %4651 = vmatprep.mubr.f32.mxu0 0.0
        %4652 = vmatmul.mubr.f32.gmra.mrb[0].mxu0 %v719
        %v4653 = vpop.f32.mrb[0].mxu0
        %v4654 = vadd.f32 0.0, %v4653
        %v4655 = vpop.f32.mrb[0].mxu0
        %4656 = vmatprep.mubr.f32.mxu0 0.0
        %4657 = vmatmul.mubr.f32.gmra.mrb[0].mxu0 %v720
        %v4658 = vpop.f32.mrb[0].mxu0
        %v4659 = vadd.f32 0.0, %v4658
        %v4660 = vpop.f32.mrb[0].mxu0
        %4661 = vmatprep.mubr.f32.mxu0 0.0
        %4662 = vmatmul.mubr.f32.gmra.mrb[0].mxu0 %v721
        %v4663 = vpop.f32.mrb[0].mxu0
        %v4664 = vadd.f32 0.0, %v4663
        %v4665 = vpop.f32.mrb[0].mxu0
        %4666 = vmatprep.mubr.f32.mxu0 0.0
        %4667 = vmatmul.mubr.f32.gmra.mrb[0].mxu0 %v722
        %v4668 = vpop.f32.mrb[0].mxu0
        %v4669 = vadd.f32 0.0, %v4668
        %v4670 = vpop.f32.mrb[0].mxu0
        %4671 = vmatprep.mubr.f32.mxu0 0.0
        %4672 = vmatmul.mubr.f32.gmra.mrb[0].mxu0 %v723
        %v4673 = vpop.f32.mrb[0].mxu0
        %v4674 = vadd.f32 0.0, %v4673
        %v4675 = vpop.f32.mrb[0].mxu0
        %4676 = vmatprep.mubr.f32.mxu0 0.0
        %4677 = vmatmul.mubr.f32.gmra.mrb[0].mxu0 %v724
        %v4678 = vpop.f32.mrb[0].mxu0
        %v4679 = vadd.f32 0.0, %v4678
        %v4680 = vpop.f32.mrb[0].mxu0
        %4681 = vmatprep.mubr.f32.mxu0 0.0
        %4682 = vmatmul.mubr.f32.gmra.mrb[0].mxu0 %v725
        %v4683 = vpop.f32.mrb[0].mxu0
        %v4684 = vadd.f32 0.0, %v4683
        %v4685 = vpop.f32.mrb[0].mxu0
        %4686 = vmatprep.mubr.f32.mxu0 0.0
        %4687 = vmatmul.mubr.f32.gmra.mrb[0].mxu0 %v726
        %v4688 = vpop.f32.mrb[0].mxu0
        %v4689 = vadd.f32 0.0, %v4688
        %v4690 = vpop.f32.mrb[0].mxu0
        %4691 = vmatprep.mubr.f32.mxu0 0.0
        %4692 = vmatmul.mubr.f32.gmra.mrb[0].mxu0 %v727
        %v4693 = vpop.f32.mrb[0].mxu0
        %v4694 = vadd.f32 0.0, %v4693
        %v4695 = vpop.f32.mrb[0].mxu0
        %4696 = vmatprep.mubr.f32.mxu0 0.0
        %4697 = vmatmul.mubr.f32.gmra.mrb[0].mxu0 %v728
        %v4698 = vpop.f32.mrb[0].mxu0
        %v4699 = vadd.f32 0.0, %v4698
        %v4700 = vpop.f32.mrb[0].mxu0
        %4701 = vdwg.mxu0
        %v4702 = vld [vmem:[%s14] sm:$0x1]
        %v4704 = vlaneseq
        %v4705 = vshrl.u32 %v4704, 7
        %v4706 = vsub.s32 0, %v4705
        %v4707 = vrot.slane %v4702, %v4706
        %v4709 = vmul.f32 %v4544, %v4707
        %v4710 = vmul.f32 %v4549, %v4707
        %v4711 = vmul.f32 %v4554, %v4707
        %v4712 = vmul.f32 %v4559, %v4707
        %v4713 = vmul.f32 %v4564, %v4707
        %v4714 = vmul.f32 %v4569, %v4707
        %v4715 = vmul.f32 %v4574, %v4707
        %v4716 = vmul.f32 %v4579, %v4707
        %v4717 = vmul.f32 %v4584, %v4707
        %v4718 = vmul.f32 %v4589, %v4707
        %v4719 = vmul.f32 %v4594, %v4707
        %v4720 = vmul.f32 %v4599, %v4707
        %v4721 = vmul.f32 %v4604, %v4707
        %v4722 = vmul.f32 %v4609, %v4707
        %v4723 = vmul.f32 %v4614, %v4707
        %v4724 = vmul.f32 %v4619, %v4707
        %v4725 = vmul.f32 %v4624, %v4707
        %v4726 = vmul.f32 %v4629, %v4707
        %v4727 = vmul.f32 %v4634, %v4707
        %v4728 = vmul.f32 %v4639, %v4707
        %v4729 = vmul.f32 %v4644, %v4707
        %v4730 = vmul.f32 %v4649, %v4707
        %v4731 = vmul.f32 %v4654, %v4707
        %v4732 = vmul.f32 %v4659, %v4707
        %v4733 = vmul.f32 %v4664, %v4707
        %v4734 = vmul.f32 %v4669, %v4707
        %v4735 = vmul.f32 %v4674, %v4707
        %v4736 = vmul.f32 %v4679, %v4707
        %v4737 = vmul.f32 %v4684, %v4707
        %v4738 = vmul.f32 %v4689, %v4707
        %v4739 = vmul.f32 %v4694, %v4707
        %v4740 = vmul.f32 %v4699, %v4707
        %v4741 = vld [vmem:[%s15] sm:$0x1]
        %v4743 = vlaneseq
        %v4744 = vshrl.u32 %v4743, 7
        %v4745 = vsub.s32 0, %v4744
        %v4746 = vrot.slane %v4741, %v4745
        %v4748 = vadd.f32 %v4709, %v4746
        %v4749 = vadd.f32 %v4710, %v4746
        %v4750 = vadd.f32 %v4711, %v4746
        %v4751 = vadd.f32 %v4712, %v4746
        %v4752 = vadd.f32 %v4713, %v4746
        %v4753 = vadd.f32 %v4714, %v4746
        %v4754 = vadd.f32 %v4715, %v4746
        %v4755 = vadd.f32 %v4716, %v4746
        %v4756 = vadd.f32 %v4717, %v4746
        %v4757 = vadd.f32 %v4718, %v4746
        %v4758 = vadd.f32 %v4719, %v4746
        %v4759 = vadd.f32 %v4720, %v4746
        %v4760 = vadd.f32 %v4721, %v4746
        %v4761 = vadd.f32 %v4722, %v4746
        %v4762 = vadd.f32 %v4723, %v4746
        %v4763 = vadd.f32 %v4724, %v4746
        %v4764 = vadd.f32 %v4725, %v4746
        %v4765 = vadd.f32 %v4726, %v4746
        %v4766 = vadd.f32 %v4727, %v4746
        %v4767 = vadd.f32 %v4728, %v4746
        %v4768 = vadd.f32 %v4729, %v4746
        %v4769 = vadd.f32 %v4730, %v4746
        %v4770 = vadd.f32 %v4731, %v4746
        %v4771 = vadd.f32 %v4732, %v4746
        %v4772 = vadd.f32 %v4733, %v4746
        %v4773 = vadd.f32 %v4734, %v4746
        %v4774 = vadd.f32 %v4735, %v4746
        %v4775 = vadd.f32 %v4736, %v4746
        %v4776 = vadd.f32 %v4737, %v4746
        %v4777 = vadd.f32 %v4738, %v4746
        %v4778 = vadd.f32 %v4739, %v4746
        %v4779 = vadd.f32 %v4740, %v4746
        %v4780 = vadd.f32 %v4429, %v4748
        %v4781 = vadd.f32 %v4430, %v4749
        %v4782 = vadd.f32 %v4431, %v4750
        %v4783 = vadd.f32 %v4432, %v4751
        %v4784 = vadd.f32 %v4433, %v4752
        %v4785 = vadd.f32 %v4434, %v4753
        %v4786 = vadd.f32 %v4435, %v4754
        %v4787 = vadd.f32 %v4436, %v4755
        %v4788 = vadd.f32 %v4437, %v4756
        %v4789 = vadd.f32 %v4438, %v4757
        %v4790 = vadd.f32 %v4439, %v4758
        %v4791 = vadd.f32 %v4440, %v4759
        %v4792 = vadd.f32 %v4441, %v4760
        %v4793 = vadd.f32 %v4442, %v4761
        %v4794 = vadd.f32 %v4443, %v4762
        %v4795 = vadd.f32 %v4444, %v4763
        %v4796 = vadd.f32 %v4445, %v4764
        %v4797 = vadd.f32 %v4446, %v4765
        %v4798 = vadd.f32 %v4447, %v4766
        %v4799 = vadd.f32 %v4448, %v4767
        %v4800 = vadd.f32 %v4449, %v4768
        %v4801 = vadd.f32 %v4450, %v4769
        %v4802 = vadd.f32 %v4451, %v4770
        %v4803 = vadd.f32 %v4452, %v4771
        %v4804 = vadd.f32 %v4453, %v4772
        %v4805 = vadd.f32 %v4454, %v4773
        %v4806 = vadd.f32 %v4455, %v4774
        %v4807 = vadd.f32 %v4456, %v4775
        %v4808 = vadd.f32 %v4457, %v4776
        %v4809 = vadd.f32 %v4458, %v4777
        %v4810 = vadd.f32 %v4459, %v4778
        %v4811 = vadd.f32 %v4460, %v4779
        %4812 = vst [vmem:[%s624] sm:$0xff] %v4780
        %4813 = vst [vmem:[%s624 + $0x8] sm:$0xff] %v4781
        %4814 = vst [vmem:[%s624 + $0x10] sm:$0xff] %v4782
        %4815 = vst [vmem:[%s624 + $0x18] sm:$0xff] %v4783
        %4816 = vst [vmem:[%s624 + $0x20] sm:$0xff] %v4784
        %4817 = vst [vmem:[%s624 + $0x28] sm:$0xff] %v4785
        %4818 = vst [vmem:[%s624 + $0x30] sm:$0xff] %v4786
        %4819 = vst [vmem:[%s624 + $0x38] sm:$0xff] %v4787
        %4820 = vst [vmem:[%s624 + $0x40] sm:$0xff] %v4788
        %4821 = vst [vmem:[%s624 + $0x48] sm:$0xff] %v4789
        %4822 = vst [vmem:[%s624 + $0x50] sm:$0xff] %v4790
        %4823 = vst [vmem:[%s624 + $0x58] sm:$0xff] %v4791
        %4824 = vst [vmem:[%s624 + $0x60] sm:$0xff] %v4792
        %4825 = vst [vmem:[%s624 + $0x68] sm:$0xff] %v4793
        %4826 = vst [vmem:[%s624 + $0x70] sm:$0xff] %v4794
        %4827 = vst [vmem:[%s624 + $0x78] sm:$0xff] %v4795
        %4828 = vst [vmem:[%s624 + $0x80] sm:$0xff] %v4796
        %4829 = vst [vmem:[%s624 + $0x88] sm:$0xff] %v4797
        %4830 = vst [vmem:[%s624 + $0x90] sm:$0xff] %v4798
        %4831 = vst [vmem:[%s624 + $0x98] sm:$0xff] %v4799
        %4832 = vst [vmem:[%s624 + $0xa0] sm:$0xff] %v4800
        %4833 = vst [vmem:[%s624 + $0xa8] sm:$0xff] %v4801
        %4834 = vst [vmem:[%s624 + $0xb0] sm:$0xff] %v4802
        %4835 = vst [vmem:[%s624 + $0xb8] sm:$0xff] %v4803
        %4836 = vst [vmem:[%s624 + $0xc0] sm:$0xff] %v4804
        %4837 = vst [vmem:[%s624 + $0xc8] sm:$0xff] %v4805
        %4838 = vst [vmem:[%s624 + $0xd0] sm:$0xff] %v4806
        %4839 = vst [vmem:[%s624 + $0xd8] sm:$0xff] %v4807
        %4840 = vst [vmem:[%s624 + $0xe0] sm:$0xff] %v4808
        %4841 = vst [vmem:[%s624 + $0xe8] sm:$0xff] %v4809
        %4842 = vst [vmem:[%s624 + $0xf0] sm:$0xff] %v4810
        %4843 = vst [vmem:[%s624 + $0xf8] sm:$0xff] %v4811
        %s4844 = sand.u32 %s385, 1
        %s4845 = scalar_lea.sflag [#allocation5], %s4844
        %s4846 = sand.u32 %s385, 1
        %s4847 = smul.addr %s4846, 256
        %s4848 = scalar_lea.vmem [#allocation15], %s4847
        // Predicated region
        $region113: #{tpu_custom_call.1} parent=83 // pred_check
          %p4849 = pneg %p395
        $region114: #{tpu_custom_call.1} parent=83 // pred_check_branch
          %4851 = sbr.rel (%p4849) target = $region116
        $region115: #{tpu_custom_call.1} parent=83 // pred_region
          %s4853 = ssub.s32 4096, 4096
          %4854 = vsyncadd %s4845, %s4853
          %s4855 = smul.addr %s36, 32
          %s4856 = smul.addr %s4855, 128
          %s4857 = scalar_lea.hbm %s16, %s4856
          %s4858 = sshll.u32 %s4848, 4
          %s4859 = int_to_ptr.vmem [resolvable:$true] %s4858
          %4864 = dma.vmem_to_hbm [thread:$0]  %s4859, 4096, %s4857, %s4845, 128, 128, 8
        $region116: #{tpu_custom_call.1} parent=83 // pred_fallthru
          _
      $region84: #{tpu_custom_call.1} parent=5 // pred_fallthru
        _
      %p4865 = scmp.le.s32.totalorder 2, %s31
      // Predicated region
      $region117: #{tpu_custom_call.1} parent=5 // pred_check
        %p4866 = pneg %p4865
      $region118: #{tpu_custom_call.1} parent=5 // pred_check_branch
        %4868 = sbr.rel (%p4866) target = $region120
      $region119: #{tpu_custom_call.1} parent=5 // pred_region
        %s4869 = ssub.s32 %s31, 2
        // Predicated region
        $region121: #{tpu_custom_call.1} parent=119 // pred_check
          %p4870 = pneg %p401
        $region122: #{tpu_custom_call.1} parent=119 // pred_check_branch
          %4872 = sbr.rel (%p4870) target = $region124
        $region123: #{tpu_custom_call.1} parent=119 // pred_region
          %s4873 = sand.u32 %s386, 1
          %s4874 = scalar_lea.sflag [#allocation5], %s4873
          %s4875 = sand.u32 %s386, 1
          %s4876 = smul.addr %s4875, 256
          %s4877 = scalar_lea.vmem [#allocation15], %s4876
          %4878 = dma.done %s4874, 4096
        $region124: #{tpu_custom_call.1} parent=119 // pred_fallthru
          _
      $region120: #{tpu_custom_call.1} parent=5 // pred_fallthru
        _
    $region6: #{tpu_custom_call.1} parent=1 // loop_footer
      %s35 = sadd.s32 1, %s31
    $region7: #{tpu_custom_call.1} parent=1 // loop_footer_branch
      %30 = sbr.rel target = $region3
    $region8: #{tpu_custom_call.1} parent=1 // loop_exit
      _
    %4879 = vsyncpa [#allocation4], 1
    %s4880 = scalar_lea.sflag [#allocation4], 1
    %4881 = vsyncpa %s4880, 1
    %4882 = vsyncpa [#allocation7], 1
    %4883 = vsyncpa [#allocation10], 1
    %4884 = vsyncpa [#allocation13], 1
    %4885 = vsyncpa [#allocation5], 1
    %s4886 = scalar_lea.sflag [#allocation5], 1
    %4887 = vsyncpa %s4886, 1

</llo_original>
